<compile_context>
chip_gen: v6e
topology: v6e:2x2x1
jax: 0.10.0
libtpu: 0.0.40
codegen_flags: <defaults>
</compile_context>

<pallas_src>
import functools

import jax
import jax.numpy as jnp
from jax.experimental import pallas as pl
from jax.experimental.pallas import tpu as pltpu

BN_EPS = 1e-3


def _fused_kernel(x218_ref, w70t_ref, b70_ref, w71_ref, x_ref, gamma_ref, beta_ref,
                  o_ref, w_eff_ref, y_ref, s1_ref, s2_ref, *, hw, tile_hw):
    num_tiles = (hw + tile_hw - 1) // tile_hw
    k = pl.program_id(0)

    # ---- step 0: SE gate (1x1 conv 20->480 + sigmoid), folded into W71 ----------
    @pl.when(k == 0)
    def _init():
        # w70t: [20, 480] (lane-dense), x218: [20, 1] -> gate row [1, 480]
        gate = jnp.sum(w70t_ref[...] * x218_ref[...], axis=0, keepdims=True)
        gate = jax.nn.sigmoid(gate + b70_ref[...])                         # [1, 480]
        # Fold:  (W71 * gate_row) @ X  ==  W71 @ diag(gate) @ X
        w_eff_ref[...] = (w71_ref[...].astype(jnp.float32) * gate).astype(jnp.bfloat16)
        s1_ref[...] = jnp.zeros_like(s1_ref)
        s2_ref[...] = jnp.zeros_like(s2_ref)

    # ---- per-tile 1x1 conv (480 -> 80) on the MXU, f32 accumulation -------------
    y = jnp.dot(w_eff_ref[...], x_ref[...],
                preferred_element_type=jnp.float32)                        # [80, T]

    # Mask columns past HW (only the ragged last tile has any).
    if hw % tile_hw != 0:
        col = k * tile_hw + jax.lax.broadcasted_iota(jnp.int32, (1, tile_hw), 1)
        y = jnp.where(col < hw, y, 0.0)

    # ---- BatchNorm statistics accumulated across HW tiles (f32) -----------------
    s1_ref[...] += jnp.sum(y, axis=1, keepdims=True)                       # [80, 1]
    s2_ref[...] += jnp.sum(y * y, axis=1, keepdims=True)                   # [80, 1]
    y_ref[k] = y                                                           # keep tile

    # ---- last step: normalize and emit the lane-dense [80, HW] output -----------
    @pl.when(k == num_tiles - 1)
    def _finalize():
        inv_hw = 1.0 / hw
        mean = s1_ref[...] * inv_hw
        var = jnp.maximum(s2_ref[...] * inv_hw - mean * mean, 0.0)         # biased var
        scale = gamma_ref[...] * jax.lax.rsqrt(var + BN_EPS)               # [80, 1]
        shift = beta_ref[...] - mean * scale                               # [80, 1]
        for j in range(num_tiles):                    # static unroll (small)
            width = min(tile_hw, hw - j * tile_hw)
            o_ref[:, j * tile_hw:j * tile_hw + width] = (
                y_ref[j, :, :width] * scale + shift)


@functools.partial(jax.jit, static_argnames=("tile_hw",))
def fused_se_conv_bn(x218, x215, w70, b70, w71, gamma, beta, *, tile_hw=512):
    """x218: [1,20,1,1], x215: [1,480,H,W] (NCHW). Returns [1,80,H,W] float32.

    w70: [480, 20]  (conv2d70.weight, 1x1 spatial squeezed), b70: [480]
    w71: [80, 480]  (conv2d71.weight squeezed)
    gamma, beta: [80]  (BatchNorm2d affine parameters)
    """
    n, c_mid, h, w = x215.shape
    assert n == 1
    hw = h * w
    c_out = w71.shape[0]
    c_se = w70.shape[1]

    # Channel-major views: NCHW with N=1 is already [C, H*W] -- free reshapes.
    x_mat = x215.reshape(c_mid, hw).astype(jnp.bfloat16)    # [480, HW]  (bf16 MXU path)
    w71_b = w71.astype(jnp.bfloat16)                         # [80, 480]
    w70t = jnp.transpose(w70)                                # [20, 480]  lane-dense
    x218_col = x218.reshape(c_se, 1)                         # [20, 1]
    b70_row = b70.reshape(1, c_mid)                          # [1, 480]
    gamma_col = gamma.reshape(c_out, 1)                      # [80, 1]
    beta_col = beta.reshape(c_out, 1)                        # [80, 1]

    # HW tiling: lane-aligned tiles (multiple of 128); ragged last tile masked in-kernel.
    if hw <= tile_hw:
        t = hw                       # single tile == full dim (allowed by BlockSpec)
        num_tiles = 1
    else:
        assert tile_hw % 128 == 0
        t = tile_hw
        num_tiles = pl.cdiv(hw, t)

    bytes_accessed = (2 * c_mid * hw           # bf16 activation read
                      + 4 * c_out * hw         # f32 output write
                      + 2 * c_out * c_mid      # bf16 conv71 weights
                      + 4 * (c_mid * c_se + c_mid + 2 * c_out + c_se))
    cost = pl.CostEstimate(
        flops=2 * hw * c_mid * c_out + 2 * c_mid * c_se
              + 2 * c_out * c_mid + 8 * c_out * hw,
        transcendentals=c_mid + c_out,
        bytes_accessed=bytes_accessed,
    )

    kernel = functools.partial(_fused_kernel, hw=hw, tile_hw=t)
    out_mat = pl.pallas_call(
        kernel,
        out_shape=jax.ShapeDtypeStruct((c_out, hw), jnp.float32),
        grid=(num_tiles,),
        in_specs=[
            pl.BlockSpec((c_se, 1), lambda k: (0, 0)),        # x218 column  (f32)
            pl.BlockSpec((c_se, c_mid), lambda k: (0, 0)),    # w70^T        (f32)
            pl.BlockSpec((1, c_mid), lambda k: (0, 0)),       # b70 row      (f32)
            pl.BlockSpec((c_out, c_mid), lambda k: (0, 0)),   # w71          (bf16)
            pl.BlockSpec((c_mid, t), lambda k: (0, k)),       # x tiles      (bf16, streamed)
            pl.BlockSpec((c_out, 1), lambda k: (0, 0)),       # gamma        (f32)
            pl.BlockSpec((c_out, 1), lambda k: (0, 0)),       # beta         (f32)
        ],
        out_specs=pl.BlockSpec((c_out, hw), lambda k: (0, 0)),  # resident output
        scratch_shapes=[
            pltpu.VMEM((c_out, c_mid), jnp.bfloat16),     # gate-folded weights
            pltpu.VMEM((num_tiles, c_out, t), jnp.float32),  # un-normalized y tiles
            pltpu.VMEM((c_out, 1), jnp.float32),          # sum(y)
            pltpu.VMEM((c_out, 1), jnp.float32),          # sum(y^2)
        ],
        compiler_params=pltpu.CompilerParams(
            dimension_semantics=("arbitrary",)),          # BN reduction over HW tiles
        cost_estimate=cost,
    )(x218_col, w70t, b70_row, w71_b, x_mat, gamma_col, beta_col)

    # Free reshape back to NCHW.
    return out_mat.reshape(1, c_out, h, w)


def reference(x218, x215, w70, b70, w71, gamma, beta):
    """Plain-JAX f32 reference (same math, NCHW, PyTorch-style weight layouts)."""
    gate = jax.nn.sigmoid(
        jnp.einsum('ok,nkhw->nohw', w70, x218) + b70.reshape(1, -1, 1, 1))
    xs = gate * x215
    y = jnp.einsum('ok,nkhw->nohw', w71, xs)
    mean = jnp.mean(y, axis=(0, 2, 3), keepdims=True)
    var = jnp.mean(jnp.square(y - mean), axis=(0, 2, 3), keepdims=True)
    return (gamma.reshape(1, -1, 1, 1) * (y - mean) *
            jax.lax.rsqrt(var + BN_EPS) + beta.reshape(1, -1, 1, 1))


if __name__ == "__main__":
    key = jax.random.PRNGKey(0)
    k1, k2, k3, k4, k5, k6, k7 = jax.random.split(key, 7)

    H = W = 28
    C_SE, C_MID, C_OUT = 20, 480, 80

    # deterministic synthetic parameters (PyTorch [out, in] conv layout, 1x1 squeezed)
    w70 = jax.random.normal(k1, (C_MID, C_SE), jnp.float32) * 0.1     # conv2d70.weight
    b70 = jax.random.normal(k2, (C_MID,), jnp.float32) * 0.1          # conv2d70.bias
    w71 = jax.random.normal(k3, (C_OUT, C_MID), jnp.float32) * 0.05   # conv2d71.weight
    gamma = 1.0 + 0.1 * jax.random.normal(k4, (C_OUT,), jnp.float32)  # bn weight
    beta = 0.1 * jax.random.normal(k5, (C_OUT,), jnp.float32)         # bn bias

    # inputs
    x218 = jax.random.normal(k6, (1, C_SE, 1, 1), jnp.float32)
    x215 = jax.random.normal(k7, (1, C_MID, H, W), jnp.float32)

    out = fused_se_conv_bn(x218, x215, w70, b70, w71, gamma, beta)
    out = jax.block_until_ready(out)

    ref = reference(x218, x215, w70, b70, w71, gamma, beta)
    assert out.shape == (1, C_OUT, H, W), out.shape
    # bf16 activations/weights on the MXU path -> ~1e-2-level deviation vs f32 reference.
    assert jnp.allclose(out, ref, atol=5e-2, rtol=5e-2), \
        float(jnp.max(jnp.abs(out - ref)))

    print("KERNEL_OK")
</pallas_src>

<mosaic_0001>
module attributes {stable_mosaic.version = 11 : i64} {
  func.func @_fused_kernel(%arg0: i32, %arg1: memref<20x1xf32, #tpu.memory_space<vmem>>, %arg2: memref<20x480xf32, #tpu.memory_space<vmem>>, %arg3: memref<1x480xf32, #tpu.memory_space<vmem>>, %arg4: memref<80x480xbf16, #tpu.memory_space<vmem>>, %arg5: memref<480x512xbf16, #tpu.memory_space<vmem>>, %arg6: memref<80x1xf32, #tpu.memory_space<vmem>>, %arg7: memref<80x1xf32, #tpu.memory_space<vmem>>, %arg8: memref<80x784xf32, #tpu.memory_space<vmem>>, %arg9: memref<80x480xbf16, #tpu.memory_space<vmem>>, %arg10: memref<2x80x512xf32, #tpu.memory_space<vmem>>, %arg11: memref<80x1xf32, #tpu.memory_space<vmem>>, %arg12: memref<80x1xf32, #tpu.memory_space<vmem>>) attributes {dimension_semantics = [#tpu.dimension_semantics<arbitrary>], iteration_bounds = array<i64: 2>, scalar_prefetch = 0 : i64, scratch_operands = 4 : i64, tpu.core_type = #tpu.core_type<tc>, window_params = [{pipeline_mode = #tpu.pipeline_mode<synchronous>, transform_indices = @transform_0, window_bounds = array<i64: 20, 1>}, {pipeline_mode = #tpu.pipeline_mode<synchronous>, transform_indices = @transform_1, window_bounds = array<i64: 20, 480>}, {pipeline_mode = #tpu.pipeline_mode<synchronous>, transform_indices = @transform_2, window_bounds = array<i64: 1, 480>}, {pipeline_mode = #tpu.pipeline_mode<synchronous>, transform_indices = @transform_3, window_bounds = array<i64: 80, 480>}, {transform_indices = @transform_4, window_bounds = array<i64: 480, 512>}, {pipeline_mode = #tpu.pipeline_mode<synchronous>, transform_indices = @transform_5, window_bounds = array<i64: 80, 1>}, {pipeline_mode = #tpu.pipeline_mode<synchronous>, transform_indices = @transform_6, window_bounds = array<i64: 80, 1>}, {pipeline_mode = #tpu.pipeline_mode<synchronous>, transform_indices = @transform_7, window_bounds = array<i64: 80, 784>}]} {
    %c0_i32 = arith.constant 0 : i32
    %0 = arith.cmpi eq, %arg0, %c0_i32 : i32
    %1 = arith.extui %0 : i1 to i32
    %c0_i32_0 = arith.constant 0 : i32
    %2 = arith.cmpi ne, %1, %c0_i32_0 : i32
    scf.if %2 {
      %c0_18 = arith.constant 0 : index
      %c0_19 = arith.constant 0 : index
      %34 = vector.load %arg2[%c0_18, %c0_19] : memref<20x480xf32, #tpu.memory_space<vmem>>, vector<20x480xf32>
      %c0_20 = arith.constant 0 : index
      %c0_21 = arith.constant 0 : index
      %35 = vector.load %arg1[%c0_20, %c0_21] : memref<20x1xf32, #tpu.memory_space<vmem>>, vector<20x1xf32>
      %36 = vector.broadcast %35 : vector<20x1xf32> to vector<20x480xf32>
      %37 = arith.mulf %34, %36 : vector<20x480xf32>
      %cst_22 = arith.constant dense<0.000000e+00> : vector<480xf32>
      %38 = vector.multi_reduction <add>, %37, %cst_22 [0] : vector<20x480xf32> to vector<480xf32>
      %39 = vector.shape_cast %38 : vector<480xf32> to vector<1x480xf32>
      %c0_23 = arith.constant 0 : index
      %c0_24 = arith.constant 0 : index
      %40 = vector.load %arg3[%c0_23, %c0_24] : memref<1x480xf32, #tpu.memory_space<vmem>>, vector<1x480xf32>
      %41 = arith.addf %39, %40 : vector<1x480xf32>
      %42 = arith.negf %41 : vector<1x480xf32>
      %43 = math.exp %42 : vector<1x480xf32>
      %cst_25 = arith.constant 1.000000e+00 : f32
      %44 = vector.broadcast %cst_25 : f32 to vector<1x480xf32>
      %45 = arith.addf %44, %43 : vector<1x480xf32>
      %46 = arith.divf %44, %45 : vector<1x480xf32>
      %c0_26 = arith.constant 0 : index
      %c0_27 = arith.constant 0 : index
      %47 = vector.load %arg4[%c0_26, %c0_27] : memref<80x480xbf16, #tpu.memory_space<vmem>>, vector<80x480xbf16>
      %48 = arith.extf %47 : vector<80x480xbf16> to vector<80x480xf32>
      %49 = vector.broadcast %46 : vector<1x480xf32> to vector<80x480xf32>
      %50 = arith.mulf %48, %49 : vector<80x480xf32>
      %51 = arith.truncf %50 : vector<80x480xf32> to vector<80x480xbf16>
      %c0_28 = arith.constant 0 : index
      %c0_29 = arith.constant 0 : index
      %52 = vector.load %arg9[%c0_28, %c0_29] : memref<80x480xbf16, #tpu.memory_space<vmem>>, vector<80x480xbf16>
      tpu.vector_store %arg9[%c0_28, %c0_29], %51 {strides = array<i32>} : memref<80x480xbf16, #tpu.memory_space<vmem>>, vector<80x480xbf16>,
      %cst_30 = arith.constant 0.000000e+00 : f32
      %53 = vector.broadcast %cst_30 : f32 to vector<80x1xf32>
      %c0_31 = arith.constant 0 : index
      %c0_32 = arith.constant 0 : index
      %54 = vector.load %arg11[%c0_31, %c0_32] : memref<80x1xf32, #tpu.memory_space<vmem>>, vector<80x1xf32>
      tpu.vector_store %arg11[%c0_31, %c0_32], %53 {strides = array<i32>} : memref<80x1xf32, #tpu.memory_space<vmem>>, vector<80x1xf32>,
      %cst_33 = arith.constant 0.000000e+00 : f32
      %55 = vector.broadcast %cst_33 : f32 to vector<80x1xf32>
      %c0_34 = arith.constant 0 : index
      %c0_35 = arith.constant 0 : index
      %56 = vector.load %arg12[%c0_34, %c0_35] : memref<80x1xf32, #tpu.memory_space<vmem>>, vector<80x1xf32>
      tpu.vector_store %arg12[%c0_34, %c0_35], %55 {strides = array<i32>} : memref<80x1xf32, #tpu.memory_space<vmem>>, vector<80x1xf32>,
    } else {
    }
    %c0 = arith.constant 0 : index
    %c0_1 = arith.constant 0 : index
    %3 = vector.load %arg9[%c0, %c0_1] : memref<80x480xbf16, #tpu.memory_space<vmem>>, vector<80x480xbf16>
    %c0_2 = arith.constant 0 : index
    %c0_3 = arith.constant 0 : index
    %4 = vector.load %arg5[%c0_2, %c0_3] : memref<480x512xbf16, #tpu.memory_space<vmem>>, vector<480x512xbf16>
    %cst = arith.constant dense<0.000000e+00> : vector<80x512xf32>
    %5 = tpu.matmul %3, %4, %cst {dimension_numbers = #tpu.dot_dimension_numbers<[1], [0], [0], [1], [0, 0, 1, 1], [], []>} : vector<80x480xbf16>, vector<480x512xbf16>, vector<80x512xf32> -> vector<80x512xf32>
    %c512_i32 = arith.constant 512 : i32
    %6 = arith.muli %arg0, %c512_i32 : i32
    %7 = tpu.iota {dimensions = array<i32: 1>} : vector<1x512xi32>
    %8 = vector.broadcast %6 : i32 to vector<1x512xi32>
    %9 = arith.addi %8, %7 : vector<1x512xi32>
    %c784_i32 = arith.constant 784 : i32
    %10 = vector.broadcast %c784_i32 : i32 to vector<1x512xi32>
    %11 = arith.cmpi slt, %9, %10 : vector<1x512xi32>
    %cst_4 = arith.constant 0.000000e+00 : f32
    %12 = vector.shape_cast %11 : vector<1x512xi1> to vector<1x512xi1>
    %13 = vector.broadcast %12 : vector<1x512xi1> to vector<80x512xi1>
    %14 = vector.broadcast %cst_4 : f32 to vector<80x512xf32>
    %15 = arith.select %13, %5, %14 : vector<80x512xi1>, vector<80x512xf32>
    %c0_5 = arith.constant 0 : index
    %c0_6 = arith.constant 0 : index
    %16 = vector.load %arg11[%c0_5, %c0_6] : memref<80x1xf32, #tpu.memory_space<vmem>>, vector<80x1xf32>
    %cst_7 = arith.constant dense<0.000000e+00> : vector<80xf32>
    %17 = vector.multi_reduction <add>, %15, %cst_7 [1] : vector<80x512xf32> to vector<80xf32>
    %18 = vector.shape_cast %17 : vector<80xf32> to vector<80x1xf32>
    %19 = arith.addf %16, %18 : vector<80x1xf32>
    %c0_8 = arith.constant 0 : index
    %c0_9 = arith.constant 0 : index
    %20 = vector.load %arg11[%c0_8, %c0_9] : memref<80x1xf32, #tpu.memory_space<vmem>>, vector<80x1xf32>
    tpu.vector_store %arg11[%c0_8, %c0_9], %19 {strides = array<i32>} : memref<80x1xf32, #tpu.memory_space<vmem>>, vector<80x1xf32>,
    %c0_10 = arith.constant 0 : index
    %c0_11 = arith.constant 0 : index
    %21 = vector.load %arg12[%c0_10, %c0_11] : memref<80x1xf32, #tpu.memory_space<vmem>>, vector<80x1xf32>
    %22 = arith.mulf %15, %15 : vector<80x512xf32>
    %cst_12 = arith.constant dense<0.000000e+00> : vector<80xf32>
    %23 = vector.multi_reduction <add>, %22, %cst_12 [1] : vector<80x512xf32> to vector<80xf32>
    %24 = vector.shape_cast %23 : vector<80xf32> to vector<80x1xf32>
    %25 = arith.addf %21, %24 : vector<80x1xf32>
    %c0_13 = arith.constant 0 : index
    %c0_14 = arith.constant 0 : index
    %26 = vector.load %arg12[%c0_13, %c0_14] : memref<80x1xf32, #tpu.memory_space<vmem>>, vector<80x1xf32>
    tpu.vector_store %arg12[%c0_13, %c0_14], %25 {strides = array<i32>} : memref<80x1xf32, #tpu.memory_space<vmem>>, vector<80x1xf32>,
    %27 = arith.index_cast %arg0 : i32 to index
    %c0_15 = arith.constant 0 : index
    %c0_16 = arith.constant 0 : index
    %28 = vector.load %arg10[%27, %c0_15, %c0_16] : memref<2x80x512xf32, #tpu.memory_space<vmem>>, vector<1x80x512xf32>
    %29 = vector.shape_cast %28 : vector<1x80x512xf32> to vector<80x512xf32>
    %30 = vector.shape_cast %15 : vector<80x512xf32> to vector<1x80x512xf32>
    tpu.vector_store %arg10[%27, %c0_15, %c0_16], %30 {strides = array<i32>} : memref<2x80x512xf32, #tpu.memory_space<vmem>>, vector<1x80x512xf32>,
    %c1_i32 = arith.constant 1 : i32
    %31 = arith.cmpi eq, %arg0, %c1_i32 : i32
    %32 = arith.extui %31 : i1 to i32
    %c0_i32_17 = arith.constant 0 : i32
    %33 = arith.cmpi ne, %32, %c0_i32_17 : i32
    scf.if %33 {
      %c0_18 = arith.constant 0 : index
      %c0_19 = arith.constant 0 : index
      %34 = vector.load %arg11[%c0_18, %c0_19] : memref<80x1xf32, #tpu.memory_space<vmem>>, vector<80x1xf32>
      %cst_20 = arith.constant 0.00127551018 : f32
      %35 = vector.broadcast %cst_20 : f32 to vector<80x1xf32>
      %36 = arith.mulf %34, %35 : vector<80x1xf32>
      %c0_21 = arith.constant 0 : index
      %c0_22 = arith.constant 0 : index
      %37 = vector.load %arg12[%c0_21, %c0_22] : memref<80x1xf32, #tpu.memory_space<vmem>>, vector<80x1xf32>
      %cst_23 = arith.constant 0.00127551018 : f32
      %38 = vector.broadcast %cst_23 : f32 to vector<80x1xf32>
      %39 = arith.mulf %37, %38 : vector<80x1xf32>
      %40 = arith.mulf %36, %36 : vector<80x1xf32>
      %41 = arith.subf %39, %40 : vector<80x1xf32>
      %cst_24 = arith.constant 0.000000e+00 : f32
      %42 = vector.broadcast %cst_24 : f32 to vector<80x1xf32>
      %43 = arith.maximumf %41, %42 : vector<80x1xf32>
      %c0_25 = arith.constant 0 : index
      %c0_26 = arith.constant 0 : index
      %44 = vector.load %arg6[%c0_25, %c0_26] : memref<80x1xf32, #tpu.memory_space<vmem>>, vector<80x1xf32>
      %cst_27 = arith.constant 1.000000e-03 : f32
      %45 = vector.broadcast %cst_27 : f32 to vector<80x1xf32>
      %46 = arith.addf %43, %45 : vector<80x1xf32>
      %47 = math.rsqrt %46 : vector<80x1xf32>
      %48 = arith.mulf %44, %47 : vector<80x1xf32>
      %c0_28 = arith.constant 0 : index
      %c0_29 = arith.constant 0 : index
      %49 = vector.load %arg7[%c0_28, %c0_29] : memref<80x1xf32, #tpu.memory_space<vmem>>, vector<80x1xf32>
      %50 = arith.mulf %36, %48 : vector<80x1xf32>
      %51 = arith.subf %49, %50 : vector<80x1xf32>
      %c0_30 = arith.constant 0 : index
      %c0_31 = arith.constant 0 : index
      %c0_32 = arith.constant 0 : index
      %52 = vector.load %arg10[%c0_30, %c0_31, %c0_32] : memref<2x80x512xf32, #tpu.memory_space<vmem>>, vector<1x80x512xf32>
      %53 = vector.shape_cast %52 : vector<1x80x512xf32> to vector<80x512xf32>
      %54 = vector.broadcast %48 : vector<80x1xf32> to vector<80x512xf32>
      %55 = arith.mulf %53, %54 : vector<80x512xf32>
      %56 = vector.broadcast %51 : vector<80x1xf32> to vector<80x512xf32>
      %57 = arith.addf %55, %56 : vector<80x512xf32>
      %c0_33 = arith.constant 0 : index
      %c0_34 = arith.constant 0 : index
      %58 = vector.load %arg8[%c0_33, %c0_34] : memref<80x784xf32, #tpu.memory_space<vmem>>, vector<80x512xf32>
      tpu.vector_store %arg8[%c0_33, %c0_34], %57 {strides = array<i32>} : memref<80x784xf32, #tpu.memory_space<vmem>>, vector<80x512xf32>,
      %c1 = arith.constant 1 : index
      %c0_35 = arith.constant 0 : index
      %c0_36 = arith.constant 0 : index
      %59 = vector.load %arg10[%c1, %c0_35, %c0_36] : memref<2x80x512xf32, #tpu.memory_space<vmem>>, vector<1x80x272xf32>
      %60 = vector.shape_cast %59 : vector<1x80x272xf32> to vector<80x272xf32>
      %61 = vector.broadcast %48 : vector<80x1xf32> to vector<80x272xf32>
      %62 = arith.mulf %60, %61 : vector<80x272xf32>
      %63 = vector.broadcast %51 : vector<80x1xf32> to vector<80x272xf32>
      %64 = arith.addf %62, %63 : vector<80x272xf32>
      %c0_37 = arith.constant 0 : index
      %c512 = arith.constant 512 : index
      %65 = vector.load %arg8[%c0_37, %c512] : memref<80x784xf32, #tpu.memory_space<vmem>>, vector<80x272xf32>
      tpu.vector_store %arg8[%c0_37, %c512], %64 {strides = array<i32>} : memref<80x784xf32, #tpu.memory_space<vmem>>, vector<80x272xf32>,
    } else {
    }
    return
  }
  func.func @transform_0(%arg0: i32) -> (i32, i32) {
    %c0_i32 = arith.constant 0 : i32
    %c0_i32_0 = arith.constant 0 : i32
    %c0_i32_1 = arith.constant 0 : i32
    return %c0_i32, %c0_i32_0 : i32, i32
  }
  func.func @transform_1(%arg0: i32) -> (i32, i32) {
    %c0_i32 = arith.constant 0 : i32
    %c0_i32_0 = arith.constant 0 : i32
    %c0_i32_1 = arith.constant 0 : i32
    return %c0_i32, %c0_i32_0 : i32, i32
  }
  func.func @transform_2(%arg0: i32) -> (i32, i32) {
    %c0_i32 = arith.constant 0 : i32
    %c0_i32_0 = arith.constant 0 : i32
    %c0_i32_1 = arith.constant 0 : i32
    return %c0_i32, %c0_i32_0 : i32, i32
  }
  func.func @transform_3(%arg0: i32) -> (i32, i32) {
    %c0_i32 = arith.constant 0 : i32
    %c0_i32_0 = arith.constant 0 : i32
    %c0_i32_1 = arith.constant 0 : i32
    return %c0_i32, %c0_i32_0 : i32, i32
  }
  func.func @transform_4(%arg0: i32) -> (i32, i32) {
    %c0_i32 = arith.constant 0 : i32
    %c0_i32_0 = arith.constant 0 : i32
    return %c0_i32, %arg0 : i32, i32
  }
  func.func @transform_5(%arg0: i32) -> (i32, i32) {
    %c0_i32 = arith.constant 0 : i32
    %c0_i32_0 = arith.constant 0 : i32
    %c0_i32_1 = arith.constant 0 : i32
    return %c0_i32, %c0_i32_0 : i32, i32
  }
  func.func @transform_6(%arg0: i32) -> (i32, i32) {
    %c0_i32 = arith.constant 0 : i32
    %c0_i32_0 = arith.constant 0 : i32
    %c0_i32_1 = arith.constant 0 : i32
    return %c0_i32, %c0_i32_0 : i32, i32
  }
  func.func @transform_7(%arg0: i32) -> (i32, i32) {
    %c0_i32 = arith.constant 0 : i32
    %c0_i32_0 = arith.constant 0 : i32
    %c0_i32_1 = arith.constant 0 : i32
    return %c0_i32, %c0_i32_0 : i32, i32
  }
}

</mosaic_0001>

<llo_original>
// kernel: fused_se_conv_bn.1
$region0: #{fused_se_conv_bn.1}
  #allocation0 [shape = 'u32[]', space=smem, size = 0x4, offset = 0x4, fixed_abs, tag = 'smem constant byte address 0x4 - core index']
  #allocation1 [shape = 'u32[144,128]{1,0:T(1,128)}', space=vmem, size = 0x12000, scoped, tag = 'internal scratch']
  #allocation2 [shape = 'bf16[80,480]{1,0:T(8,128)(2,1)}', space=vmem, size = 0x14000, scoped, tag = 'scratch operand']
  #allocation3 [shape = 'f32[2,80,512]{2,1,0:T(8,128)}', space=vmem, size = 0x50000, scoped, tag = 'scratch operand']
  #allocation4 [shape = 'f32[80,1]{1,0:T(8,128)}', space=vmem, size = 0xa000, scoped, tag = 'scratch operand']
  #allocation5 [shape = 'f32[80,1]{1,0:T(8,128)}', space=vmem, size = 0xa000, scoped, tag = 'scratch operand']
  %s0 = inlined_call_operand.vmem [shape: f32[20,1], index: 0, kind: input, shape index: {}]
  %s1 = inlined_call_operand.vmem [shape: f32[20,480], index: 1, kind: input, shape index: {}]
  %s2 = inlined_call_operand.vmem [shape: f32[1,480], index: 2, kind: input, shape index: {}]
  %s3 = inlined_call_operand.vmem [shape: bf16[80,480], index: 3, kind: input, shape index: {}]
  %s4 = inlined_call_operand.vmem [shape: bf16[480,784], index: 4, kind: input, shape index: {}]
  %s5 = inlined_call_operand.vmem [shape: f32[80,1], index: 5, kind: input, shape index: {}]
  %s6 = inlined_call_operand.vmem [shape: f32[80,1], index: 6, kind: input, shape index: {}]
  %s7 = inlined_call_operand.vmem [shape: f32[80,784], index: 7, kind: output, shape index: {}]
  %s8 = sld [smem:[#allocation0]]
  $region135: #{fused_se_conv_bn.1} parent=0
    _
  %s10 = ssub.s32 1, %s8
  %s11 = scalar_select 0, %s10, %s8
  $region1: #{fused_se_conv_bn.1} parent=0
    #allocation6 [shape = 'u8[983040]{0}', space=vmem, size = 0xf0000, scoped, tag = 'input window, operand 4']
    loop: start=0, step=1, limit=4
    $region2: #{fused_se_conv_bn.1} parent=1 // loop_pre_header
      _
    $region3: #{fused_se_conv_bn.1} parent=1 // loop_header
      %s13 = sphi 0, %s17
      %p14 = scmp.ge.s32.totalorder %s13, 4
      %s21 = sphi 0, %s21
      %s23 = sphi 0, %s21
      %s24 = sphi 0, %s23
      %s38 = sphi 0, %s24
      %s42 = sphi 0, %s42
      %s44 = sphi 0, %s42
      %s45 = sphi 0, %s44
      %s59 = sphi 0, %s45
      %s63 = sphi 0, %s63
      %s65 = sphi 0, %s63
      %s66 = sphi 0, %s65
      %s80 = sphi 0, %s66
      %s84 = sphi 0, %s84
      %s86 = sphi 0, %s84
      %s87 = sphi 0, %s86
      %s101 = sphi 0, %s87
      %s107 = sphi 0, %s109
      %s110 = sphi 0, %s107
      %s111 = sphi 0, %s110
      %s127 = sphi 0, %s111
      %s131 = sphi 0, %s131
      %s133 = sphi 0, %s131
      %s134 = sphi 0, %s133
      %s148 = sphi 0, %s134
      %s152 = sphi 0, %s152
      %s154 = sphi 0, %s152
      %s155 = sphi 0, %s154
      %s169 = sphi 0, %s155
      %s173 = sphi 0, %s173
      %s175 = sphi 0, %s173
      %s176 = sphi 0, %s175
      %s190 = sphi 0, %s176
    $region4: #{fused_se_conv_bn.1} parent=1 // loop_header_branch
      %16 = sbr.rel (%p14) target = $region8
    $region5: #{fused_se_conv_bn.1} parent=1 // loop_body
      %s18 = ssub.s32 %s13, 1
      %s19 = ssub.s32 %s13, 2
      %s20 = sadd.s32 %s13, 1
      %s22 = sadd.s32 %s21, 1
      %p25 = scmp.eq.s32.totalorder %s13, 1
      %p26 = scmp.ne.s32.totalorder %s21, %s23
      %p27 = scmp.eq.s32.totalorder %s13, 0
      %p28 = por %p26, %p27
      %p29 = scmp.ne.s32.totalorder %s21, %s23
      %p30 = scmp.eq.s32.totalorder %s18, 1
      %p31 = por %p29, %p30
      %p32 = scmp.ne.s32.totalorder %s23, %s24
      %p33 = scmp.eq.s32.totalorder %s18, 0
      %p34 = por %p32, %p33
      %p35 = scmp.ne.s32.totalorder %s23, %s24
      %p36 = scmp.eq.s32.totalorder %s19, 1
      %p37 = por %p35, %p36
      %p39 = scmp.ne.s32.totalorder %s24, %s38
      %p40 = scmp.eq.s32.totalorder %s19, 0
      %p41 = por %p39, %p40
      %s43 = sadd.s32 %s42, 1
      %p46 = scmp.eq.s32.totalorder %s13, 1
      %p47 = scmp.ne.s32.totalorder %s42, %s44
      %p48 = scmp.eq.s32.totalorder %s13, 0
      %p49 = por %p47, %p48
      %p50 = scmp.ne.s32.totalorder %s42, %s44
      %p51 = scmp.eq.s32.totalorder %s18, 1
      %p52 = por %p50, %p51
      %p53 = scmp.ne.s32.totalorder %s44, %s45
      %p54 = scmp.eq.s32.totalorder %s18, 0
      %p55 = por %p53, %p54
      %p56 = scmp.ne.s32.totalorder %s44, %s45
      %p57 = scmp.eq.s32.totalorder %s19, 1
      %p58 = por %p56, %p57
      %p60 = scmp.ne.s32.totalorder %s45, %s59
      %p61 = scmp.eq.s32.totalorder %s19, 0
      %p62 = por %p60, %p61
      %s64 = sadd.s32 %s63, 1
      %p67 = scmp.eq.s32.totalorder %s13, 1
      %p68 = scmp.ne.s32.totalorder %s63, %s65
      %p69 = scmp.eq.s32.totalorder %s13, 0
      %p70 = por %p68, %p69
      %p71 = scmp.ne.s32.totalorder %s63, %s65
      %p72 = scmp.eq.s32.totalorder %s18, 1
      %p73 = por %p71, %p72
      %p74 = scmp.ne.s32.totalorder %s65, %s66
      %p75 = scmp.eq.s32.totalorder %s18, 0
      %p76 = por %p74, %p75
      %p77 = scmp.ne.s32.totalorder %s65, %s66
      %p78 = scmp.eq.s32.totalorder %s19, 1
      %p79 = por %p77, %p78
      %p81 = scmp.ne.s32.totalorder %s66, %s80
      %p82 = scmp.eq.s32.totalorder %s19, 0
      %p83 = por %p81, %p82
      %s85 = sadd.s32 %s84, 1
      %p88 = scmp.eq.s32.totalorder %s13, 1
      %p89 = scmp.ne.s32.totalorder %s84, %s86
      %p90 = scmp.eq.s32.totalorder %s13, 0
      %p91 = por %p89, %p90
      %p92 = scmp.ne.s32.totalorder %s84, %s86
      %p93 = scmp.eq.s32.totalorder %s18, 1
      %p94 = por %p92, %p93
      %p95 = scmp.ne.s32.totalorder %s86, %s87
      %p96 = scmp.eq.s32.totalorder %s18, 0
      %p97 = por %p95, %p96
      %p98 = scmp.ne.s32.totalorder %s86, %s87
      %p99 = scmp.eq.s32.totalorder %s19, 1
      %p100 = por %p98, %p99
      %p102 = scmp.ne.s32.totalorder %s87, %s101
      %p103 = scmp.eq.s32.totalorder %s19, 0
      %p104 = por %p102, %p103
      %s105 = ssub.s32 %s13, %s20
      %p106 = scmp.eq.s32.totalorder %s105, 0
      %s108 = sadd.s32 %s107, 1
      %s109 = scalar_select %p106, %s107, %s108
      %p112 = pneg %p106
      %p113 = scmp.eq.s32.totalorder %s13, 1
      %p114 = por %p112, %p113
      %p115 = scmp.ne.s32.totalorder %s107, %s110
      %p116 = scmp.eq.s32.totalorder %s13, 0
      %p117 = por %p115, %p116
      %p118 = scmp.ne.s32.totalorder %s107, %s110
      %p119 = scmp.eq.s32.totalorder %s18, 1
      %p120 = por %p118, %p119
      %p121 = scmp.ne.s32.totalorder %s110, %s111
      %p122 = scmp.eq.s32.totalorder %s18, 0
      %p123 = por %p121, %p122
      %p124 = scmp.ne.s32.totalorder %s110, %s111
      %p125 = scmp.eq.s32.totalorder %s19, 1
      %p126 = por %p124, %p125
      %p128 = scmp.ne.s32.totalorder %s111, %s127
      %p129 = scmp.eq.s32.totalorder %s19, 0
      %p130 = por %p128, %p129
      %s132 = sadd.s32 %s131, 1
      %p135 = scmp.eq.s32.totalorder %s13, 1
      %p136 = scmp.ne.s32.totalorder %s131, %s133
      %p137 = scmp.eq.s32.totalorder %s13, 0
      %p138 = por %p136, %p137
      %p139 = scmp.ne.s32.totalorder %s131, %s133
      %p140 = scmp.eq.s32.totalorder %s18, 1
      %p141 = por %p139, %p140
      %p142 = scmp.ne.s32.totalorder %s133, %s134
      %p143 = scmp.eq.s32.totalorder %s18, 0
      %p144 = por %p142, %p143
      %p145 = scmp.ne.s32.totalorder %s133, %s134
      %p146 = scmp.eq.s32.totalorder %s19, 1
      %p147 = por %p145, %p146
      %p149 = scmp.ne.s32.totalorder %s134, %s148
      %p150 = scmp.eq.s32.totalorder %s19, 0
      %p151 = por %p149, %p150
      %s153 = sadd.s32 %s152, 1
      %p156 = scmp.eq.s32.totalorder %s13, 1
      %p157 = scmp.ne.s32.totalorder %s152, %s154
      %p158 = scmp.eq.s32.totalorder %s13, 0
      %p159 = por %p157, %p158
      %p160 = scmp.ne.s32.totalorder %s152, %s154
      %p161 = scmp.eq.s32.totalorder %s18, 1
      %p162 = por %p160, %p161
      %p163 = scmp.ne.s32.totalorder %s154, %s155
      %p164 = scmp.eq.s32.totalorder %s18, 0
      %p165 = por %p163, %p164
      %p166 = scmp.ne.s32.totalorder %s154, %s155
      %p167 = scmp.eq.s32.totalorder %s19, 1
      %p168 = por %p166, %p167
      %p170 = scmp.ne.s32.totalorder %s155, %s169
      %p171 = scmp.eq.s32.totalorder %s19, 0
      %p172 = por %p170, %p171
      %s174 = sadd.s32 %s173, 1
      %p177 = scmp.eq.s32.totalorder %s13, 1
      %p178 = scmp.ne.s32.totalorder %s173, %s175
      %p179 = scmp.eq.s32.totalorder %s13, 0
      %p180 = por %p178, %p179
      %p181 = scmp.ne.s32.totalorder %s173, %s175
      %p182 = scmp.eq.s32.totalorder %s18, 1
      %p183 = por %p181, %p182
      %p184 = scmp.ne.s32.totalorder %s175, %s176
      %p185 = scmp.eq.s32.totalorder %s18, 0
      %p186 = por %p184, %p185
      %p187 = scmp.ne.s32.totalorder %s175, %s176
      %p188 = scmp.eq.s32.totalorder %s19, 1
      %p189 = por %p187, %p188
      %p191 = scmp.ne.s32.totalorder %s176, %s190
      %p192 = scmp.eq.s32.totalorder %s19, 0
      %p193 = por %p191, %p192
      %p194 = scmp.le.s32.totalorder 1, %s13
      %p195 = scmp.lt.s32.totalorder %s13, 3
      %p196 = pnand %p194, %p195
      %p197 = pneg %p196
      // Predicated region
      $region9: #{fused_se_conv_bn.1} parent=5 // pred_check
        _
      $region10: #{fused_se_conv_bn.1} parent=5 // pred_check_branch
        %199 = sbr.rel (%p196) target = $region12
      $region11: #{fused_se_conv_bn.1} parent=5 // pred_region
        %s200 = ssub.s32 %s13, 1
        // Predicated region
        $region13: #{fused_se_conv_bn.1} parent=11 // pred_check
          %p201 = pneg %p34
        $region14: #{fused_se_conv_bn.1} parent=11 // pred_check_branch
          %203 = sbr.rel (%p201) target = $region16
        $region15: #{fused_se_conv_bn.1} parent=11 // pred_region
          _
        $region16: #{fused_se_conv_bn.1} parent=11 // pred_fallthru
          _
        // Predicated region
        $region17: #{fused_se_conv_bn.1} parent=11 // pred_check
          %p204 = pneg %p55
        $region18: #{fused_se_conv_bn.1} parent=11 // pred_check_branch
          %206 = sbr.rel (%p204) target = $region20
        $region19: #{fused_se_conv_bn.1} parent=11 // pred_region
          _
        $region20: #{fused_se_conv_bn.1} parent=11 // pred_fallthru
          _
        // Predicated region
        $region21: #{fused_se_conv_bn.1} parent=11 // pred_check
          %p207 = pneg %p76
        $region22: #{fused_se_conv_bn.1} parent=11 // pred_check_branch
          %209 = sbr.rel (%p207) target = $region24
        $region23: #{fused_se_conv_bn.1} parent=11 // pred_region
          _
        $region24: #{fused_se_conv_bn.1} parent=11 // pred_fallthru
          _
        // Predicated region
        $region25: #{fused_se_conv_bn.1} parent=11 // pred_check
          %p210 = pneg %p97
        $region26: #{fused_se_conv_bn.1} parent=11 // pred_check_branch
          %212 = sbr.rel (%p210) target = $region28
        $region27: #{fused_se_conv_bn.1} parent=11 // pred_region
          _
        $region28: #{fused_se_conv_bn.1} parent=11 // pred_fallthru
          _
        // Predicated region
        $region29: #{fused_se_conv_bn.1} parent=11 // pred_check
          %p213 = pneg %p144
        $region30: #{fused_se_conv_bn.1} parent=11 // pred_check_branch
          %215 = sbr.rel (%p213) target = $region32
        $region31: #{fused_se_conv_bn.1} parent=11 // pred_region
          _
        $region32: #{fused_se_conv_bn.1} parent=11 // pred_fallthru
          _
        // Predicated region
        $region33: #{fused_se_conv_bn.1} parent=11 // pred_check
          %p216 = pneg %p165
        $region34: #{fused_se_conv_bn.1} parent=11 // pred_check_branch
          %218 = sbr.rel (%p216) target = $region36
        $region35: #{fused_se_conv_bn.1} parent=11 // pred_region
          _
        $region36: #{fused_se_conv_bn.1} parent=11 // pred_fallthru
          _
      $region12: #{fused_se_conv_bn.1} parent=5 // pred_fallthru
        _
      %p219 = scmp.lt.s32.totalorder %s13, 2
      // Predicated region
      $region37: #{fused_se_conv_bn.1} parent=5 // pred_check
        %p220 = pneg %p219
      $region38: #{fused_se_conv_bn.1} parent=5 // pred_check_branch
        %222 = sbr.rel (%p220) target = $region40
      $region39: #{fused_se_conv_bn.1} parent=5 // pred_region
        // Predicated region
        $region41: #{fused_se_conv_bn.1} parent=39 // pred_check
          %p223 = pneg %p117
        $region42: #{fused_se_conv_bn.1} parent=39 // pred_check_branch
          %225 = sbr.rel (%p223) target = $region44
        $region43: #{fused_se_conv_bn.1} parent=39 // pred_region
          %s226 = sand.u32 %s107, 1
          %s227 = sand.u32 %s107, 1
          %s228 = smul.addr %s227, 960
          %s229 = scalar_lea.vmem [#allocation6], %s228
          %s230 = smul.u32 4, %s13
          %s231 = ssub.s32 7, %s230
          %p232 = scmp.lt.s32.totalorder %s231, 4
          %s233 = scalar_select %p232, %s231, 4
          %s234 = smul.u32 3840, %s233
          %p235 = scmp.ne.s32.totalorder 0, %s234
          %s236 = smul.addr %s230, 4
          %s237 = scalar_lea.vmem %s4, %s236
          %s238 = smul.u32 %s233, 4
          // Predicated region
          $region45: #{fused_se_conv_bn.1} parent=43 // pred_check
            %p239 = pneg %p235
          $region46: #{fused_se_conv_bn.1} parent=43 // pred_check_branch
            %241 = sbr.rel (%p239) target = $region48
          $region47: #{fused_se_conv_bn.1} parent=43 // pred_region
            %p242 = scmp.lt.u32.totalorder %s238, 8
            %p243 = pneg %p242
            // Predicated region
            $region49: #{fused_se_conv_bn.1} parent=47 // pred_check
              _
            $region50: #{fused_se_conv_bn.1} parent=47 // pred_check_branch
              %245 = sbr.rel (%p242) target = $region52
            $region51: #{fused_se_conv_bn.1} parent=47 // pred_region
              %s379 = sand.u32 %s238, 7
              %p380 = scmp.eq.s32.totalorder %s379, 0
              // Predicated region
              $region64: #{fused_se_conv_bn.1} parent=51 // pred_check
                %p381 = pneg %p380
              $region65: #{fused_se_conv_bn.1} parent=51 // pred_check_branch
                %383 = sbr.rel (%p381) target = $region67
              $region66: #{fused_se_conv_bn.1} parent=51 // pred_region
                %s384 = sshrl.u32 %s238, 3
                %s385 = sshrl.u32 %s384, 1
                // While loop
                $region68: #{fused_se_conv_bn.1} parent=66 // loop_pre_header
                  _
                $region69: #{fused_se_conv_bn.1} parent=66 // loop_header
                  %s389 = sphi 0, %s391
                  %p390 = scmp.ge.s32.totalorder %s389, %s385
                  %s394 = sphi 0, %s639
                  %s395 = sphi %s237, %s642
                  %s396 = sphi %s229, %s643
                $region70: #{fused_se_conv_bn.1} parent=66 // loop_header_branch
                  %393 = sbr.rel (%p390) target = $region74
                $region71: #{fused_se_conv_bn.1} parent=66 // loop_body
                  %v397 = vld [vmem:[%s395] sm:$0xff]
                  %398 = vst [vmem:[%s396] sm:$0xff] %v397
                  %v399 = vld [vmem:[%s395 + $0x8] sm:$0xff]
                  %400 = vst [vmem:[%s396 + $0x8] sm:$0xff] %v399
                  %v401 = vld [vmem:[%s395 + $0x1c] sm:$0xff]
                  %402 = vst [vmem:[%s396 + $0x10] sm:$0xff] %v401
                  %v403 = vld [vmem:[%s395 + $0x24] sm:$0xff]
                  %404 = vst [vmem:[%s396 + $0x18] sm:$0xff] %v403
                  %v405 = vld [vmem:[%s395 + $0x38] sm:$0xff]
                  %406 = vst [vmem:[%s396 + $0x20] sm:$0xff] %v405
                  %v407 = vld [vmem:[%s395 + $0x40] sm:$0xff]
                  %408 = vst [vmem:[%s396 + $0x28] sm:$0xff] %v407
                  %v409 = vld [vmem:[%s395 + $0x54] sm:$0xff]
                  %410 = vst [vmem:[%s396 + $0x30] sm:$0xff] %v409
                  %v411 = vld [vmem:[%s395 + $0x5c] sm:$0xff]
                  %412 = vst [vmem:[%s396 + $0x38] sm:$0xff] %v411
                  %v413 = vld [vmem:[%s395 + $0x70] sm:$0xff]
                  %414 = vst [vmem:[%s396 + $0x40] sm:$0xff] %v413
                  %v415 = vld [vmem:[%s395 + $0x78] sm:$0xff]
                  %416 = vst [vmem:[%s396 + $0x48] sm:$0xff] %v415
                  %v417 = vld [vmem:[%s395 + $0x8c] sm:$0xff]
                  %418 = vst [vmem:[%s396 + $0x50] sm:$0xff] %v417
                  %v419 = vld [vmem:[%s395 + $0x94] sm:$0xff]
                  %420 = vst [vmem:[%s396 + $0x58] sm:$0xff] %v419
                  %v421 = vld [vmem:[%s395 + $0xa8] sm:$0xff]
                  %422 = vst [vmem:[%s396 + $0x60] sm:$0xff] %v421
                  %v423 = vld [vmem:[%s395 + $0xb0] sm:$0xff]
                  %424 = vst [vmem:[%s396 + $0x68] sm:$0xff] %v423
                  %v425 = vld [vmem:[%s395 + $0xc4] sm:$0xff]
                  %426 = vst [vmem:[%s396 + $0x70] sm:$0xff] %v425
                  %v427 = vld [vmem:[%s395 + $0xcc] sm:$0xff]
                  %428 = vst [vmem:[%s396 + $0x78] sm:$0xff] %v427
                  %v429 = vld [vmem:[%s395 + $0xe0] sm:$0xff]
                  %430 = vst [vmem:[%s396 + $0x80] sm:$0xff] %v429
                  %v431 = vld [vmem:[%s395 + $0xe8] sm:$0xff]
                  %432 = vst [vmem:[%s396 + $0x88] sm:$0xff] %v431
                  %v433 = vld [vmem:[%s395 + $0xfc] sm:$0xff]
                  %434 = vst [vmem:[%s396 + $0x90] sm:$0xff] %v433
                  %v435 = vld [vmem:[%s395 + $0x104] sm:$0xff]
                  %436 = vst [vmem:[%s396 + $0x98] sm:$0xff] %v435
                  %v437 = vld [vmem:[%s395 + $0x118] sm:$0xff]
                  %438 = vst [vmem:[%s396 + $0xa0] sm:$0xff] %v437
                  %v439 = vld [vmem:[%s395 + $0x120] sm:$0xff]
                  %440 = vst [vmem:[%s396 + $0xa8] sm:$0xff] %v439
                  %v441 = vld [vmem:[%s395 + $0x134] sm:$0xff]
                  %442 = vst [vmem:[%s396 + $0xb0] sm:$0xff] %v441
                  %v443 = vld [vmem:[%s395 + $0x13c] sm:$0xff]
                  %444 = vst [vmem:[%s396 + $0xb8] sm:$0xff] %v443
                  %v445 = vld [vmem:[%s395 + $0x150] sm:$0xff]
                  %446 = vst [vmem:[%s396 + $0xc0] sm:$0xff] %v445
                  %v447 = vld [vmem:[%s395 + $0x158] sm:$0xff]
                  %448 = vst [vmem:[%s396 + $0xc8] sm:$0xff] %v447
                  %v449 = vld [vmem:[%s395 + $0x16c] sm:$0xff]
                  %450 = vst [vmem:[%s396 + $0xd0] sm:$0xff] %v449
                  %v451 = vld [vmem:[%s395 + $0x174] sm:$0xff]
                  %452 = vst [vmem:[%s396 + $0xd8] sm:$0xff] %v451
                  %v453 = vld [vmem:[%s395 + $0x188] sm:$0xff]
                  %454 = vst [vmem:[%s396 + $0xe0] sm:$0xff] %v453
                  %v455 = vld [vmem:[%s395 + $0x190] sm:$0xff]
                  %456 = vst [vmem:[%s396 + $0xe8] sm:$0xff] %v455
                  %v457 = vld [vmem:[%s395 + $0x1a4] sm:$0xff]
                  %458 = vst [vmem:[%s396 + $0xf0] sm:$0xff] %v457
                  %v459 = vld [vmem:[%s395 + $0x1ac] sm:$0xff]
                  %460 = vst [vmem:[%s396 + $0xf8] sm:$0xff] %v459
                  %v461 = vld [vmem:[%s395 + $0x1c0] sm:$0xff]
                  %462 = vst [vmem:[%s396 + $0x100] sm:$0xff] %v461
                  %v463 = vld [vmem:[%s395 + $0x1c8] sm:$0xff]
                  %464 = vst [vmem:[%s396 + $0x108] sm:$0xff] %v463
                  %v465 = vld [vmem:[%s395 + $0x1dc] sm:$0xff]
                  %466 = vst [vmem:[%s396 + $0x110] sm:$0xff] %v465
                  %v467 = vld [vmem:[%s395 + $0x1e4] sm:$0xff]
                  %468 = vst [vmem:[%s396 + $0x118] sm:$0xff] %v467
                  %v469 = vld [vmem:[%s395 + $0x1f8] sm:$0xff]
                  %470 = vst [vmem:[%s396 + $0x120] sm:$0xff] %v469
                  %v471 = vld [vmem:[%s395 + $0x200] sm:$0xff]
                  %472 = vst [vmem:[%s396 + $0x128] sm:$0xff] %v471
                  %v473 = vld [vmem:[%s395 + $0x214] sm:$0xff]
                  %474 = vst [vmem:[%s396 + $0x130] sm:$0xff] %v473
                  %v475 = vld [vmem:[%s395 + $0x21c] sm:$0xff]
                  %476 = vst [vmem:[%s396 + $0x138] sm:$0xff] %v475
                  %v477 = vld [vmem:[%s395 + $0x230] sm:$0xff]
                  %478 = vst [vmem:[%s396 + $0x140] sm:$0xff] %v477
                  %v479 = vld [vmem:[%s395 + $0x238] sm:$0xff]
                  %480 = vst [vmem:[%s396 + $0x148] sm:$0xff] %v479
                  %v481 = vld [vmem:[%s395 + $0x24c] sm:$0xff]
                  %482 = vst [vmem:[%s396 + $0x150] sm:$0xff] %v481
                  %v483 = vld [vmem:[%s395 + $0x254] sm:$0xff]
                  %484 = vst [vmem:[%s396 + $0x158] sm:$0xff] %v483
                  %v485 = vld [vmem:[%s395 + $0x268] sm:$0xff]
                  %486 = vst [vmem:[%s396 + $0x160] sm:$0xff] %v485
                  %v487 = vld [vmem:[%s395 + $0x270] sm:$0xff]
                  %488 = vst [vmem:[%s396 + $0x168] sm:$0xff] %v487
                  %v489 = vld [vmem:[%s395 + $0x284] sm:$0xff]
                  %490 = vst [vmem:[%s396 + $0x170] sm:$0xff] %v489
                  %v491 = vld [vmem:[%s395 + $0x28c] sm:$0xff]
                  %492 = vst [vmem:[%s396 + $0x178] sm:$0xff] %v491
                  %v493 = vld [vmem:[%s395 + $0x2a0] sm:$0xff]
                  %494 = vst [vmem:[%s396 + $0x180] sm:$0xff] %v493
                  %v495 = vld [vmem:[%s395 + $0x2a8] sm:$0xff]
                  %496 = vst [vmem:[%s396 + $0x188] sm:$0xff] %v495
                  %v497 = vld [vmem:[%s395 + $0x2bc] sm:$0xff]
                  %498 = vst [vmem:[%s396 + $0x190] sm:$0xff] %v497
                  %v499 = vld [vmem:[%s395 + $0x2c4] sm:$0xff]
                  %500 = vst [vmem:[%s396 + $0x198] sm:$0xff] %v499
                  %v501 = vld [vmem:[%s395 + $0x2d8] sm:$0xff]
                  %502 = vst [vmem:[%s396 + $0x1a0] sm:$0xff] %v501
                  %v503 = vld [vmem:[%s395 + $0x2e0] sm:$0xff]
                  %504 = vst [vmem:[%s396 + $0x1a8] sm:$0xff] %v503
                  %v505 = vld [vmem:[%s395 + $0x2f4] sm:$0xff]
                  %506 = vst [vmem:[%s396 + $0x1b0] sm:$0xff] %v505
                  %v507 = vld [vmem:[%s395 + $0x2fc] sm:$0xff]
                  %508 = vst [vmem:[%s396 + $0x1b8] sm:$0xff] %v507
                  %v509 = vld [vmem:[%s395 + $0x310] sm:$0xff]
                  %510 = vst [vmem:[%s396 + $0x1c0] sm:$0xff] %v509
                  %v511 = vld [vmem:[%s395 + $0x318] sm:$0xff]
                  %512 = vst [vmem:[%s396 + $0x1c8] sm:$0xff] %v511
                  %v513 = vld [vmem:[%s395 + $0x32c] sm:$0xff]
                  %514 = vst [vmem:[%s396 + $0x1d0] sm:$0xff] %v513
                  %v515 = vld [vmem:[%s395 + $0x334] sm:$0xff]
                  %516 = vst [vmem:[%s396 + $0x1d8] sm:$0xff] %v515
                  %v517 = vld [vmem:[%s395 + $0x348] sm:$0xff]
                  %518 = vst [vmem:[%s396 + $0x1e0] sm:$0xff] %v517
                  %v519 = vld [vmem:[%s395 + $0x350] sm:$0xff]
                  %520 = vst [vmem:[%s396 + $0x1e8] sm:$0xff] %v519
                  %v521 = vld [vmem:[%s395 + $0x364] sm:$0xff]
                  %522 = vst [vmem:[%s396 + $0x1f0] sm:$0xff] %v521
                  %v523 = vld [vmem:[%s395 + $0x36c] sm:$0xff]
                  %524 = vst [vmem:[%s396 + $0x1f8] sm:$0xff] %v523
                  %v525 = vld [vmem:[%s395 + $0x380] sm:$0xff]
                  %526 = vst [vmem:[%s396 + $0x200] sm:$0xff] %v525
                  %v527 = vld [vmem:[%s395 + $0x388] sm:$0xff]
                  %528 = vst [vmem:[%s396 + $0x208] sm:$0xff] %v527
                  %v529 = vld [vmem:[%s395 + $0x39c] sm:$0xff]
                  %530 = vst [vmem:[%s396 + $0x210] sm:$0xff] %v529
                  %v531 = vld [vmem:[%s395 + $0x3a4] sm:$0xff]
                  %532 = vst [vmem:[%s396 + $0x218] sm:$0xff] %v531
                  %v533 = vld [vmem:[%s395 + $0x3b8] sm:$0xff]
                  %534 = vst [vmem:[%s396 + $0x220] sm:$0xff] %v533
                  %v535 = vld [vmem:[%s395 + $0x3c0] sm:$0xff]
                  %536 = vst [vmem:[%s396 + $0x228] sm:$0xff] %v535
                  %v537 = vld [vmem:[%s395 + $0x3d4] sm:$0xff]
                  %538 = vst [vmem:[%s396 + $0x230] sm:$0xff] %v537
                  %v539 = vld [vmem:[%s395 + $0x3dc] sm:$0xff]
                  %540 = vst [vmem:[%s396 + $0x238] sm:$0xff] %v539
                  %v541 = vld [vmem:[%s395 + $0x3f0] sm:$0xff]
                  %542 = vst [vmem:[%s396 + $0x240] sm:$0xff] %v541
                  %v543 = vld [vmem:[%s395 + $0x3f8] sm:$0xff]
                  %544 = vst [vmem:[%s396 + $0x248] sm:$0xff] %v543
                  %v545 = vld [vmem:[%s395 + $0x40c] sm:$0xff]
                  %546 = vst [vmem:[%s396 + $0x250] sm:$0xff] %v545
                  %v547 = vld [vmem:[%s395 + $0x414] sm:$0xff]
                  %548 = vst [vmem:[%s396 + $0x258] sm:$0xff] %v547
                  %v549 = vld [vmem:[%s395 + $0x428] sm:$0xff]
                  %550 = vst [vmem:[%s396 + $0x260] sm:$0xff] %v549
                  %v551 = vld [vmem:[%s395 + $0x430] sm:$0xff]
                  %552 = vst [vmem:[%s396 + $0x268] sm:$0xff] %v551
                  %v553 = vld [vmem:[%s395 + $0x444] sm:$0xff]
                  %554 = vst [vmem:[%s396 + $0x270] sm:$0xff] %v553
                  %v555 = vld [vmem:[%s395 + $0x44c] sm:$0xff]
                  %556 = vst [vmem:[%s396 + $0x278] sm:$0xff] %v555
                  %v557 = vld [vmem:[%s395 + $0x460] sm:$0xff]
                  %558 = vst [vmem:[%s396 + $0x280] sm:$0xff] %v557
                  %v559 = vld [vmem:[%s395 + $0x468] sm:$0xff]
                  %560 = vst [vmem:[%s396 + $0x288] sm:$0xff] %v559
                  %v561 = vld [vmem:[%s395 + $0x47c] sm:$0xff]
                  %562 = vst [vmem:[%s396 + $0x290] sm:$0xff] %v561
                  %v563 = vld [vmem:[%s395 + $0x484] sm:$0xff]
                  %564 = vst [vmem:[%s396 + $0x298] sm:$0xff] %v563
                  %v565 = vld [vmem:[%s395 + $0x498] sm:$0xff]
                  %566 = vst [vmem:[%s396 + $0x2a0] sm:$0xff] %v565
                  %v567 = vld [vmem:[%s395 + $0x4a0] sm:$0xff]
                  %568 = vst [vmem:[%s396 + $0x2a8] sm:$0xff] %v567
                  %v569 = vld [vmem:[%s395 + $0x4b4] sm:$0xff]
                  %570 = vst [vmem:[%s396 + $0x2b0] sm:$0xff] %v569
                  %v571 = vld [vmem:[%s395 + $0x4bc] sm:$0xff]
                  %572 = vst [vmem:[%s396 + $0x2b8] sm:$0xff] %v571
                  %v573 = vld [vmem:[%s395 + $0x4d0] sm:$0xff]
                  %574 = vst [vmem:[%s396 + $0x2c0] sm:$0xff] %v573
                  %v575 = vld [vmem:[%s395 + $0x4d8] sm:$0xff]
                  %576 = vst [vmem:[%s396 + $0x2c8] sm:$0xff] %v575
                  %v577 = vld [vmem:[%s395 + $0x4ec] sm:$0xff]
                  %578 = vst [vmem:[%s396 + $0x2d0] sm:$0xff] %v577
                  %v579 = vld [vmem:[%s395 + $0x4f4] sm:$0xff]
                  %580 = vst [vmem:[%s396 + $0x2d8] sm:$0xff] %v579
                  %v581 = vld [vmem:[%s395 + $0x508] sm:$0xff]
                  %582 = vst [vmem:[%s396 + $0x2e0] sm:$0xff] %v581
                  %v583 = vld [vmem:[%s395 + $0x510] sm:$0xff]
                  %584 = vst [vmem:[%s396 + $0x2e8] sm:$0xff] %v583
                  %v585 = vld [vmem:[%s395 + $0x524] sm:$0xff]
                  %586 = vst [vmem:[%s396 + $0x2f0] sm:$0xff] %v585
                  %v587 = vld [vmem:[%s395 + $0x52c] sm:$0xff]
                  %588 = vst [vmem:[%s396 + $0x2f8] sm:$0xff] %v587
                  %v589 = vld [vmem:[%s395 + $0x540] sm:$0xff]
                  %590 = vst [vmem:[%s396 + $0x300] sm:$0xff] %v589
                  %v591 = vld [vmem:[%s395 + $0x548] sm:$0xff]
                  %592 = vst [vmem:[%s396 + $0x308] sm:$0xff] %v591
                  %v593 = vld [vmem:[%s395 + $0x55c] sm:$0xff]
                  %594 = vst [vmem:[%s396 + $0x310] sm:$0xff] %v593
                  %v595 = vld [vmem:[%s395 + $0x564] sm:$0xff]
                  %596 = vst [vmem:[%s396 + $0x318] sm:$0xff] %v595
                  %v597 = vld [vmem:[%s395 + $0x578] sm:$0xff]
                  %598 = vst [vmem:[%s396 + $0x320] sm:$0xff] %v597
                  %v599 = vld [vmem:[%s395 + $0x580] sm:$0xff]
                  %600 = vst [vmem:[%s396 + $0x328] sm:$0xff] %v599
                  %v601 = vld [vmem:[%s395 + $0x594] sm:$0xff]
                  %602 = vst [vmem:[%s396 + $0x330] sm:$0xff] %v601
                  %v603 = vld [vmem:[%s395 + $0x59c] sm:$0xff]
                  %604 = vst [vmem:[%s396 + $0x338] sm:$0xff] %v603
                  %v605 = vld [vmem:[%s395 + $0x5b0] sm:$0xff]
                  %606 = vst [vmem:[%s396 + $0x340] sm:$0xff] %v605
                  %v607 = vld [vmem:[%s395 + $0x5b8] sm:$0xff]
                  %608 = vst [vmem:[%s396 + $0x348] sm:$0xff] %v607
                  %v609 = vld [vmem:[%s395 + $0x5cc] sm:$0xff]
                  %610 = vst [vmem:[%s396 + $0x350] sm:$0xff] %v609
                  %v611 = vld [vmem:[%s395 + $0x5d4] sm:$0xff]
                  %612 = vst [vmem:[%s396 + $0x358] sm:$0xff] %v611
                  %v613 = vld [vmem:[%s395 + $0x5e8] sm:$0xff]
                  %614 = vst [vmem:[%s396 + $0x360] sm:$0xff] %v613
                  %v615 = vld [vmem:[%s395 + $0x5f0] sm:$0xff]
                  %616 = vst [vmem:[%s396 + $0x368] sm:$0xff] %v615
                  %v617 = vld [vmem:[%s395 + $0x604] sm:$0xff]
                  %618 = vst [vmem:[%s396 + $0x370] sm:$0xff] %v617
                  %v619 = vld [vmem:[%s395 + $0x60c] sm:$0xff]
                  %620 = vst [vmem:[%s396 + $0x378] sm:$0xff] %v619
                  %v621 = vld [vmem:[%s395 + $0x620] sm:$0xff]
                  %622 = vst [vmem:[%s396 + $0x380] sm:$0xff] %v621
                  %v623 = vld [vmem:[%s395 + $0x628] sm:$0xff]
                  %624 = vst [vmem:[%s396 + $0x388] sm:$0xff] %v623
                  %v625 = vld [vmem:[%s395 + $0x63c] sm:$0xff]
                  %626 = vst [vmem:[%s396 + $0x390] sm:$0xff] %v625
                  %v627 = vld [vmem:[%s395 + $0x644] sm:$0xff]
                  %628 = vst [vmem:[%s396 + $0x398] sm:$0xff] %v627
                  %v629 = vld [vmem:[%s395 + $0x658] sm:$0xff]
                  %630 = vst [vmem:[%s396 + $0x3a0] sm:$0xff] %v629
                  %v631 = vld [vmem:[%s395 + $0x660] sm:$0xff]
                  %632 = vst [vmem:[%s396 + $0x3a8] sm:$0xff] %v631
                  %v633 = vld [vmem:[%s395 + $0x674] sm:$0xff]
                  %634 = vst [vmem:[%s396 + $0x3b0] sm:$0xff] %v633
                  %v635 = vld [vmem:[%s395 + $0x67c] sm:$0xff]
                  %636 = vst [vmem:[%s396 + $0x3b8] sm:$0xff] %v635
                  %s637 = sadd.s32 1, %s394
                  %p638 = scmp.ge.s32.totalorder %s637, %s385
                  %s639 = scalar_select %p638, 0, %s637
                  %s640 = smul.u32 %s639, 16
                  %s641 = smul.u32 %s639, 16
                  %s642 = scalar_lea.vmem %s237, %s640
                  %s643 = scalar_lea.vmem %s229, %s641 [#allocation6]
                $region72: #{fused_se_conv_bn.1} parent=66 // loop_footer
                  %s391 = sadd.s32 %s389, 1
                $region73: #{fused_se_conv_bn.1} parent=66 // loop_footer_branch
                  %388 = sbr.rel target = $region69
                $region74: #{fused_se_conv_bn.1} parent=66 // loop_exit
                  _
                %s644 = sshrl.u32 %s384, 1
                %s645 = sand.u32 %s384, 1
                %s646 = smul.u32 %s644, 2
                %s647 = smul.u32 128, %s646
                %s648 = sshra.s32 %s647, 4
                %s649 = scalar_lea.vmem %s237, %s648
                %s650 = smul.u32 128, %s646
                %s651 = sshra.s32 %s650, 4
                %s652 = scalar_lea.vmem %s229, %s651 [#allocation6]
                // While loop
                $region75: #{fused_se_conv_bn.1} parent=66 // loop_pre_header
                  _
                $region76: #{fused_se_conv_bn.1} parent=66 // loop_header
                  %s656 = sphi 0, %s658
                  %p657 = scmp.ge.s32.totalorder %s656, %s645
                  %s661 = sphi 0, %s786
                  %s662 = sphi %s649, %s789
                  %s663 = sphi %s652, %s790
                $region77: #{fused_se_conv_bn.1} parent=66 // loop_header_branch
                  %660 = sbr.rel (%p657) target = $region81
                $region78: #{fused_se_conv_bn.1} parent=66 // loop_body
                  %v664 = vld [vmem:[%s662] sm:$0xff]
                  %665 = vst [vmem:[%s663] sm:$0xff] %v664
                  %v666 = vld [vmem:[%s662 + $0x1c] sm:$0xff]
                  %667 = vst [vmem:[%s663 + $0x10] sm:$0xff] %v666
                  %v668 = vld [vmem:[%s662 + $0x38] sm:$0xff]
                  %669 = vst [vmem:[%s663 + $0x20] sm:$0xff] %v668
                  %v670 = vld [vmem:[%s662 + $0x54] sm:$0xff]
                  %671 = vst [vmem:[%s663 + $0x30] sm:$0xff] %v670
                  %v672 = vld [vmem:[%s662 + $0x70] sm:$0xff]
                  %673 = vst [vmem:[%s663 + $0x40] sm:$0xff] %v672
                  %v674 = vld [vmem:[%s662 + $0x8c] sm:$0xff]
                  %675 = vst [vmem:[%s663 + $0x50] sm:$0xff] %v674
                  %v676 = vld [vmem:[%s662 + $0xa8] sm:$0xff]
                  %677 = vst [vmem:[%s663 + $0x60] sm:$0xff] %v676
                  %v678 = vld [vmem:[%s662 + $0xc4] sm:$0xff]
                  %679 = vst [vmem:[%s663 + $0x70] sm:$0xff] %v678
                  %v680 = vld [vmem:[%s662 + $0xe0] sm:$0xff]
                  %681 = vst [vmem:[%s663 + $0x80] sm:$0xff] %v680
                  %v682 = vld [vmem:[%s662 + $0xfc] sm:$0xff]
                  %683 = vst [vmem:[%s663 + $0x90] sm:$0xff] %v682
                  %v684 = vld [vmem:[%s662 + $0x118] sm:$0xff]
                  %685 = vst [vmem:[%s663 + $0xa0] sm:$0xff] %v684
                  %v686 = vld [vmem:[%s662 + $0x134] sm:$0xff]
                  %687 = vst [vmem:[%s663 + $0xb0] sm:$0xff] %v686
                  %v688 = vld [vmem:[%s662 + $0x150] sm:$0xff]
                  %689 = vst [vmem:[%s663 + $0xc0] sm:$0xff] %v688
                  %v690 = vld [vmem:[%s662 + $0x16c] sm:$0xff]
                  %691 = vst [vmem:[%s663 + $0xd0] sm:$0xff] %v690
                  %v692 = vld [vmem:[%s662 + $0x188] sm:$0xff]
                  %693 = vst [vmem:[%s663 + $0xe0] sm:$0xff] %v692
                  %v694 = vld [vmem:[%s662 + $0x1a4] sm:$0xff]
                  %695 = vst [vmem:[%s663 + $0xf0] sm:$0xff] %v694
                  %v696 = vld [vmem:[%s662 + $0x1c0] sm:$0xff]
                  %697 = vst [vmem:[%s663 + $0x100] sm:$0xff] %v696
                  %v698 = vld [vmem:[%s662 + $0x1dc] sm:$0xff]
                  %699 = vst [vmem:[%s663 + $0x110] sm:$0xff] %v698
                  %v700 = vld [vmem:[%s662 + $0x1f8] sm:$0xff]
                  %701 = vst [vmem:[%s663 + $0x120] sm:$0xff] %v700
                  %v702 = vld [vmem:[%s662 + $0x214] sm:$0xff]
                  %703 = vst [vmem:[%s663 + $0x130] sm:$0xff] %v702
                  %v704 = vld [vmem:[%s662 + $0x230] sm:$0xff]
                  %705 = vst [vmem:[%s663 + $0x140] sm:$0xff] %v704
                  %v706 = vld [vmem:[%s662 + $0x24c] sm:$0xff]
                  %707 = vst [vmem:[%s663 + $0x150] sm:$0xff] %v706
                  %v708 = vld [vmem:[%s662 + $0x268] sm:$0xff]
                  %709 = vst [vmem:[%s663 + $0x160] sm:$0xff] %v708
                  %v710 = vld [vmem:[%s662 + $0x284] sm:$0xff]
                  %711 = vst [vmem:[%s663 + $0x170] sm:$0xff] %v710
                  %v712 = vld [vmem:[%s662 + $0x2a0] sm:$0xff]
                  %713 = vst [vmem:[%s663 + $0x180] sm:$0xff] %v712
                  %v714 = vld [vmem:[%s662 + $0x2bc] sm:$0xff]
                  %715 = vst [vmem:[%s663 + $0x190] sm:$0xff] %v714
                  %v716 = vld [vmem:[%s662 + $0x2d8] sm:$0xff]
                  %717 = vst [vmem:[%s663 + $0x1a0] sm:$0xff] %v716
                  %v718 = vld [vmem:[%s662 + $0x2f4] sm:$0xff]
                  %719 = vst [vmem:[%s663 + $0x1b0] sm:$0xff] %v718
                  %v720 = vld [vmem:[%s662 + $0x310] sm:$0xff]
                  %721 = vst [vmem:[%s663 + $0x1c0] sm:$0xff] %v720
                  %v722 = vld [vmem:[%s662 + $0x32c] sm:$0xff]
                  %723 = vst [vmem:[%s663 + $0x1d0] sm:$0xff] %v722
                  %v724 = vld [vmem:[%s662 + $0x348] sm:$0xff]
                  %725 = vst [vmem:[%s663 + $0x1e0] sm:$0xff] %v724
                  %v726 = vld [vmem:[%s662 + $0x364] sm:$0xff]
                  %727 = vst [vmem:[%s663 + $0x1f0] sm:$0xff] %v726
                  %v728 = vld [vmem:[%s662 + $0x380] sm:$0xff]
                  %729 = vst [vmem:[%s663 + $0x200] sm:$0xff] %v728
                  %v730 = vld [vmem:[%s662 + $0x39c] sm:$0xff]
                  %731 = vst [vmem:[%s663 + $0x210] sm:$0xff] %v730
                  %v732 = vld [vmem:[%s662 + $0x3b8] sm:$0xff]
                  %733 = vst [vmem:[%s663 + $0x220] sm:$0xff] %v732
                  %v734 = vld [vmem:[%s662 + $0x3d4] sm:$0xff]
                  %735 = vst [vmem:[%s663 + $0x230] sm:$0xff] %v734
                  %v736 = vld [vmem:[%s662 + $0x3f0] sm:$0xff]
                  %737 = vst [vmem:[%s663 + $0x240] sm:$0xff] %v736
                  %v738 = vld [vmem:[%s662 + $0x40c] sm:$0xff]
                  %739 = vst [vmem:[%s663 + $0x250] sm:$0xff] %v738
                  %v740 = vld [vmem:[%s662 + $0x428] sm:$0xff]
                  %741 = vst [vmem:[%s663 + $0x260] sm:$0xff] %v740
                  %v742 = vld [vmem:[%s662 + $0x444] sm:$0xff]
                  %743 = vst [vmem:[%s663 + $0x270] sm:$0xff] %v742
                  %v744 = vld [vmem:[%s662 + $0x460] sm:$0xff]
                  %745 = vst [vmem:[%s663 + $0x280] sm:$0xff] %v744
                  %v746 = vld [vmem:[%s662 + $0x47c] sm:$0xff]
                  %747 = vst [vmem:[%s663 + $0x290] sm:$0xff] %v746
                  %v748 = vld [vmem:[%s662 + $0x498] sm:$0xff]
                  %749 = vst [vmem:[%s663 + $0x2a0] sm:$0xff] %v748
                  %v750 = vld [vmem:[%s662 + $0x4b4] sm:$0xff]
                  %751 = vst [vmem:[%s663 + $0x2b0] sm:$0xff] %v750
                  %v752 = vld [vmem:[%s662 + $0x4d0] sm:$0xff]
                  %753 = vst [vmem:[%s663 + $0x2c0] sm:$0xff] %v752
                  %v754 = vld [vmem:[%s662 + $0x4ec] sm:$0xff]
                  %755 = vst [vmem:[%s663 + $0x2d0] sm:$0xff] %v754
                  %v756 = vld [vmem:[%s662 + $0x508] sm:$0xff]
                  %757 = vst [vmem:[%s663 + $0x2e0] sm:$0xff] %v756
                  %v758 = vld [vmem:[%s662 + $0x524] sm:$0xff]
                  %759 = vst [vmem:[%s663 + $0x2f0] sm:$0xff] %v758
                  %v760 = vld [vmem:[%s662 + $0x540] sm:$0xff]
                  %761 = vst [vmem:[%s663 + $0x300] sm:$0xff] %v760
                  %v762 = vld [vmem:[%s662 + $0x55c] sm:$0xff]
                  %763 = vst [vmem:[%s663 + $0x310] sm:$0xff] %v762
                  %v764 = vld [vmem:[%s662 + $0x578] sm:$0xff]
                  %765 = vst [vmem:[%s663 + $0x320] sm:$0xff] %v764
                  %v766 = vld [vmem:[%s662 + $0x594] sm:$0xff]
                  %767 = vst [vmem:[%s663 + $0x330] sm:$0xff] %v766
                  %v768 = vld [vmem:[%s662 + $0x5b0] sm:$0xff]
                  %769 = vst [vmem:[%s663 + $0x340] sm:$0xff] %v768
                  %v770 = vld [vmem:[%s662 + $0x5cc] sm:$0xff]
                  %771 = vst [vmem:[%s663 + $0x350] sm:$0xff] %v770
                  %v772 = vld [vmem:[%s662 + $0x5e8] sm:$0xff]
                  %773 = vst [vmem:[%s663 + $0x360] sm:$0xff] %v772
                  %v774 = vld [vmem:[%s662 + $0x604] sm:$0xff]
                  %775 = vst [vmem:[%s663 + $0x370] sm:$0xff] %v774
                  %v776 = vld [vmem:[%s662 + $0x620] sm:$0xff]
                  %777 = vst [vmem:[%s663 + $0x380] sm:$0xff] %v776
                  %v778 = vld [vmem:[%s662 + $0x63c] sm:$0xff]
                  %779 = vst [vmem:[%s663 + $0x390] sm:$0xff] %v778
                  %v780 = vld [vmem:[%s662 + $0x658] sm:$0xff]
                  %781 = vst [vmem:[%s663 + $0x3a0] sm:$0xff] %v780
                  %v782 = vld [vmem:[%s662 + $0x674] sm:$0xff]
                  %783 = vst [vmem:[%s663 + $0x3b0] sm:$0xff] %v782
                  %s784 = sadd.s32 1, %s661
                  %p785 = scmp.ge.s32.totalorder %s784, %s645
                  %s786 = scalar_select %p785, 0, %s784
                  %s787 = smul.u32 %s786, 8
                  %s788 = smul.u32 %s786, 8
                  %s789 = scalar_lea.vmem %s649, %s787
                  %s790 = scalar_lea.vmem %s652, %s788 [#allocation6]
                $region79: #{fused_se_conv_bn.1} parent=66 // loop_footer
                  %s658 = sadd.s32 %s656, 1
                $region80: #{fused_se_conv_bn.1} parent=66 // loop_footer_branch
                  %655 = sbr.rel target = $region76
                $region81: #{fused_se_conv_bn.1} parent=66 // loop_exit
                  _
              $region67: #{fused_se_conv_bn.1} parent=51 // pred_fallthru
                _
              %p791 = pneg %p380
              // Predicated region
              $region82: #{fused_se_conv_bn.1} parent=51 // pred_check
                _
              $region83: #{fused_se_conv_bn.1} parent=51 // pred_check_branch
                %793 = sbr.rel (%p380) target = $region85
              $region84: #{fused_se_conv_bn.1} parent=51 // pred_region
                %s794 = sand.u32 %s238, 7
                %s795 = ssub.s32 %s238, %s794
                %s796 = scalar_lea.vmem %s237, %s795
                %s797 = ssub.s32 %s238, %s794
                %s798 = scalar_lea.vmem %s229, %s797 [#allocation6]
                %s799 = sshrl.u32 %s238, 3
                %s800 = sshrl.u32 %s799, 1
                // While loop
                $region86: #{fused_se_conv_bn.1} parent=84 // loop_pre_header
                  _
                $region87: #{fused_se_conv_bn.1} parent=84 // loop_header
                  %s804 = sphi 0, %s806
                  %p805 = scmp.ge.s32.totalorder %s804, %s800
                  %s809 = sphi 0, %s1054
                  %s810 = sphi %s237, %s1057
                  %s811 = sphi %s229, %s1058
                $region88: #{fused_se_conv_bn.1} parent=84 // loop_header_branch
                  %808 = sbr.rel (%p805) target = $region92
                $region89: #{fused_se_conv_bn.1} parent=84 // loop_body
                  %v812 = vld [vmem:[%s810] sm:$0xff]
                  %813 = vst [vmem:[%s811] sm:$0xff] %v812
                  %v814 = vld [vmem:[%s810 + $0x8] sm:$0xff]
                  %815 = vst [vmem:[%s811 + $0x8] sm:$0xff] %v814
                  %v816 = vld [vmem:[%s810 + $0x1c] sm:$0xff]
                  %817 = vst [vmem:[%s811 + $0x10] sm:$0xff] %v816
                  %v818 = vld [vmem:[%s810 + $0x24] sm:$0xff]
                  %819 = vst [vmem:[%s811 + $0x18] sm:$0xff] %v818
                  %v820 = vld [vmem:[%s810 + $0x38] sm:$0xff]
                  %821 = vst [vmem:[%s811 + $0x20] sm:$0xff] %v820
                  %v822 = vld [vmem:[%s810 + $0x40] sm:$0xff]
                  %823 = vst [vmem:[%s811 + $0x28] sm:$0xff] %v822
                  %v824 = vld [vmem:[%s810 + $0x54] sm:$0xff]
                  %825 = vst [vmem:[%s811 + $0x30] sm:$0xff] %v824
                  %v826 = vld [vmem:[%s810 + $0x5c] sm:$0xff]
                  %827 = vst [vmem:[%s811 + $0x38] sm:$0xff] %v826
                  %v828 = vld [vmem:[%s810 + $0x70] sm:$0xff]
                  %829 = vst [vmem:[%s811 + $0x40] sm:$0xff] %v828
                  %v830 = vld [vmem:[%s810 + $0x78] sm:$0xff]
                  %831 = vst [vmem:[%s811 + $0x48] sm:$0xff] %v830
                  %v832 = vld [vmem:[%s810 + $0x8c] sm:$0xff]
                  %833 = vst [vmem:[%s811 + $0x50] sm:$0xff] %v832
                  %v834 = vld [vmem:[%s810 + $0x94] sm:$0xff]
                  %835 = vst [vmem:[%s811 + $0x58] sm:$0xff] %v834
                  %v836 = vld [vmem:[%s810 + $0xa8] sm:$0xff]
                  %837 = vst [vmem:[%s811 + $0x60] sm:$0xff] %v836
                  %v838 = vld [vmem:[%s810 + $0xb0] sm:$0xff]
                  %839 = vst [vmem:[%s811 + $0x68] sm:$0xff] %v838
                  %v840 = vld [vmem:[%s810 + $0xc4] sm:$0xff]
                  %841 = vst [vmem:[%s811 + $0x70] sm:$0xff] %v840
                  %v842 = vld [vmem:[%s810 + $0xcc] sm:$0xff]
                  %843 = vst [vmem:[%s811 + $0x78] sm:$0xff] %v842
                  %v844 = vld [vmem:[%s810 + $0xe0] sm:$0xff]
                  %845 = vst [vmem:[%s811 + $0x80] sm:$0xff] %v844
                  %v846 = vld [vmem:[%s810 + $0xe8] sm:$0xff]
                  %847 = vst [vmem:[%s811 + $0x88] sm:$0xff] %v846
                  %v848 = vld [vmem:[%s810 + $0xfc] sm:$0xff]
                  %849 = vst [vmem:[%s811 + $0x90] sm:$0xff] %v848
                  %v850 = vld [vmem:[%s810 + $0x104] sm:$0xff]
                  %851 = vst [vmem:[%s811 + $0x98] sm:$0xff] %v850
                  %v852 = vld [vmem:[%s810 + $0x118] sm:$0xff]
                  %853 = vst [vmem:[%s811 + $0xa0] sm:$0xff] %v852
                  %v854 = vld [vmem:[%s810 + $0x120] sm:$0xff]
                  %855 = vst [vmem:[%s811 + $0xa8] sm:$0xff] %v854
                  %v856 = vld [vmem:[%s810 + $0x134] sm:$0xff]
                  %857 = vst [vmem:[%s811 + $0xb0] sm:$0xff] %v856
                  %v858 = vld [vmem:[%s810 + $0x13c] sm:$0xff]
                  %859 = vst [vmem:[%s811 + $0xb8] sm:$0xff] %v858
                  %v860 = vld [vmem:[%s810 + $0x150] sm:$0xff]
                  %861 = vst [vmem:[%s811 + $0xc0] sm:$0xff] %v860
                  %v862 = vld [vmem:[%s810 + $0x158] sm:$0xff]
                  %863 = vst [vmem:[%s811 + $0xc8] sm:$0xff] %v862
                  %v864 = vld [vmem:[%s810 + $0x16c] sm:$0xff]
                  %865 = vst [vmem:[%s811 + $0xd0] sm:$0xff] %v864
                  %v866 = vld [vmem:[%s810 + $0x174] sm:$0xff]
                  %867 = vst [vmem:[%s811 + $0xd8] sm:$0xff] %v866
                  %v868 = vld [vmem:[%s810 + $0x188] sm:$0xff]
                  %869 = vst [vmem:[%s811 + $0xe0] sm:$0xff] %v868
                  %v870 = vld [vmem:[%s810 + $0x190] sm:$0xff]
                  %871 = vst [vmem:[%s811 + $0xe8] sm:$0xff] %v870
                  %v872 = vld [vmem:[%s810 + $0x1a4] sm:$0xff]
                  %873 = vst [vmem:[%s811 + $0xf0] sm:$0xff] %v872
                  %v874 = vld [vmem:[%s810 + $0x1ac] sm:$0xff]
                  %875 = vst [vmem:[%s811 + $0xf8] sm:$0xff] %v874
                  %v876 = vld [vmem:[%s810 + $0x1c0] sm:$0xff]
                  %877 = vst [vmem:[%s811 + $0x100] sm:$0xff] %v876
                  %v878 = vld [vmem:[%s810 + $0x1c8] sm:$0xff]
                  %879 = vst [vmem:[%s811 + $0x108] sm:$0xff] %v878
                  %v880 = vld [vmem:[%s810 + $0x1dc] sm:$0xff]
                  %881 = vst [vmem:[%s811 + $0x110] sm:$0xff] %v880
                  %v882 = vld [vmem:[%s810 + $0x1e4] sm:$0xff]
                  %883 = vst [vmem:[%s811 + $0x118] sm:$0xff] %v882
                  %v884 = vld [vmem:[%s810 + $0x1f8] sm:$0xff]
                  %885 = vst [vmem:[%s811 + $0x120] sm:$0xff] %v884
                  %v886 = vld [vmem:[%s810 + $0x200] sm:$0xff]
                  %887 = vst [vmem:[%s811 + $0x128] sm:$0xff] %v886
                  %v888 = vld [vmem:[%s810 + $0x214] sm:$0xff]
                  %889 = vst [vmem:[%s811 + $0x130] sm:$0xff] %v888
                  %v890 = vld [vmem:[%s810 + $0x21c] sm:$0xff]
                  %891 = vst [vmem:[%s811 + $0x138] sm:$0xff] %v890
                  %v892 = vld [vmem:[%s810 + $0x230] sm:$0xff]
                  %893 = vst [vmem:[%s811 + $0x140] sm:$0xff] %v892
                  %v894 = vld [vmem:[%s810 + $0x238] sm:$0xff]
                  %895 = vst [vmem:[%s811 + $0x148] sm:$0xff] %v894
                  %v896 = vld [vmem:[%s810 + $0x24c] sm:$0xff]
                  %897 = vst [vmem:[%s811 + $0x150] sm:$0xff] %v896
                  %v898 = vld [vmem:[%s810 + $0x254] sm:$0xff]
                  %899 = vst [vmem:[%s811 + $0x158] sm:$0xff] %v898
                  %v900 = vld [vmem:[%s810 + $0x268] sm:$0xff]
                  %901 = vst [vmem:[%s811 + $0x160] sm:$0xff] %v900
                  %v902 = vld [vmem:[%s810 + $0x270] sm:$0xff]
                  %903 = vst [vmem:[%s811 + $0x168] sm:$0xff] %v902
                  %v904 = vld [vmem:[%s810 + $0x284] sm:$0xff]
                  %905 = vst [vmem:[%s811 + $0x170] sm:$0xff] %v904
                  %v906 = vld [vmem:[%s810 + $0x28c] sm:$0xff]
                  %907 = vst [vmem:[%s811 + $0x178] sm:$0xff] %v906
                  %v908 = vld [vmem:[%s810 + $0x2a0] sm:$0xff]
                  %909 = vst [vmem:[%s811 + $0x180] sm:$0xff] %v908
                  %v910 = vld [vmem:[%s810 + $0x2a8] sm:$0xff]
                  %911 = vst [vmem:[%s811 + $0x188] sm:$0xff] %v910
                  %v912 = vld [vmem:[%s810 + $0x2bc] sm:$0xff]
                  %913 = vst [vmem:[%s811 + $0x190] sm:$0xff] %v912
                  %v914 = vld [vmem:[%s810 + $0x2c4] sm:$0xff]
                  %915 = vst [vmem:[%s811 + $0x198] sm:$0xff] %v914
                  %v916 = vld [vmem:[%s810 + $0x2d8] sm:$0xff]
                  %917 = vst [vmem:[%s811 + $0x1a0] sm:$0xff] %v916
                  %v918 = vld [vmem:[%s810 + $0x2e0] sm:$0xff]
                  %919 = vst [vmem:[%s811 + $0x1a8] sm:$0xff] %v918
                  %v920 = vld [vmem:[%s810 + $0x2f4] sm:$0xff]
                  %921 = vst [vmem:[%s811 + $0x1b0] sm:$0xff] %v920
                  %v922 = vld [vmem:[%s810 + $0x2fc] sm:$0xff]
                  %923 = vst [vmem:[%s811 + $0x1b8] sm:$0xff] %v922
                  %v924 = vld [vmem:[%s810 + $0x310] sm:$0xff]
                  %925 = vst [vmem:[%s811 + $0x1c0] sm:$0xff] %v924
                  %v926 = vld [vmem:[%s810 + $0x318] sm:$0xff]
                  %927 = vst [vmem:[%s811 + $0x1c8] sm:$0xff] %v926
                  %v928 = vld [vmem:[%s810 + $0x32c] sm:$0xff]
                  %929 = vst [vmem:[%s811 + $0x1d0] sm:$0xff] %v928
                  %v930 = vld [vmem:[%s810 + $0x334] sm:$0xff]
                  %931 = vst [vmem:[%s811 + $0x1d8] sm:$0xff] %v930
                  %v932 = vld [vmem:[%s810 + $0x348] sm:$0xff]
                  %933 = vst [vmem:[%s811 + $0x1e0] sm:$0xff] %v932
                  %v934 = vld [vmem:[%s810 + $0x350] sm:$0xff]
                  %935 = vst [vmem:[%s811 + $0x1e8] sm:$0xff] %v934
                  %v936 = vld [vmem:[%s810 + $0x364] sm:$0xff]
                  %937 = vst [vmem:[%s811 + $0x1f0] sm:$0xff] %v936
                  %v938 = vld [vmem:[%s810 + $0x36c] sm:$0xff]
                  %939 = vst [vmem:[%s811 + $0x1f8] sm:$0xff] %v938
                  %v940 = vld [vmem:[%s810 + $0x380] sm:$0xff]
                  %941 = vst [vmem:[%s811 + $0x200] sm:$0xff] %v940
                  %v942 = vld [vmem:[%s810 + $0x388] sm:$0xff]
                  %943 = vst [vmem:[%s811 + $0x208] sm:$0xff] %v942
                  %v944 = vld [vmem:[%s810 + $0x39c] sm:$0xff]
                  %945 = vst [vmem:[%s811 + $0x210] sm:$0xff] %v944
                  %v946 = vld [vmem:[%s810 + $0x3a4] sm:$0xff]
                  %947 = vst [vmem:[%s811 + $0x218] sm:$0xff] %v946
                  %v948 = vld [vmem:[%s810 + $0x3b8] sm:$0xff]
                  %949 = vst [vmem:[%s811 + $0x220] sm:$0xff] %v948
                  %v950 = vld [vmem:[%s810 + $0x3c0] sm:$0xff]
                  %951 = vst [vmem:[%s811 + $0x228] sm:$0xff] %v950
                  %v952 = vld [vmem:[%s810 + $0x3d4] sm:$0xff]
                  %953 = vst [vmem:[%s811 + $0x230] sm:$0xff] %v952
                  %v954 = vld [vmem:[%s810 + $0x3dc] sm:$0xff]
                  %955 = vst [vmem:[%s811 + $0x238] sm:$0xff] %v954
                  %v956 = vld [vmem:[%s810 + $0x3f0] sm:$0xff]
                  %957 = vst [vmem:[%s811 + $0x240] sm:$0xff] %v956
                  %v958 = vld [vmem:[%s810 + $0x3f8] sm:$0xff]
                  %959 = vst [vmem:[%s811 + $0x248] sm:$0xff] %v958
                  %v960 = vld [vmem:[%s810 + $0x40c] sm:$0xff]
                  %961 = vst [vmem:[%s811 + $0x250] sm:$0xff] %v960
                  %v962 = vld [vmem:[%s810 + $0x414] sm:$0xff]
                  %963 = vst [vmem:[%s811 + $0x258] sm:$0xff] %v962
                  %v964 = vld [vmem:[%s810 + $0x428] sm:$0xff]
                  %965 = vst [vmem:[%s811 + $0x260] sm:$0xff] %v964
                  %v966 = vld [vmem:[%s810 + $0x430] sm:$0xff]
                  %967 = vst [vmem:[%s811 + $0x268] sm:$0xff] %v966
                  %v968 = vld [vmem:[%s810 + $0x444] sm:$0xff]
                  %969 = vst [vmem:[%s811 + $0x270] sm:$0xff] %v968
                  %v970 = vld [vmem:[%s810 + $0x44c] sm:$0xff]
                  %971 = vst [vmem:[%s811 + $0x278] sm:$0xff] %v970
                  %v972 = vld [vmem:[%s810 + $0x460] sm:$0xff]
                  %973 = vst [vmem:[%s811 + $0x280] sm:$0xff] %v972
                  %v974 = vld [vmem:[%s810 + $0x468] sm:$0xff]
                  %975 = vst [vmem:[%s811 + $0x288] sm:$0xff] %v974
                  %v976 = vld [vmem:[%s810 + $0x47c] sm:$0xff]
                  %977 = vst [vmem:[%s811 + $0x290] sm:$0xff] %v976
                  %v978 = vld [vmem:[%s810 + $0x484] sm:$0xff]
                  %979 = vst [vmem:[%s811 + $0x298] sm:$0xff] %v978
                  %v980 = vld [vmem:[%s810 + $0x498] sm:$0xff]
                  %981 = vst [vmem:[%s811 + $0x2a0] sm:$0xff] %v980
                  %v982 = vld [vmem:[%s810 + $0x4a0] sm:$0xff]
                  %983 = vst [vmem:[%s811 + $0x2a8] sm:$0xff] %v982
                  %v984 = vld [vmem:[%s810 + $0x4b4] sm:$0xff]
                  %985 = vst [vmem:[%s811 + $0x2b0] sm:$0xff] %v984
                  %v986 = vld [vmem:[%s810 + $0x4bc] sm:$0xff]
                  %987 = vst [vmem:[%s811 + $0x2b8] sm:$0xff] %v986
                  %v988 = vld [vmem:[%s810 + $0x4d0] sm:$0xff]
                  %989 = vst [vmem:[%s811 + $0x2c0] sm:$0xff] %v988
                  %v990 = vld [vmem:[%s810 + $0x4d8] sm:$0xff]
                  %991 = vst [vmem:[%s811 + $0x2c8] sm:$0xff] %v990
                  %v992 = vld [vmem:[%s810 + $0x4ec] sm:$0xff]
                  %993 = vst [vmem:[%s811 + $0x2d0] sm:$0xff] %v992
                  %v994 = vld [vmem:[%s810 + $0x4f4] sm:$0xff]
                  %995 = vst [vmem:[%s811 + $0x2d8] sm:$0xff] %v994
                  %v996 = vld [vmem:[%s810 + $0x508] sm:$0xff]
                  %997 = vst [vmem:[%s811 + $0x2e0] sm:$0xff] %v996
                  %v998 = vld [vmem:[%s810 + $0x510] sm:$0xff]
                  %999 = vst [vmem:[%s811 + $0x2e8] sm:$0xff] %v998
                  %v1000 = vld [vmem:[%s810 + $0x524] sm:$0xff]
                  %1001 = vst [vmem:[%s811 + $0x2f0] sm:$0xff] %v1000
                  %v1002 = vld [vmem:[%s810 + $0x52c] sm:$0xff]
                  %1003 = vst [vmem:[%s811 + $0x2f8] sm:$0xff] %v1002
                  %v1004 = vld [vmem:[%s810 + $0x540] sm:$0xff]
                  %1005 = vst [vmem:[%s811 + $0x300] sm:$0xff] %v1004
                  %v1006 = vld [vmem:[%s810 + $0x548] sm:$0xff]
                  %1007 = vst [vmem:[%s811 + $0x308] sm:$0xff] %v1006
                  %v1008 = vld [vmem:[%s810 + $0x55c] sm:$0xff]
                  %1009 = vst [vmem:[%s811 + $0x310] sm:$0xff] %v1008
                  %v1010 = vld [vmem:[%s810 + $0x564] sm:$0xff]
                  %1011 = vst [vmem:[%s811 + $0x318] sm:$0xff] %v1010
                  %v1012 = vld [vmem:[%s810 + $0x578] sm:$0xff]
                  %1013 = vst [vmem:[%s811 + $0x320] sm:$0xff] %v1012
                  %v1014 = vld [vmem:[%s810 + $0x580] sm:$0xff]
                  %1015 = vst [vmem:[%s811 + $0x328] sm:$0xff] %v1014
                  %v1016 = vld [vmem:[%s810 + $0x594] sm:$0xff]
                  %1017 = vst [vmem:[%s811 + $0x330] sm:$0xff] %v1016
                  %v1018 = vld [vmem:[%s810 + $0x59c] sm:$0xff]
                  %1019 = vst [vmem:[%s811 + $0x338] sm:$0xff] %v1018
                  %v1020 = vld [vmem:[%s810 + $0x5b0] sm:$0xff]
                  %1021 = vst [vmem:[%s811 + $0x340] sm:$0xff] %v1020
                  %v1022 = vld [vmem:[%s810 + $0x5b8] sm:$0xff]
                  %1023 = vst [vmem:[%s811 + $0x348] sm:$0xff] %v1022
                  %v1024 = vld [vmem:[%s810 + $0x5cc] sm:$0xff]
                  %1025 = vst [vmem:[%s811 + $0x350] sm:$0xff] %v1024
                  %v1026 = vld [vmem:[%s810 + $0x5d4] sm:$0xff]
                  %1027 = vst [vmem:[%s811 + $0x358] sm:$0xff] %v1026
                  %v1028 = vld [vmem:[%s810 + $0x5e8] sm:$0xff]
                  %1029 = vst [vmem:[%s811 + $0x360] sm:$0xff] %v1028
                  %v1030 = vld [vmem:[%s810 + $0x5f0] sm:$0xff]
                  %1031 = vst [vmem:[%s811 + $0x368] sm:$0xff] %v1030
                  %v1032 = vld [vmem:[%s810 + $0x604] sm:$0xff]
                  %1033 = vst [vmem:[%s811 + $0x370] sm:$0xff] %v1032
                  %v1034 = vld [vmem:[%s810 + $0x60c] sm:$0xff]
                  %1035 = vst [vmem:[%s811 + $0x378] sm:$0xff] %v1034
                  %v1036 = vld [vmem:[%s810 + $0x620] sm:$0xff]
                  %1037 = vst [vmem:[%s811 + $0x380] sm:$0xff] %v1036
                  %v1038 = vld [vmem:[%s810 + $0x628] sm:$0xff]
                  %1039 = vst [vmem:[%s811 + $0x388] sm:$0xff] %v1038
                  %v1040 = vld [vmem:[%s810 + $0x63c] sm:$0xff]
                  %1041 = vst [vmem:[%s811 + $0x390] sm:$0xff] %v1040
                  %v1042 = vld [vmem:[%s810 + $0x644] sm:$0xff]
                  %1043 = vst [vmem:[%s811 + $0x398] sm:$0xff] %v1042
                  %v1044 = vld [vmem:[%s810 + $0x658] sm:$0xff]
                  %1045 = vst [vmem:[%s811 + $0x3a0] sm:$0xff] %v1044
                  %v1046 = vld [vmem:[%s810 + $0x660] sm:$0xff]
                  %1047 = vst [vmem:[%s811 + $0x3a8] sm:$0xff] %v1046
                  %v1048 = vld [vmem:[%s810 + $0x674] sm:$0xff]
                  %1049 = vst [vmem:[%s811 + $0x3b0] sm:$0xff] %v1048
                  %v1050 = vld [vmem:[%s810 + $0x67c] sm:$0xff]
                  %1051 = vst [vmem:[%s811 + $0x3b8] sm:$0xff] %v1050
                  %s1052 = sadd.s32 1, %s809
                  %p1053 = scmp.ge.s32.totalorder %s1052, %s800
                  %s1054 = scalar_select %p1053, 0, %s1052
                  %s1055 = smul.u32 %s1054, 16
                  %s1056 = smul.u32 %s1054, 16
                  %s1057 = scalar_lea.vmem %s237, %s1055
                  %s1058 = scalar_lea.vmem %s229, %s1056 [#allocation6]
                $region90: #{fused_se_conv_bn.1} parent=84 // loop_footer
                  %s806 = sadd.s32 %s804, 1
                $region91: #{fused_se_conv_bn.1} parent=84 // loop_footer_branch
                  %803 = sbr.rel target = $region87
                $region92: #{fused_se_conv_bn.1} parent=84 // loop_exit
                  _
                %s1059 = sshrl.u32 %s799, 1
                %s1060 = sand.u32 %s799, 1
                %s1061 = smul.u32 %s1059, 2
                %s1062 = smul.u32 128, %s1061
                %s1063 = sshra.s32 %s1062, 4
                %s1064 = scalar_lea.vmem %s237, %s1063
                %s1065 = smul.u32 128, %s1061
                %s1066 = sshra.s32 %s1065, 4
                %s1067 = scalar_lea.vmem %s229, %s1066 [#allocation6]
                // While loop
                $region93: #{fused_se_conv_bn.1} parent=84 // loop_pre_header
                  _
                $region94: #{fused_se_conv_bn.1} parent=84 // loop_header
                  %s1071 = sphi 0, %s1073
                  %p1072 = scmp.ge.s32.totalorder %s1071, %s1060
                  %s1076 = sphi 0, %s1201
                  %s1077 = sphi %s1064, %s1204
                  %s1078 = sphi %s1067, %s1205
                $region95: #{fused_se_conv_bn.1} parent=84 // loop_header_branch
                  %1075 = sbr.rel (%p1072) target = $region99
                $region96: #{fused_se_conv_bn.1} parent=84 // loop_body
                  %v1079 = vld [vmem:[%s1077] sm:$0xff]
                  %1080 = vst [vmem:[%s1078] sm:$0xff] %v1079
                  %v1081 = vld [vmem:[%s1077 + $0x1c] sm:$0xff]
                  %1082 = vst [vmem:[%s1078 + $0x10] sm:$0xff] %v1081
                  %v1083 = vld [vmem:[%s1077 + $0x38] sm:$0xff]
                  %1084 = vst [vmem:[%s1078 + $0x20] sm:$0xff] %v1083
                  %v1085 = vld [vmem:[%s1077 + $0x54] sm:$0xff]
                  %1086 = vst [vmem:[%s1078 + $0x30] sm:$0xff] %v1085
                  %v1087 = vld [vmem:[%s1077 + $0x70] sm:$0xff]
                  %1088 = vst [vmem:[%s1078 + $0x40] sm:$0xff] %v1087
                  %v1089 = vld [vmem:[%s1077 + $0x8c] sm:$0xff]
                  %1090 = vst [vmem:[%s1078 + $0x50] sm:$0xff] %v1089
                  %v1091 = vld [vmem:[%s1077 + $0xa8] sm:$0xff]
                  %1092 = vst [vmem:[%s1078 + $0x60] sm:$0xff] %v1091
                  %v1093 = vld [vmem:[%s1077 + $0xc4] sm:$0xff]
                  %1094 = vst [vmem:[%s1078 + $0x70] sm:$0xff] %v1093
                  %v1095 = vld [vmem:[%s1077 + $0xe0] sm:$0xff]
                  %1096 = vst [vmem:[%s1078 + $0x80] sm:$0xff] %v1095
                  %v1097 = vld [vmem:[%s1077 + $0xfc] sm:$0xff]
                  %1098 = vst [vmem:[%s1078 + $0x90] sm:$0xff] %v1097
                  %v1099 = vld [vmem:[%s1077 + $0x118] sm:$0xff]
                  %1100 = vst [vmem:[%s1078 + $0xa0] sm:$0xff] %v1099
                  %v1101 = vld [vmem:[%s1077 + $0x134] sm:$0xff]
                  %1102 = vst [vmem:[%s1078 + $0xb0] sm:$0xff] %v1101
                  %v1103 = vld [vmem:[%s1077 + $0x150] sm:$0xff]
                  %1104 = vst [vmem:[%s1078 + $0xc0] sm:$0xff] %v1103
                  %v1105 = vld [vmem:[%s1077 + $0x16c] sm:$0xff]
                  %1106 = vst [vmem:[%s1078 + $0xd0] sm:$0xff] %v1105
                  %v1107 = vld [vmem:[%s1077 + $0x188] sm:$0xff]
                  %1108 = vst [vmem:[%s1078 + $0xe0] sm:$0xff] %v1107
                  %v1109 = vld [vmem:[%s1077 + $0x1a4] sm:$0xff]
                  %1110 = vst [vmem:[%s1078 + $0xf0] sm:$0xff] %v1109
                  %v1111 = vld [vmem:[%s1077 + $0x1c0] sm:$0xff]
                  %1112 = vst [vmem:[%s1078 + $0x100] sm:$0xff] %v1111
                  %v1113 = vld [vmem:[%s1077 + $0x1dc] sm:$0xff]
                  %1114 = vst [vmem:[%s1078 + $0x110] sm:$0xff] %v1113
                  %v1115 = vld [vmem:[%s1077 + $0x1f8] sm:$0xff]
                  %1116 = vst [vmem:[%s1078 + $0x120] sm:$0xff] %v1115
                  %v1117 = vld [vmem:[%s1077 + $0x214] sm:$0xff]
                  %1118 = vst [vmem:[%s1078 + $0x130] sm:$0xff] %v1117
                  %v1119 = vld [vmem:[%s1077 + $0x230] sm:$0xff]
                  %1120 = vst [vmem:[%s1078 + $0x140] sm:$0xff] %v1119
                  %v1121 = vld [vmem:[%s1077 + $0x24c] sm:$0xff]
                  %1122 = vst [vmem:[%s1078 + $0x150] sm:$0xff] %v1121
                  %v1123 = vld [vmem:[%s1077 + $0x268] sm:$0xff]
                  %1124 = vst [vmem:[%s1078 + $0x160] sm:$0xff] %v1123
                  %v1125 = vld [vmem:[%s1077 + $0x284] sm:$0xff]
                  %1126 = vst [vmem:[%s1078 + $0x170] sm:$0xff] %v1125
                  %v1127 = vld [vmem:[%s1077 + $0x2a0] sm:$0xff]
                  %1128 = vst [vmem:[%s1078 + $0x180] sm:$0xff] %v1127
                  %v1129 = vld [vmem:[%s1077 + $0x2bc] sm:$0xff]
                  %1130 = vst [vmem:[%s1078 + $0x190] sm:$0xff] %v1129
                  %v1131 = vld [vmem:[%s1077 + $0x2d8] sm:$0xff]
                  %1132 = vst [vmem:[%s1078 + $0x1a0] sm:$0xff] %v1131
                  %v1133 = vld [vmem:[%s1077 + $0x2f4] sm:$0xff]
                  %1134 = vst [vmem:[%s1078 + $0x1b0] sm:$0xff] %v1133
                  %v1135 = vld [vmem:[%s1077 + $0x310] sm:$0xff]
                  %1136 = vst [vmem:[%s1078 + $0x1c0] sm:$0xff] %v1135
                  %v1137 = vld [vmem:[%s1077 + $0x32c] sm:$0xff]
                  %1138 = vst [vmem:[%s1078 + $0x1d0] sm:$0xff] %v1137
                  %v1139 = vld [vmem:[%s1077 + $0x348] sm:$0xff]
                  %1140 = vst [vmem:[%s1078 + $0x1e0] sm:$0xff] %v1139
                  %v1141 = vld [vmem:[%s1077 + $0x364] sm:$0xff]
                  %1142 = vst [vmem:[%s1078 + $0x1f0] sm:$0xff] %v1141
                  %v1143 = vld [vmem:[%s1077 + $0x380] sm:$0xff]
                  %1144 = vst [vmem:[%s1078 + $0x200] sm:$0xff] %v1143
                  %v1145 = vld [vmem:[%s1077 + $0x39c] sm:$0xff]
                  %1146 = vst [vmem:[%s1078 + $0x210] sm:$0xff] %v1145
                  %v1147 = vld [vmem:[%s1077 + $0x3b8] sm:$0xff]
                  %1148 = vst [vmem:[%s1078 + $0x220] sm:$0xff] %v1147
                  %v1149 = vld [vmem:[%s1077 + $0x3d4] sm:$0xff]
                  %1150 = vst [vmem:[%s1078 + $0x230] sm:$0xff] %v1149
                  %v1151 = vld [vmem:[%s1077 + $0x3f0] sm:$0xff]
                  %1152 = vst [vmem:[%s1078 + $0x240] sm:$0xff] %v1151
                  %v1153 = vld [vmem:[%s1077 + $0x40c] sm:$0xff]
                  %1154 = vst [vmem:[%s1078 + $0x250] sm:$0xff] %v1153
                  %v1155 = vld [vmem:[%s1077 + $0x428] sm:$0xff]
                  %1156 = vst [vmem:[%s1078 + $0x260] sm:$0xff] %v1155
                  %v1157 = vld [vmem:[%s1077 + $0x444] sm:$0xff]
                  %1158 = vst [vmem:[%s1078 + $0x270] sm:$0xff] %v1157
                  %v1159 = vld [vmem:[%s1077 + $0x460] sm:$0xff]
                  %1160 = vst [vmem:[%s1078 + $0x280] sm:$0xff] %v1159
                  %v1161 = vld [vmem:[%s1077 + $0x47c] sm:$0xff]
                  %1162 = vst [vmem:[%s1078 + $0x290] sm:$0xff] %v1161
                  %v1163 = vld [vmem:[%s1077 + $0x498] sm:$0xff]
                  %1164 = vst [vmem:[%s1078 + $0x2a0] sm:$0xff] %v1163
                  %v1165 = vld [vmem:[%s1077 + $0x4b4] sm:$0xff]
                  %1166 = vst [vmem:[%s1078 + $0x2b0] sm:$0xff] %v1165
                  %v1167 = vld [vmem:[%s1077 + $0x4d0] sm:$0xff]
                  %1168 = vst [vmem:[%s1078 + $0x2c0] sm:$0xff] %v1167
                  %v1169 = vld [vmem:[%s1077 + $0x4ec] sm:$0xff]
                  %1170 = vst [vmem:[%s1078 + $0x2d0] sm:$0xff] %v1169
                  %v1171 = vld [vmem:[%s1077 + $0x508] sm:$0xff]
                  %1172 = vst [vmem:[%s1078 + $0x2e0] sm:$0xff] %v1171
                  %v1173 = vld [vmem:[%s1077 + $0x524] sm:$0xff]
                  %1174 = vst [vmem:[%s1078 + $0x2f0] sm:$0xff] %v1173
                  %v1175 = vld [vmem:[%s1077 + $0x540] sm:$0xff]
                  %1176 = vst [vmem:[%s1078 + $0x300] sm:$0xff] %v1175
                  %v1177 = vld [vmem:[%s1077 + $0x55c] sm:$0xff]
                  %1178 = vst [vmem:[%s1078 + $0x310] sm:$0xff] %v1177
                  %v1179 = vld [vmem:[%s1077 + $0x578] sm:$0xff]
                  %1180 = vst [vmem:[%s1078 + $0x320] sm:$0xff] %v1179
                  %v1181 = vld [vmem:[%s1077 + $0x594] sm:$0xff]
                  %1182 = vst [vmem:[%s1078 + $0x330] sm:$0xff] %v1181
                  %v1183 = vld [vmem:[%s1077 + $0x5b0] sm:$0xff]
                  %1184 = vst [vmem:[%s1078 + $0x340] sm:$0xff] %v1183
                  %v1185 = vld [vmem:[%s1077 + $0x5cc] sm:$0xff]
                  %1186 = vst [vmem:[%s1078 + $0x350] sm:$0xff] %v1185
                  %v1187 = vld [vmem:[%s1077 + $0x5e8] sm:$0xff]
                  %1188 = vst [vmem:[%s1078 + $0x360] sm:$0xff] %v1187
                  %v1189 = vld [vmem:[%s1077 + $0x604] sm:$0xff]
                  %1190 = vst [vmem:[%s1078 + $0x370] sm:$0xff] %v1189
                  %v1191 = vld [vmem:[%s1077 + $0x620] sm:$0xff]
                  %1192 = vst [vmem:[%s1078 + $0x380] sm:$0xff] %v1191
                  %v1193 = vld [vmem:[%s1077 + $0x63c] sm:$0xff]
                  %1194 = vst [vmem:[%s1078 + $0x390] sm:$0xff] %v1193
                  %v1195 = vld [vmem:[%s1077 + $0x658] sm:$0xff]
                  %1196 = vst [vmem:[%s1078 + $0x3a0] sm:$0xff] %v1195
                  %v1197 = vld [vmem:[%s1077 + $0x674] sm:$0xff]
                  %1198 = vst [vmem:[%s1078 + $0x3b0] sm:$0xff] %v1197
                  %s1199 = sadd.s32 1, %s1076
                  %p1200 = scmp.ge.s32.totalorder %s1199, %s1060
                  %s1201 = scalar_select %p1200, 0, %s1199
                  %s1202 = smul.u32 %s1201, 8
                  %s1203 = smul.u32 %s1201, 8
                  %s1204 = scalar_lea.vmem %s1064, %s1202
                  %s1205 = scalar_lea.vmem %s1067, %s1203 [#allocation6]
                $region97: #{fused_se_conv_bn.1} parent=84 // loop_footer
                  %s1073 = sadd.s32 %s1071, 1
                $region98: #{fused_se_conv_bn.1} parent=84 // loop_footer_branch
                  %1070 = sbr.rel target = $region94
                $region99: #{fused_se_conv_bn.1} parent=84 // loop_exit
                  _
                %s1206 = sshll.u32 1, %s794
                %s1207 = ssub.s32 %s1206, 1
                loop: start=0, step=1, limit=1
                $region100: #{fused_se_conv_bn.1} parent=84 // loop_pre_header
                  _
                $region101: #{fused_se_conv_bn.1} parent=84 // loop_header
                  %s1209 = sphi 0, %s1213
                  %p1210 = scmp.ge.s32.totalorder %s1209, 1
                  %s1214 = sphi %s796, %s796
                  %s1215 = sphi %s798, %s798
                $region102: #{fused_se_conv_bn.1} parent=84 // loop_header_branch
                  %1212 = sbr.rel (%p1210) target = $region106
                $region103: #{fused_se_conv_bn.1} parent=84 // loop_body
                  %v1216 = vld [vmem:[%s1214] sm:%s1207]
                  %1217 = vst [vmem:[%s1215] sm:%s1207] %v1216
                  %v1218 = vld [vmem:[%s1214 + $0x1c] sm:%s1207]
                  %1219 = vst [vmem:[%s1215 + $0x10] sm:%s1207] %v1218
                  %v1220 = vld [vmem:[%s1214 + $0x38] sm:%s1207]
                  %1221 = vst [vmem:[%s1215 + $0x20] sm:%s1207] %v1220
                  %v1222 = vld [vmem:[%s1214 + $0x54] sm:%s1207]
                  %1223 = vst [vmem:[%s1215 + $0x30] sm:%s1207] %v1222
                  %v1224 = vld [vmem:[%s1214 + $0x70] sm:%s1207]
                  %1225 = vst [vmem:[%s1215 + $0x40] sm:%s1207] %v1224
                  %v1226 = vld [vmem:[%s1214 + $0x8c] sm:%s1207]
                  %1227 = vst [vmem:[%s1215 + $0x50] sm:%s1207] %v1226
                  %v1228 = vld [vmem:[%s1214 + $0xa8] sm:%s1207]
                  %1229 = vst [vmem:[%s1215 + $0x60] sm:%s1207] %v1228
                  %v1230 = vld [vmem:[%s1214 + $0xc4] sm:%s1207]
                  %1231 = vst [vmem:[%s1215 + $0x70] sm:%s1207] %v1230
                  %v1232 = vld [vmem:[%s1214 + $0xe0] sm:%s1207]
                  %1233 = vst [vmem:[%s1215 + $0x80] sm:%s1207] %v1232
                  %v1234 = vld [vmem:[%s1214 + $0xfc] sm:%s1207]
                  %1235 = vst [vmem:[%s1215 + $0x90] sm:%s1207] %v1234
                  %v1236 = vld [vmem:[%s1214 + $0x118] sm:%s1207]
                  %1237 = vst [vmem:[%s1215 + $0xa0] sm:%s1207] %v1236
                  %v1238 = vld [vmem:[%s1214 + $0x134] sm:%s1207]
                  %1239 = vst [vmem:[%s1215 + $0xb0] sm:%s1207] %v1238
                  %v1240 = vld [vmem:[%s1214 + $0x150] sm:%s1207]
                  %1241 = vst [vmem:[%s1215 + $0xc0] sm:%s1207] %v1240
                  %v1242 = vld [vmem:[%s1214 + $0x16c] sm:%s1207]
                  %1243 = vst [vmem:[%s1215 + $0xd0] sm:%s1207] %v1242
                  %v1244 = vld [vmem:[%s1214 + $0x188] sm:%s1207]
                  %1245 = vst [vmem:[%s1215 + $0xe0] sm:%s1207] %v1244
                  %v1246 = vld [vmem:[%s1214 + $0x1a4] sm:%s1207]
                  %1247 = vst [vmem:[%s1215 + $0xf0] sm:%s1207] %v1246
                  %v1248 = vld [vmem:[%s1214 + $0x1c0] sm:%s1207]
                  %1249 = vst [vmem:[%s1215 + $0x100] sm:%s1207] %v1248
                  %v1250 = vld [vmem:[%s1214 + $0x1dc] sm:%s1207]
                  %1251 = vst [vmem:[%s1215 + $0x110] sm:%s1207] %v1250
                  %v1252 = vld [vmem:[%s1214 + $0x1f8] sm:%s1207]
                  %1253 = vst [vmem:[%s1215 + $0x120] sm:%s1207] %v1252
                  %v1254 = vld [vmem:[%s1214 + $0x214] sm:%s1207]
                  %1255 = vst [vmem:[%s1215 + $0x130] sm:%s1207] %v1254
                  %v1256 = vld [vmem:[%s1214 + $0x230] sm:%s1207]
                  %1257 = vst [vmem:[%s1215 + $0x140] sm:%s1207] %v1256
                  %v1258 = vld [vmem:[%s1214 + $0x24c] sm:%s1207]
                  %1259 = vst [vmem:[%s1215 + $0x150] sm:%s1207] %v1258
                  %v1260 = vld [vmem:[%s1214 + $0x268] sm:%s1207]
                  %1261 = vst [vmem:[%s1215 + $0x160] sm:%s1207] %v1260
                  %v1262 = vld [vmem:[%s1214 + $0x284] sm:%s1207]
                  %1263 = vst [vmem:[%s1215 + $0x170] sm:%s1207] %v1262
                  %v1264 = vld [vmem:[%s1214 + $0x2a0] sm:%s1207]
                  %1265 = vst [vmem:[%s1215 + $0x180] sm:%s1207] %v1264
                  %v1266 = vld [vmem:[%s1214 + $0x2bc] sm:%s1207]
                  %1267 = vst [vmem:[%s1215 + $0x190] sm:%s1207] %v1266
                  %v1268 = vld [vmem:[%s1214 + $0x2d8] sm:%s1207]
                  %1269 = vst [vmem:[%s1215 + $0x1a0] sm:%s1207] %v1268
                  %v1270 = vld [vmem:[%s1214 + $0x2f4] sm:%s1207]
                  %1271 = vst [vmem:[%s1215 + $0x1b0] sm:%s1207] %v1270
                  %v1272 = vld [vmem:[%s1214 + $0x310] sm:%s1207]
                  %1273 = vst [vmem:[%s1215 + $0x1c0] sm:%s1207] %v1272
                  %v1274 = vld [vmem:[%s1214 + $0x32c] sm:%s1207]
                  %1275 = vst [vmem:[%s1215 + $0x1d0] sm:%s1207] %v1274
                  %v1276 = vld [vmem:[%s1214 + $0x348] sm:%s1207]
                  %1277 = vst [vmem:[%s1215 + $0x1e0] sm:%s1207] %v1276
                  %v1278 = vld [vmem:[%s1214 + $0x364] sm:%s1207]
                  %1279 = vst [vmem:[%s1215 + $0x1f0] sm:%s1207] %v1278
                  %v1280 = vld [vmem:[%s1214 + $0x380] sm:%s1207]
                  %1281 = vst [vmem:[%s1215 + $0x200] sm:%s1207] %v1280
                  %v1282 = vld [vmem:[%s1214 + $0x39c] sm:%s1207]
                  %1283 = vst [vmem:[%s1215 + $0x210] sm:%s1207] %v1282
                  %v1284 = vld [vmem:[%s1214 + $0x3b8] sm:%s1207]
                  %1285 = vst [vmem:[%s1215 + $0x220] sm:%s1207] %v1284
                  %v1286 = vld [vmem:[%s1214 + $0x3d4] sm:%s1207]
                  %1287 = vst [vmem:[%s1215 + $0x230] sm:%s1207] %v1286
                  %v1288 = vld [vmem:[%s1214 + $0x3f0] sm:%s1207]
                  %1289 = vst [vmem:[%s1215 + $0x240] sm:%s1207] %v1288
                  %v1290 = vld [vmem:[%s1214 + $0x40c] sm:%s1207]
                  %1291 = vst [vmem:[%s1215 + $0x250] sm:%s1207] %v1290
                  %v1292 = vld [vmem:[%s1214 + $0x428] sm:%s1207]
                  %1293 = vst [vmem:[%s1215 + $0x260] sm:%s1207] %v1292
                  %v1294 = vld [vmem:[%s1214 + $0x444] sm:%s1207]
                  %1295 = vst [vmem:[%s1215 + $0x270] sm:%s1207] %v1294
                  %v1296 = vld [vmem:[%s1214 + $0x460] sm:%s1207]
                  %1297 = vst [vmem:[%s1215 + $0x280] sm:%s1207] %v1296
                  %v1298 = vld [vmem:[%s1214 + $0x47c] sm:%s1207]
                  %1299 = vst [vmem:[%s1215 + $0x290] sm:%s1207] %v1298
                  %v1300 = vld [vmem:[%s1214 + $0x498] sm:%s1207]
                  %1301 = vst [vmem:[%s1215 + $0x2a0] sm:%s1207] %v1300
                  %v1302 = vld [vmem:[%s1214 + $0x4b4] sm:%s1207]
                  %1303 = vst [vmem:[%s1215 + $0x2b0] sm:%s1207] %v1302
                  %v1304 = vld [vmem:[%s1214 + $0x4d0] sm:%s1207]
                  %1305 = vst [vmem:[%s1215 + $0x2c0] sm:%s1207] %v1304
                  %v1306 = vld [vmem:[%s1214 + $0x4ec] sm:%s1207]
                  %1307 = vst [vmem:[%s1215 + $0x2d0] sm:%s1207] %v1306
                  %v1308 = vld [vmem:[%s1214 + $0x508] sm:%s1207]
                  %1309 = vst [vmem:[%s1215 + $0x2e0] sm:%s1207] %v1308
                  %v1310 = vld [vmem:[%s1214 + $0x524] sm:%s1207]
                  %1311 = vst [vmem:[%s1215 + $0x2f0] sm:%s1207] %v1310
                  %v1312 = vld [vmem:[%s1214 + $0x540] sm:%s1207]
                  %1313 = vst [vmem:[%s1215 + $0x300] sm:%s1207] %v1312
                  %v1314 = vld [vmem:[%s1214 + $0x55c] sm:%s1207]
                  %1315 = vst [vmem:[%s1215 + $0x310] sm:%s1207] %v1314
                  %v1316 = vld [vmem:[%s1214 + $0x578] sm:%s1207]
                  %1317 = vst [vmem:[%s1215 + $0x320] sm:%s1207] %v1316
                  %v1318 = vld [vmem:[%s1214 + $0x594] sm:%s1207]
                  %1319 = vst [vmem:[%s1215 + $0x330] sm:%s1207] %v1318
                  %v1320 = vld [vmem:[%s1214 + $0x5b0] sm:%s1207]
                  %1321 = vst [vmem:[%s1215 + $0x340] sm:%s1207] %v1320
                  %v1322 = vld [vmem:[%s1214 + $0x5cc] sm:%s1207]
                  %1323 = vst [vmem:[%s1215 + $0x350] sm:%s1207] %v1322
                  %v1324 = vld [vmem:[%s1214 + $0x5e8] sm:%s1207]
                  %1325 = vst [vmem:[%s1215 + $0x360] sm:%s1207] %v1324
                  %v1326 = vld [vmem:[%s1214 + $0x604] sm:%s1207]
                  %1327 = vst [vmem:[%s1215 + $0x370] sm:%s1207] %v1326
                  %v1328 = vld [vmem:[%s1214 + $0x620] sm:%s1207]
                  %1329 = vst [vmem:[%s1215 + $0x380] sm:%s1207] %v1328
                  %v1330 = vld [vmem:[%s1214 + $0x63c] sm:%s1207]
                  %1331 = vst [vmem:[%s1215 + $0x390] sm:%s1207] %v1330
                  %v1332 = vld [vmem:[%s1214 + $0x658] sm:%s1207]
                  %1333 = vst [vmem:[%s1215 + $0x3a0] sm:%s1207] %v1332
                  %v1334 = vld [vmem:[%s1214 + $0x674] sm:%s1207]
                  %1335 = vst [vmem:[%s1215 + $0x3b0] sm:%s1207] %v1334
                $region104: #{fused_se_conv_bn.1} parent=84 // loop_footer
                  %s1213 = sadd.s32 1, %s1209
                $region105: #{fused_se_conv_bn.1} parent=84 // loop_footer_branch
                  %1208 = sbr.rel target = $region101
                $region106: #{fused_se_conv_bn.1} parent=84 // loop_exit
                  _
              $region85: #{fused_se_conv_bn.1} parent=51 // pred_fallthru
                _
            $region52: #{fused_se_conv_bn.1} parent=47 // pred_fallthru
              _
            // Predicated region
            $region53: #{fused_se_conv_bn.1} parent=47 // pred_check
              %p246 = pneg %p242
            $region54: #{fused_se_conv_bn.1} parent=47 // pred_check_branch
              %248 = sbr.rel (%p246) target = $region56
            $region55: #{fused_se_conv_bn.1} parent=47 // pred_region
              %s249 = sshll.u32 1, %s238
              %s250 = ssub.s32 %s249, 1
              loop: start=0, step=1, limit=1
              $region57: #{fused_se_conv_bn.1} parent=55 // loop_pre_header
                _
              $region58: #{fused_se_conv_bn.1} parent=55 // loop_header
                %s252 = sphi 0, %s256
                %p253 = scmp.ge.s32.totalorder %s252, 1
                %s257 = sphi %s237, %s237
                %s258 = sphi %s229, %s229
              $region59: #{fused_se_conv_bn.1} parent=55 // loop_header_branch
                %255 = sbr.rel (%p253) target = $region63
              $region60: #{fused_se_conv_bn.1} parent=55 // loop_body
                %v259 = vld [vmem:[%s257] sm:%s250]
                %260 = vst [vmem:[%s258] sm:%s250] %v259
                %v261 = vld [vmem:[%s257 + $0x1c] sm:%s250]
                %262 = vst [vmem:[%s258 + $0x10] sm:%s250] %v261
                %v263 = vld [vmem:[%s257 + $0x38] sm:%s250]
                %264 = vst [vmem:[%s258 + $0x20] sm:%s250] %v263
                %v265 = vld [vmem:[%s257 + $0x54] sm:%s250]
                %266 = vst [vmem:[%s258 + $0x30] sm:%s250] %v265
                %v267 = vld [vmem:[%s257 + $0x70] sm:%s250]
                %268 = vst [vmem:[%s258 + $0x40] sm:%s250] %v267
                %v269 = vld [vmem:[%s257 + $0x8c] sm:%s250]
                %270 = vst [vmem:[%s258 + $0x50] sm:%s250] %v269
                %v271 = vld [vmem:[%s257 + $0xa8] sm:%s250]
                %272 = vst [vmem:[%s258 + $0x60] sm:%s250] %v271
                %v273 = vld [vmem:[%s257 + $0xc4] sm:%s250]
                %274 = vst [vmem:[%s258 + $0x70] sm:%s250] %v273
                %v275 = vld [vmem:[%s257 + $0xe0] sm:%s250]
                %276 = vst [vmem:[%s258 + $0x80] sm:%s250] %v275
                %v277 = vld [vmem:[%s257 + $0xfc] sm:%s250]
                %278 = vst [vmem:[%s258 + $0x90] sm:%s250] %v277
                %v279 = vld [vmem:[%s257 + $0x118] sm:%s250]
                %280 = vst [vmem:[%s258 + $0xa0] sm:%s250] %v279
                %v281 = vld [vmem:[%s257 + $0x134] sm:%s250]
                %282 = vst [vmem:[%s258 + $0xb0] sm:%s250] %v281
                %v283 = vld [vmem:[%s257 + $0x150] sm:%s250]
                %284 = vst [vmem:[%s258 + $0xc0] sm:%s250] %v283
                %v285 = vld [vmem:[%s257 + $0x16c] sm:%s250]
                %286 = vst [vmem:[%s258 + $0xd0] sm:%s250] %v285
                %v287 = vld [vmem:[%s257 + $0x188] sm:%s250]
                %288 = vst [vmem:[%s258 + $0xe0] sm:%s250] %v287
                %v289 = vld [vmem:[%s257 + $0x1a4] sm:%s250]
                %290 = vst [vmem:[%s258 + $0xf0] sm:%s250] %v289
                %v291 = vld [vmem:[%s257 + $0x1c0] sm:%s250]
                %292 = vst [vmem:[%s258 + $0x100] sm:%s250] %v291
                %v293 = vld [vmem:[%s257 + $0x1dc] sm:%s250]
                %294 = vst [vmem:[%s258 + $0x110] sm:%s250] %v293
                %v295 = vld [vmem:[%s257 + $0x1f8] sm:%s250]
                %296 = vst [vmem:[%s258 + $0x120] sm:%s250] %v295
                %v297 = vld [vmem:[%s257 + $0x214] sm:%s250]
                %298 = vst [vmem:[%s258 + $0x130] sm:%s250] %v297
                %v299 = vld [vmem:[%s257 + $0x230] sm:%s250]
                %300 = vst [vmem:[%s258 + $0x140] sm:%s250] %v299
                %v301 = vld [vmem:[%s257 + $0x24c] sm:%s250]
                %302 = vst [vmem:[%s258 + $0x150] sm:%s250] %v301
                %v303 = vld [vmem:[%s257 + $0x268] sm:%s250]
                %304 = vst [vmem:[%s258 + $0x160] sm:%s250] %v303
                %v305 = vld [vmem:[%s257 + $0x284] sm:%s250]
                %306 = vst [vmem:[%s258 + $0x170] sm:%s250] %v305
                %v307 = vld [vmem:[%s257 + $0x2a0] sm:%s250]
                %308 = vst [vmem:[%s258 + $0x180] sm:%s250] %v307
                %v309 = vld [vmem:[%s257 + $0x2bc] sm:%s250]
                %310 = vst [vmem:[%s258 + $0x190] sm:%s250] %v309
                %v311 = vld [vmem:[%s257 + $0x2d8] sm:%s250]
                %312 = vst [vmem:[%s258 + $0x1a0] sm:%s250] %v311
                %v313 = vld [vmem:[%s257 + $0x2f4] sm:%s250]
                %314 = vst [vmem:[%s258 + $0x1b0] sm:%s250] %v313
                %v315 = vld [vmem:[%s257 + $0x310] sm:%s250]
                %316 = vst [vmem:[%s258 + $0x1c0] sm:%s250] %v315
                %v317 = vld [vmem:[%s257 + $0x32c] sm:%s250]
                %318 = vst [vmem:[%s258 + $0x1d0] sm:%s250] %v317
                %v319 = vld [vmem:[%s257 + $0x348] sm:%s250]
                %320 = vst [vmem:[%s258 + $0x1e0] sm:%s250] %v319
                %v321 = vld [vmem:[%s257 + $0x364] sm:%s250]
                %322 = vst [vmem:[%s258 + $0x1f0] sm:%s250] %v321
                %v323 = vld [vmem:[%s257 + $0x380] sm:%s250]
                %324 = vst [vmem:[%s258 + $0x200] sm:%s250] %v323
                %v325 = vld [vmem:[%s257 + $0x39c] sm:%s250]
                %326 = vst [vmem:[%s258 + $0x210] sm:%s250] %v325
                %v327 = vld [vmem:[%s257 + $0x3b8] sm:%s250]
                %328 = vst [vmem:[%s258 + $0x220] sm:%s250] %v327
                %v329 = vld [vmem:[%s257 + $0x3d4] sm:%s250]
                %330 = vst [vmem:[%s258 + $0x230] sm:%s250] %v329
                %v331 = vld [vmem:[%s257 + $0x3f0] sm:%s250]
                %332 = vst [vmem:[%s258 + $0x240] sm:%s250] %v331
                %v333 = vld [vmem:[%s257 + $0x40c] sm:%s250]
                %334 = vst [vmem:[%s258 + $0x250] sm:%s250] %v333
                %v335 = vld [vmem:[%s257 + $0x428] sm:%s250]
                %336 = vst [vmem:[%s258 + $0x260] sm:%s250] %v335
                %v337 = vld [vmem:[%s257 + $0x444] sm:%s250]
                %338 = vst [vmem:[%s258 + $0x270] sm:%s250] %v337
                %v339 = vld [vmem:[%s257 + $0x460] sm:%s250]
                %340 = vst [vmem:[%s258 + $0x280] sm:%s250] %v339
                %v341 = vld [vmem:[%s257 + $0x47c] sm:%s250]
                %342 = vst [vmem:[%s258 + $0x290] sm:%s250] %v341
                %v343 = vld [vmem:[%s257 + $0x498] sm:%s250]
                %344 = vst [vmem:[%s258 + $0x2a0] sm:%s250] %v343
                %v345 = vld [vmem:[%s257 + $0x4b4] sm:%s250]
                %346 = vst [vmem:[%s258 + $0x2b0] sm:%s250] %v345
                %v347 = vld [vmem:[%s257 + $0x4d0] sm:%s250]
                %348 = vst [vmem:[%s258 + $0x2c0] sm:%s250] %v347
                %v349 = vld [vmem:[%s257 + $0x4ec] sm:%s250]
                %350 = vst [vmem:[%s258 + $0x2d0] sm:%s250] %v349
                %v351 = vld [vmem:[%s257 + $0x508] sm:%s250]
                %352 = vst [vmem:[%s258 + $0x2e0] sm:%s250] %v351
                %v353 = vld [vmem:[%s257 + $0x524] sm:%s250]
                %354 = vst [vmem:[%s258 + $0x2f0] sm:%s250] %v353
                %v355 = vld [vmem:[%s257 + $0x540] sm:%s250]
                %356 = vst [vmem:[%s258 + $0x300] sm:%s250] %v355
                %v357 = vld [vmem:[%s257 + $0x55c] sm:%s250]
                %358 = vst [vmem:[%s258 + $0x310] sm:%s250] %v357
                %v359 = vld [vmem:[%s257 + $0x578] sm:%s250]
                %360 = vst [vmem:[%s258 + $0x320] sm:%s250] %v359
                %v361 = vld [vmem:[%s257 + $0x594] sm:%s250]
                %362 = vst [vmem:[%s258 + $0x330] sm:%s250] %v361
                %v363 = vld [vmem:[%s257 + $0x5b0] sm:%s250]
                %364 = vst [vmem:[%s258 + $0x340] sm:%s250] %v363
                %v365 = vld [vmem:[%s257 + $0x5cc] sm:%s250]
                %366 = vst [vmem:[%s258 + $0x350] sm:%s250] %v365
                %v367 = vld [vmem:[%s257 + $0x5e8] sm:%s250]
                %368 = vst [vmem:[%s258 + $0x360] sm:%s250] %v367
                %v369 = vld [vmem:[%s257 + $0x604] sm:%s250]
                %370 = vst [vmem:[%s258 + $0x370] sm:%s250] %v369
                %v371 = vld [vmem:[%s257 + $0x620] sm:%s250]
                %372 = vst [vmem:[%s258 + $0x380] sm:%s250] %v371
                %v373 = vld [vmem:[%s257 + $0x63c] sm:%s250]
                %374 = vst [vmem:[%s258 + $0x390] sm:%s250] %v373
                %v375 = vld [vmem:[%s257 + $0x658] sm:%s250]
                %376 = vst [vmem:[%s258 + $0x3a0] sm:%s250] %v375
                %v377 = vld [vmem:[%s257 + $0x674] sm:%s250]
                %378 = vst [vmem:[%s258 + $0x3b0] sm:%s250] %v377
              $region61: #{fused_se_conv_bn.1} parent=55 // loop_footer
                %s256 = sadd.s32 1, %s252
              $region62: #{fused_se_conv_bn.1} parent=55 // loop_footer_branch
                %251 = sbr.rel target = $region58
              $region63: #{fused_se_conv_bn.1} parent=55 // loop_exit
                _
            $region56: #{fused_se_conv_bn.1} parent=47 // pred_fallthru
              _
          $region48: #{fused_se_conv_bn.1} parent=43 // pred_fallthru
            _
          %1336 = vnop
        $region44: #{fused_se_conv_bn.1} parent=39 // pred_fallthru
          _
      $region40: #{fused_se_conv_bn.1} parent=5 // pred_fallthru
        _
      %p1337 = scmp.le.s32.totalorder 1, %s13
      %p1338 = scmp.lt.s32.totalorder %s13, 3
      %p1339 = pnand %p1337, %p1338
      %p1340 = pneg %p1339
      // Predicated region
      $region107: #{fused_se_conv_bn.1} parent=5 // pred_check
        _
      $region108: #{fused_se_conv_bn.1} parent=5 // pred_check_branch
        %1342 = sbr.rel (%p1339) target = $region110
      $region109: #{fused_se_conv_bn.1} parent=5 // pred_region
        %s1343 = ssub.s32 %s13, 1
        %s1344 = sand.u32 %s110, 1
        %s1345 = sand.u32 %s110, 1
        %s1346 = smul.addr %s1345, 960
        %s1347 = scalar_lea.vmem [#allocation6], %s1346
        // Predicated region
        $region111: #{fused_se_conv_bn.1} parent=109 // pred_check
          %p1348 = pneg %p123
        $region112: #{fused_se_conv_bn.1} parent=109 // pred_check_branch
          %1350 = sbr.rel (%p1348) target = $region114
        $region113: #{fused_se_conv_bn.1} parent=109 // pred_region
          _
        $region114: #{fused_se_conv_bn.1} parent=109 // pred_fallthru
          _
        %p1351 = pneg %p34
        %p1352 = pneg %p31
        %p1353 = pneg %p55
        %p1354 = pneg %p52
        %p1355 = pneg %p76
        %p1356 = pneg %p73
        %p1357 = pneg %p97
        %p1358 = pneg %p94
        %s1359 = sand.u32 %s110, 1
        %s1360 = sand.u32 %s110, 1
        %s1361 = smul.addr %s1360, 960
        %s1362 = scalar_lea.vmem [#allocation6], %s1361
        %p1363 = pneg %p123
        %p1364 = pneg %p120
        %p1365 = pneg %p144
        %p1366 = pneg %p141
        %p1367 = pneg %p165
        %p1368 = pneg %p162
        %p1369 = pneg %p186
        %p1370 = pneg %p183
        %s1371 = smul.u32 4, %s18
        %s1372 = ssub.s32 7, %s1371
        %p1373 = scmp.lt.s32.totalorder %s1372, 4
        %s1374 = scalar_select %p1373, %s1372, 4
        %s1375 = smul.u32 3840, %s1374
        %p1377 = scmp.eq.s32.totalorder %s18, 0
        // Predicated region
        $region115: #{fused_se_conv_bn.1} parent=109 // pred_check
          %p1378 = pneg %p1377
        $region116: #{fused_se_conv_bn.1} parent=109 // pred_check_branch
          %1380 = sbr.rel (%p1378) target = $region118
        $region117: #{fused_se_conv_bn.1} parent=109 // pred_region
          %v1381 = vld [vmem:[%s1] sm:$0xff]
          %v1382 = vld [vmem:[%s1 + $0x8] sm:$0xff]
          %v1383 = vld [vmem:[%s1 + $0x10] sm:$0xff]
          %v1384 = vld [vmem:[%s1 + $0x18] sm:$0xff]
          %v1385 = vld [vmem:[%s1 + $0x20] sm:$0xff]
          %v1386 = vld [vmem:[%s1 + $0x28] sm:$0xff]
          %v1387 = vld [vmem:[%s1 + $0x30] sm:$0xff]
          %v1388 = vld [vmem:[%s1 + $0x38] sm:$0xff]
          %v1389 = vld [vmem:[%s1 + $0x40] sm:$0xf]
          %v1390 = vld [vmem:[%s1 + $0x48] sm:$0xf]
          %v1391 = vld [vmem:[%s1 + $0x50] sm:$0xf]
          %v1392 = vld [vmem:[%s1 + $0x58] sm:$0xf]
          %v1393 = vld [vmem:[%s0] sm:$0xff]
          %v1394 = vld [vmem:[%s0 + $0x8] sm:$0xff]
          %v1395 = vld [vmem:[%s0 + $0x10] sm:$0xf]
          %1397 = vset.pattern.permute.xlu0 0
          %1398 = vperm.xlu0 %1397, %v1393
          %v1399 = vpop.permute.xlu0 %1398
          %1402 = vset.pattern.permute.xlu0 0
          %1403 = vperm.xlu0 %1402, %v1394
          %v1404 = vpop.permute.xlu0 %1403
          %1407 = vset.pattern.permute.xlu0 0
          %1408 = vperm.xlu0 %1407, %v1395
          %v1409 = vpop.permute.xlu0 %1408
          %v1411 = vmul.f32 %v1381, %v1399
          %v1412 = vmul.f32 %v1382, %v1399
          %v1413 = vmul.f32 %v1383, %v1399
          %v1414 = vmul.f32 %v1384, %v1399
          %v1415 = vmul.f32 %v1385, %v1404
          %v1416 = vmul.f32 %v1386, %v1404
          %v1417 = vmul.f32 %v1387, %v1404
          %v1418 = vmul.f32 %v1388, %v1404
          %v1419 = vmul.f32 %v1389, %v1409
          %v1420 = vmul.f32 %v1390, %v1409
          %v1421 = vmul.f32 %v1391, %v1409
          %v1422 = vmul.f32 %v1392, %v1409
          %v1423 = vadd.f32 %v1411, %v1415
          %vm1424 = vcmask 1043456
          %v1425 = vsel %vm1424, %v1419, 0.0
          %v1426 = vadd.f32 %v1423, %v1425
          %v1427 = vrot.slane %v1426, 4
          %v1428 = vadd.f32 %v1426, %v1427
          %v1429 = vrot.slane %v1428, 2
          %v1430 = vadd.f32 %v1428, %v1429
          %v1431 = vrot.slane %v1430, 1
          %v1432 = vadd.f32 %v1430, %v1431
          %v1433 = vadd.f32 %v1412, %v1416
          %v1434 = vsel %vm1424, %v1420, 0.0
          %v1435 = vadd.f32 %v1433, %v1434
          %v1436 = vrot.slane %v1435, 4
          %v1437 = vadd.f32 %v1435, %v1436
          %v1438 = vrot.slane %v1437, 2
          %v1439 = vadd.f32 %v1437, %v1438
          %v1440 = vrot.slane %v1439, 1
          %v1441 = vadd.f32 %v1439, %v1440
          %v1442 = vadd.f32 %v1413, %v1417
          %v1443 = vsel %vm1424, %v1421, 0.0
          %v1444 = vadd.f32 %v1442, %v1443
          %v1445 = vrot.slane %v1444, 4
          %v1446 = vadd.f32 %v1444, %v1445
          %v1447 = vrot.slane %v1446, 2
          %v1448 = vadd.f32 %v1446, %v1447
          %v1449 = vrot.slane %v1448, 1
          %v1450 = vadd.f32 %v1448, %v1449
          %vm1451 = vcmask 785408
          %v1452 = vsel %vm1451, %v1414, 0.0
          %v1453 = vsel %vm1451, %v1418, 0.0
          %v1454 = vadd.f32 %v1452, %v1453
          %vm1455 = vcmask 781312
          %v1456 = vsel %vm1455, %v1422, 0.0
          %v1457 = vadd.f32 %v1454, %v1456
          %v1458 = vrot.slane %v1457, 4
          %v1459 = vadd.f32 %v1457, %v1458
          %v1460 = vrot.slane %v1459, 2
          %v1461 = vadd.f32 %v1459, %v1460
          %v1462 = vrot.slane %v1461, 1
          %v1463 = vadd.f32 %v1461, %v1462
          %v1464 = vld [vmem:[%s2] sm:$0xf]
          %v1466 = vlaneseq
          %v1467 = vshrl.u32 %v1466, 7
          %v1468 = vsub.s32 0, %v1467
          %v1469 = vrot.slane %v1464, %v1468
          %v1470 = vlaneseq
          %v1471 = vshrl.u32 %v1470, 7
          %v1472 = vsub.s32 1, %v1471
          %v1473 = vrot.slane %v1464, %v1472
          %v1474 = vlaneseq
          %v1475 = vshrl.u32 %v1474, 7
          %v1476 = vsub.s32 2, %v1475
          %v1477 = vrot.slane %v1464, %v1476
          %v1478 = vlaneseq
          %v1479 = vshrl.u32 %v1478, 7
          %v1480 = vsub.s32 3, %v1479
          %v1481 = vrot.slane %v1464, %v1480
          %v1486 = vadd.f32 %v1432, %v1469
          %v1487 = vadd.f32 %v1441, %v1473
          %v1488 = vadd.f32 %v1450, %v1477
          %v1489 = vadd.f32 %v1463, %v1481
          %v1490 = vxor.u32 %v1486, 2147483648
          %v1491 = vxor.u32 %v1487, 2147483648
          %v1492 = vxor.u32 %v1488, 2147483648
          %v1493 = vxor.u32 %v1489, 2147483648
          %v1494 = vmul.f32 %v1490, 1.442695
          %v1495 = vpow.pop %v1494
          %v1496 = vmul.f32 %v1491, 1.442695
          %v1497 = vpow.pop %v1496
          %v1498 = vmul.f32 %v1492, 1.442695
          %v1499 = vpow.pop %v1498
          %v1500 = vmul.f32 %v1493, 1.442695
          %v1501 = vpow.pop %v1500
          %v1502 = vadd.f32 %v1495, 1.0
          %v1503 = vadd.f32 %v1497, 1.0
          %v1504 = vadd.f32 %v1499, 1.0
          %v1505 = vadd.f32 %v1501, 1.0
          %v1506 = vrcp.pop %v1502
          %v1507 = vmul.f32 1.0, %v1506
          %v1508 = vrcp.pop %v1503
          %v1509 = vmul.f32 1.0, %v1508
          %v1510 = vrcp.pop %v1504
          %v1511 = vmul.f32 1.0, %v1510
          %v1512 = vrcp.pop %v1505
          %v1513 = vmul.f32 1.0, %v1512
          %v1514 = vld [vmem:[%s3] sm:$0xff]
          %v1515 = vld [vmem:[%s3 + $0x8] sm:$0xff]
          %v1516 = vld [vmem:[%s3 + $0x10] sm:$0xff]
          %v1517 = vld [vmem:[%s3 + $0x18] sm:$0xff]
          %v1518 = vld [vmem:[%s3 + $0x20] sm:$0xff]
          %v1519 = vld [vmem:[%s3 + $0x28] sm:$0xff]
          %v1520 = vld [vmem:[%s3 + $0x30] sm:$0xff]
          %v1521 = vld [vmem:[%s3 + $0x38] sm:$0xff]
          %v1522 = vld [vmem:[%s3 + $0x40] sm:$0xff]
          %v1523 = vld [vmem:[%s3 + $0x48] sm:$0xff]
          %v1524 = vld [vmem:[%s3 + $0x50] sm:$0xff]
          %v1525 = vld [vmem:[%s3 + $0x58] sm:$0xff]
          %v1526 = vld [vmem:[%s3 + $0x60] sm:$0xff]
          %v1527 = vld [vmem:[%s3 + $0x68] sm:$0xff]
          %v1528 = vld [vmem:[%s3 + $0x70] sm:$0xff]
          %v1529 = vld [vmem:[%s3 + $0x78] sm:$0xff]
          %v1530 = vld [vmem:[%s3 + $0x80] sm:$0xff]
          %v1531 = vld [vmem:[%s3 + $0x88] sm:$0xff]
          %v1532 = vld [vmem:[%s3 + $0x90] sm:$0xff]
          %v1533 = vld [vmem:[%s3 + $0x98] sm:$0xff]
          %v1534 = vunpack.c.l.bf16 %v1514
          %v1535 = vunpack.c.h.bf16 %v1514
          %v1536 = vunpack.c.l.bf16 %v1515
          %v1537 = vunpack.c.h.bf16 %v1515
          %v1538 = vunpack.c.l.bf16 %v1516
          %v1539 = vunpack.c.h.bf16 %v1516
          %v1540 = vunpack.c.l.bf16 %v1517
          %v1541 = vunpack.c.h.bf16 %v1517
          %v1542 = vunpack.c.l.bf16 %v1518
          %v1543 = vunpack.c.h.bf16 %v1518
          %v1544 = vunpack.c.l.bf16 %v1519
          %v1545 = vunpack.c.h.bf16 %v1519
          %v1546 = vunpack.c.l.bf16 %v1520
          %v1547 = vunpack.c.h.bf16 %v1520
          %v1548 = vunpack.c.l.bf16 %v1521
          %v1549 = vunpack.c.h.bf16 %v1521
          %v1550 = vunpack.c.l.bf16 %v1522
          %v1551 = vunpack.c.h.bf16 %v1522
          %v1552 = vunpack.c.l.bf16 %v1523
          %v1553 = vunpack.c.h.bf16 %v1523
          %v1554 = vunpack.c.l.bf16 %v1524
          %v1555 = vunpack.c.h.bf16 %v1524
          %v1556 = vunpack.c.l.bf16 %v1525
          %v1557 = vunpack.c.h.bf16 %v1525
          %v1558 = vunpack.c.l.bf16 %v1526
          %v1559 = vunpack.c.h.bf16 %v1526
          %v1560 = vunpack.c.l.bf16 %v1527
          %v1561 = vunpack.c.h.bf16 %v1527
          %v1562 = vunpack.c.l.bf16 %v1528
          %v1563 = vunpack.c.h.bf16 %v1528
          %v1564 = vunpack.c.l.bf16 %v1529
          %v1565 = vunpack.c.h.bf16 %v1529
          %v1566 = vunpack.c.l.bf16 %v1530
          %v1567 = vunpack.c.h.bf16 %v1530
          %v1568 = vunpack.c.l.bf16 %v1531
          %v1569 = vunpack.c.h.bf16 %v1531
          %v1570 = vunpack.c.l.bf16 %v1532
          %v1571 = vunpack.c.h.bf16 %v1532
          %v1572 = vunpack.c.l.bf16 %v1533
          %v1573 = vunpack.c.h.bf16 %v1533
          %v1574 = vlaneseq
          %v1575 = vshrl.u32 %v1574, 7
          %v1576 = vsub.s32 0, %v1575
          %v1577 = vrot.slane %v1507, %v1576
          %v1578 = vlaneseq
          %v1579 = vshrl.u32 %v1578, 7
          %v1580 = vsub.s32 0, %v1579
          %v1581 = vrot.slane %v1509, %v1580
          %v1582 = vlaneseq
          %v1583 = vshrl.u32 %v1582, 7
          %v1584 = vsub.s32 0, %v1583
          %v1585 = vrot.slane %v1511, %v1584
          %v1586 = vlaneseq
          %v1587 = vshrl.u32 %v1586, 7
          %v1588 = vsub.s32 0, %v1587
          %v1589 = vrot.slane %v1513, %v1588
          %v1590 = vmul.f32 %v1534, %v1577
          %v1591 = vmul.f32 %v1535, %v1581
          %v1592 = vmul.f32 %v1536, %v1585
          %v1593 = vmul.f32 %v1537, %v1589
          %v1594 = vmul.f32 %v1538, %v1577
          %v1595 = vmul.f32 %v1539, %v1581
          %v1596 = vmul.f32 %v1540, %v1585
          %v1597 = vmul.f32 %v1541, %v1589
          %v1598 = vmul.f32 %v1542, %v1577
          %v1599 = vmul.f32 %v1543, %v1581
          %v1600 = vmul.f32 %v1544, %v1585
          %v1601 = vmul.f32 %v1545, %v1589
          %v1602 = vmul.f32 %v1546, %v1577
          %v1603 = vmul.f32 %v1547, %v1581
          %v1604 = vmul.f32 %v1548, %v1585
          %v1605 = vmul.f32 %v1549, %v1589
          %v1606 = vmul.f32 %v1550, %v1577
          %v1607 = vmul.f32 %v1551, %v1581
          %v1608 = vmul.f32 %v1552, %v1585
          %v1609 = vmul.f32 %v1553, %v1589
          %v1610 = vmul.f32 %v1554, %v1577
          %v1611 = vmul.f32 %v1555, %v1581
          %v1612 = vmul.f32 %v1556, %v1585
          %v1613 = vmul.f32 %v1557, %v1589
          %v1614 = vmul.f32 %v1558, %v1577
          %v1615 = vmul.f32 %v1559, %v1581
          %v1616 = vmul.f32 %v1560, %v1585
          %v1617 = vmul.f32 %v1561, %v1589
          %v1618 = vmul.f32 %v1562, %v1577
          %v1619 = vmul.f32 %v1563, %v1581
          %v1620 = vmul.f32 %v1564, %v1585
          %v1621 = vmul.f32 %v1565, %v1589
          %v1622 = vmul.f32 %v1566, %v1577
          %v1623 = vmul.f32 %v1567, %v1581
          %v1624 = vmul.f32 %v1568, %v1585
          %v1625 = vmul.f32 %v1569, %v1589
          %v1626 = vmul.f32 %v1570, %v1577
          %v1627 = vmul.f32 %v1571, %v1581
          %v1628 = vmul.f32 %v1572, %v1585
          %v1629 = vmul.f32 %v1573, %v1589
          %v1630 = vpack.c.bf16 %v1594, %v1590
          %v1631 = vpack.c.bf16 %v1595, %v1591
          %v1632 = vpack.c.bf16 %v1596, %v1592
          %v1633 = vpack.c.bf16 %v1597, %v1593
          %v1634 = vpack.c.bf16 %v1602, %v1598
          %v1635 = vpack.c.bf16 %v1603, %v1599
          %v1636 = vpack.c.bf16 %v1604, %v1600
          %v1637 = vpack.c.bf16 %v1605, %v1601
          %v1638 = vpack.c.bf16 %v1610, %v1606
          %v1639 = vpack.c.bf16 %v1611, %v1607
          %v1640 = vpack.c.bf16 %v1612, %v1608
          %v1641 = vpack.c.bf16 %v1613, %v1609
          %v1642 = vpack.c.bf16 %v1618, %v1614
          %v1643 = vpack.c.bf16 %v1619, %v1615
          %v1644 = vpack.c.bf16 %v1620, %v1616
          %v1645 = vpack.c.bf16 %v1621, %v1617
          %v1646 = vpack.c.bf16 %v1626, %v1622
          %v1647 = vpack.c.bf16 %v1627, %v1623
          %v1648 = vpack.c.bf16 %v1628, %v1624
          %v1649 = vpack.c.bf16 %v1629, %v1625
          %v1670 = vunpack.c.l.b16 %v1630
          %v1671 = vunpack.c.l.b16 %v1631
          %v1672 = vunpack.c.l.b16 %v1632
          %v1673 = vunpack.c.l.b16 %v1633
          %v1674 = vunpack.c.h.b16 %v1630
          %v1675 = vunpack.c.h.b16 %v1631
          %v1676 = vunpack.c.h.b16 %v1632
          %v1677 = vunpack.c.h.b16 %v1633
          %v1678 = vunpack.c.l.b16 %v1634
          %v1679 = vunpack.c.l.b16 %v1635
          %v1680 = vunpack.c.l.b16 %v1636
          %v1681 = vunpack.c.l.b16 %v1637
          %v1682 = vunpack.c.h.b16 %v1634
          %v1683 = vunpack.c.h.b16 %v1635
          %v1684 = vunpack.c.h.b16 %v1636
          %v1685 = vunpack.c.h.b16 %v1637
          %v1686 = vunpack.c.l.b16 %v1638
          %v1687 = vunpack.c.l.b16 %v1639
          %v1688 = vunpack.c.l.b16 %v1640
          %v1689 = vunpack.c.l.b16 %v1641
          %v1690 = vunpack.c.h.b16 %v1638
          %v1691 = vunpack.c.h.b16 %v1639
          %v1692 = vunpack.c.h.b16 %v1640
          %v1693 = vunpack.c.h.b16 %v1641
          %v1694 = vunpack.c.l.b16 %v1642
          %v1695 = vunpack.c.l.b16 %v1643
          %v1696 = vunpack.c.l.b16 %v1644
          %v1697 = vunpack.c.l.b16 %v1645
          %v1698 = vunpack.c.h.b16 %v1642
          %v1699 = vunpack.c.h.b16 %v1643
          %v1700 = vunpack.c.h.b16 %v1644
          %v1701 = vunpack.c.h.b16 %v1645
          %v1702 = vunpack.c.l.b16 %v1646
          %v1703 = vunpack.c.l.b16 %v1647
          %v1704 = vunpack.c.l.b16 %v1648
          %v1705 = vunpack.c.l.b16 %v1649
          %v1706 = vunpack.c.h.b16 %v1646
          %v1707 = vunpack.c.h.b16 %v1647
          %v1708 = vunpack.c.h.b16 %v1648
          %v1709 = vunpack.c.h.b16 %v1649
          %v1710 = vpack.c.b16 %v1671, %v1670
          %v1711 = vpack.c.b16 %v1673, %v1672
          %v1712 = vpack.c.b16 %v1675, %v1674
          %v1713 = vpack.c.b16 %v1677, %v1676
          %v1714 = vpack.c.b16 %v1679, %v1678
          %v1715 = vpack.c.b16 %v1681, %v1680
          %v1716 = vpack.c.b16 %v1683, %v1682
          %v1717 = vpack.c.b16 %v1685, %v1684
          %v1718 = vpack.c.b16 %v1687, %v1686
          %v1719 = vpack.c.b16 %v1689, %v1688
          %v1720 = vpack.c.b16 %v1691, %v1690
          %v1721 = vpack.c.b16 %v1693, %v1692
          %v1722 = vpack.c.b16 %v1695, %v1694
          %v1723 = vpack.c.b16 %v1697, %v1696
          %v1724 = vpack.c.b16 %v1699, %v1698
          %v1725 = vpack.c.b16 %v1701, %v1700
          %v1726 = vpack.c.b16 %v1703, %v1702
          %v1727 = vpack.c.b16 %v1705, %v1704
          %v1728 = vpack.c.b16 %v1707, %v1706
          %v1729 = vpack.c.b16 %v1709, %v1708
          %1750 = vst [vmem:[#allocation2] sm:$0xff] %v1710
          %vm1751 = vcmask 785412
          %vm1752 = vmor %vm1751, %vm1424
          %1753 = vst.msk [vmem:[#allocation2 + $0x8] sm:$0xff] %vm1752, %v1711
          %1754 = vst [vmem:[#allocation2 + $0x10] sm:$0xff] %v1712
          %1755 = vst.msk [vmem:[#allocation2 + $0x18] sm:$0xff] %vm1752, %v1713
          %1756 = vst [vmem:[#allocation2 + $0x20] sm:$0xff] %v1714
          %1757 = vst.msk [vmem:[#allocation2 + $0x28] sm:$0xff] %vm1752, %v1715
          %1758 = vst [vmem:[#allocation2 + $0x30] sm:$0xff] %v1716
          %1759 = vst.msk [vmem:[#allocation2 + $0x38] sm:$0xff] %vm1752, %v1717
          %1760 = vst [vmem:[#allocation2 + $0x40] sm:$0xff] %v1718
          %1761 = vst.msk [vmem:[#allocation2 + $0x48] sm:$0xff] %vm1752, %v1719
          %1762 = vst [vmem:[#allocation2 + $0x50] sm:$0xff] %v1720
          %1763 = vst.msk [vmem:[#allocation2 + $0x58] sm:$0xff] %vm1752, %v1721
          %1764 = vst [vmem:[#allocation2 + $0x60] sm:$0xff] %v1722
          %1765 = vst.msk [vmem:[#allocation2 + $0x68] sm:$0xff] %vm1752, %v1723
          %1766 = vst [vmem:[#allocation2 + $0x70] sm:$0xff] %v1724
          %1767 = vst.msk [vmem:[#allocation2 + $0x78] sm:$0xff] %vm1752, %v1725
          %1768 = vst [vmem:[#allocation2 + $0x80] sm:$0xff] %v1726
          %1769 = vst.msk [vmem:[#allocation2 + $0x88] sm:$0xff] %vm1752, %v1727
          %1770 = vst [vmem:[#allocation2 + $0x90] sm:$0xff] %v1728
          %1771 = vst.msk [vmem:[#allocation2 + $0x98] sm:$0xff] %vm1752, %v1729
          %vm1772 = vcmask 7168
          %1773 = vst.msk [vmem:[#allocation4] sm:$0xff] %vm1772, 0.0
          %1774 = vst.msk [vmem:[#allocation4 + $0x8] sm:$0xff] %vm1772, 0.0
          %1775 = vst.msk [vmem:[#allocation4 + $0x10] sm:$0xff] %vm1772, 0.0
          %1776 = vst.msk [vmem:[#allocation4 + $0x18] sm:$0xff] %vm1772, 0.0
          %1777 = vst.msk [vmem:[#allocation4 + $0x20] sm:$0xff] %vm1772, 0.0
          %1778 = vst.msk [vmem:[#allocation4 + $0x28] sm:$0xff] %vm1772, 0.0
          %1779 = vst.msk [vmem:[#allocation4 + $0x30] sm:$0xff] %vm1772, 0.0
          %1780 = vst.msk [vmem:[#allocation4 + $0x38] sm:$0xff] %vm1772, 0.0
          %1781 = vst.msk [vmem:[#allocation4 + $0x40] sm:$0xff] %vm1772, 0.0
          %1782 = vst.msk [vmem:[#allocation4 + $0x48] sm:$0xff] %vm1772, 0.0
          %1783 = vst.msk [vmem:[#allocation5] sm:$0xff] %vm1772, 0.0
          %1784 = vst.msk [vmem:[#allocation5 + $0x8] sm:$0xff] %vm1772, 0.0
          %1785 = vst.msk [vmem:[#allocation5 + $0x10] sm:$0xff] %vm1772, 0.0
          %1786 = vst.msk [vmem:[#allocation5 + $0x18] sm:$0xff] %vm1772, 0.0
          %1787 = vst.msk [vmem:[#allocation5 + $0x20] sm:$0xff] %vm1772, 0.0
          %1788 = vst.msk [vmem:[#allocation5 + $0x28] sm:$0xff] %vm1772, 0.0
          %1789 = vst.msk [vmem:[#allocation5 + $0x30] sm:$0xff] %vm1772, 0.0
          %1790 = vst.msk [vmem:[#allocation5 + $0x38] sm:$0xff] %vm1772, 0.0
          %1791 = vst.msk [vmem:[#allocation5 + $0x40] sm:$0xff] %vm1772, 0.0
          %1792 = vst.msk [vmem:[#allocation5 + $0x48] sm:$0xff] %vm1772, 0.0
        $region118: #{fused_se_conv_bn.1} parent=109 // pred_fallthru
          _
        %v1793 = vld [vmem:[#allocation2] sm:$0xff]
        %v1794 = vld [vmem:[#allocation2 + $0x8] sm:$0xff]
        %v1795 = vld [vmem:[#allocation2 + $0x10] sm:$0xff]
        %v1796 = vld [vmem:[#allocation2 + $0x18] sm:$0xff]
        %v1797 = vld [vmem:[#allocation2 + $0x20] sm:$0xff]
        %v1798 = vld [vmem:[#allocation2 + $0x28] sm:$0xff]
        %v1799 = vld [vmem:[#allocation2 + $0x30] sm:$0xff]
        %v1800 = vld [vmem:[#allocation2 + $0x38] sm:$0xff]
        %v1801 = vld [vmem:[#allocation2 + $0x40] sm:$0xff]
        %v1802 = vld [vmem:[#allocation2 + $0x48] sm:$0xff]
        %v1803 = vld [vmem:[#allocation2 + $0x50] sm:$0xff]
        %v1804 = vld [vmem:[#allocation2 + $0x58] sm:$0xff]
        %v1805 = vld [vmem:[#allocation2 + $0x60] sm:$0xff]
        %v1806 = vld [vmem:[#allocation2 + $0x68] sm:$0xff]
        %v1807 = vld [vmem:[#allocation2 + $0x70] sm:$0xff]
        %v1808 = vld [vmem:[#allocation2 + $0x78] sm:$0xff]
        %v1809 = vld [vmem:[#allocation2 + $0x80] sm:$0xff]
        %v1810 = vld [vmem:[#allocation2 + $0x88] sm:$0xff]
        %v1811 = vld [vmem:[#allocation2 + $0x90] sm:$0xff]
        %v1812 = vld [vmem:[#allocation2 + $0x98] sm:$0xff]
        %v1813 = vld [vmem:[%s1347] sm:$0xff]
        %v1814 = vld [vmem:[%s1347 + $0x8] sm:$0xff]
        %v1815 = vld [vmem:[%s1347 + $0x10] sm:$0xff]
        %v1816 = vld [vmem:[%s1347 + $0x18] sm:$0xff]
        %v1817 = vld [vmem:[%s1347 + $0x20] sm:$0xff]
        %v1818 = vld [vmem:[%s1347 + $0x28] sm:$0xff]
        %v1819 = vld [vmem:[%s1347 + $0x30] sm:$0xff]
        %v1820 = vld [vmem:[%s1347 + $0x38] sm:$0xff]
        %v1821 = vld [vmem:[%s1347 + $0x40] sm:$0xff]
        %v1822 = vld [vmem:[%s1347 + $0x48] sm:$0xff]
        %v1823 = vld [vmem:[%s1347 + $0x50] sm:$0xff]
        %v1824 = vld [vmem:[%s1347 + $0x58] sm:$0xff]
        %v1825 = vld [vmem:[%s1347 + $0x60] sm:$0xff]
        %v1826 = vld [vmem:[%s1347 + $0x68] sm:$0xff]
        %v1827 = vld [vmem:[%s1347 + $0x70] sm:$0xff]
        %v1828 = vld [vmem:[%s1347 + $0x78] sm:$0xff]
        %v1829 = vld [vmem:[%s1347 + $0x80] sm:$0xff]
        %v1830 = vld [vmem:[%s1347 + $0x88] sm:$0xff]
        %v1831 = vld [vmem:[%s1347 + $0x90] sm:$0xff]
        %v1832 = vld [vmem:[%s1347 + $0x98] sm:$0xff]
        %v1833 = vld [vmem:[%s1347 + $0xa0] sm:$0xff]
        %v1834 = vld [vmem:[%s1347 + $0xa8] sm:$0xff]
        %v1835 = vld [vmem:[%s1347 + $0xb0] sm:$0xff]
        %v1836 = vld [vmem:[%s1347 + $0xb8] sm:$0xff]
        %v1837 = vld [vmem:[%s1347 + $0xc0] sm:$0xff]
        %v1838 = vld [vmem:[%s1347 + $0xc8] sm:$0xff]
        %v1839 = vld [vmem:[%s1347 + $0xd0] sm:$0xff]
        %v1840 = vld [vmem:[%s1347 + $0xd8] sm:$0xff]
        %v1841 = vld [vmem:[%s1347 + $0xe0] sm:$0xff]
        %v1842 = vld [vmem:[%s1347 + $0xe8] sm:$0xff]
        %v1843 = vld [vmem:[%s1347 + $0xf0] sm:$0xff]
        %v1844 = vld [vmem:[%s1347 + $0xf8] sm:$0xff]
        %v1845 = vld [vmem:[%s1347 + $0x100] sm:$0xff]
        %v1846 = vld [vmem:[%s1347 + $0x108] sm:$0xff]
        %v1847 = vld [vmem:[%s1347 + $0x110] sm:$0xff]
        %v1848 = vld [vmem:[%s1347 + $0x118] sm:$0xff]
        %v1849 = vld [vmem:[%s1347 + $0x120] sm:$0xff]
        %v1850 = vld [vmem:[%s1347 + $0x128] sm:$0xff]
        %v1851 = vld [vmem:[%s1347 + $0x130] sm:$0xff]
        %v1852 = vld [vmem:[%s1347 + $0x138] sm:$0xff]
        %v1853 = vld [vmem:[%s1347 + $0x140] sm:$0xff]
        %v1854 = vld [vmem:[%s1347 + $0x148] sm:$0xff]
        %v1855 = vld [vmem:[%s1347 + $0x150] sm:$0xff]
        %v1856 = vld [vmem:[%s1347 + $0x158] sm:$0xff]
        %v1857 = vld [vmem:[%s1347 + $0x160] sm:$0xff]
        %v1858 = vld [vmem:[%s1347 + $0x168] sm:$0xff]
        %v1859 = vld [vmem:[%s1347 + $0x170] sm:$0xff]
        %v1860 = vld [vmem:[%s1347 + $0x178] sm:$0xff]
        %v1861 = vld [vmem:[%s1347 + $0x180] sm:$0xff]
        %v1862 = vld [vmem:[%s1347 + $0x188] sm:$0xff]
        %v1863 = vld [vmem:[%s1347 + $0x190] sm:$0xff]
        %v1864 = vld [vmem:[%s1347 + $0x198] sm:$0xff]
        %v1865 = vld [vmem:[%s1347 + $0x1a0] sm:$0xff]
        %v1866 = vld [vmem:[%s1347 + $0x1a8] sm:$0xff]
        %v1867 = vld [vmem:[%s1347 + $0x1b0] sm:$0xff]
        %v1868 = vld [vmem:[%s1347 + $0x1b8] sm:$0xff]
        %v1869 = vld [vmem:[%s1347 + $0x1c0] sm:$0xff]
        %v1870 = vld [vmem:[%s1347 + $0x1c8] sm:$0xff]
        %v1871 = vld [vmem:[%s1347 + $0x1d0] sm:$0xff]
        %v1872 = vld [vmem:[%s1347 + $0x1d8] sm:$0xff]
        %v1873 = vld [vmem:[%s1347 + $0x1e0] sm:$0xff]
        %v1874 = vld [vmem:[%s1347 + $0x1e8] sm:$0xff]
        %v1875 = vld [vmem:[%s1347 + $0x1f0] sm:$0xff]
        %v1876 = vld [vmem:[%s1347 + $0x1f8] sm:$0xff]
        %v1877 = vld [vmem:[%s1347 + $0x200] sm:$0xff]
        %v1878 = vld [vmem:[%s1347 + $0x208] sm:$0xff]
        %v1879 = vld [vmem:[%s1347 + $0x210] sm:$0xff]
        %v1880 = vld [vmem:[%s1347 + $0x218] sm:$0xff]
        %v1881 = vld [vmem:[%s1347 + $0x220] sm:$0xff]
        %v1882 = vld [vmem:[%s1347 + $0x228] sm:$0xff]
        %v1883 = vld [vmem:[%s1347 + $0x230] sm:$0xff]
        %v1884 = vld [vmem:[%s1347 + $0x238] sm:$0xff]
        %v1885 = vld [vmem:[%s1347 + $0x240] sm:$0xff]
        %v1886 = vld [vmem:[%s1347 + $0x248] sm:$0xff]
        %v1887 = vld [vmem:[%s1347 + $0x250] sm:$0xff]
        %v1888 = vld [vmem:[%s1347 + $0x258] sm:$0xff]
        %v1889 = vld [vmem:[%s1347 + $0x260] sm:$0xff]
        %v1890 = vld [vmem:[%s1347 + $0x268] sm:$0xff]
        %v1891 = vld [vmem:[%s1347 + $0x270] sm:$0xff]
        %v1892 = vld [vmem:[%s1347 + $0x278] sm:$0xff]
        %v1893 = vld [vmem:[%s1347 + $0x280] sm:$0xff]
        %v1894 = vld [vmem:[%s1347 + $0x288] sm:$0xff]
        %v1895 = vld [vmem:[%s1347 + $0x290] sm:$0xff]
        %v1896 = vld [vmem:[%s1347 + $0x298] sm:$0xff]
        %v1897 = vld [vmem:[%s1347 + $0x2a0] sm:$0xff]
        %v1898 = vld [vmem:[%s1347 + $0x2a8] sm:$0xff]
        %v1899 = vld [vmem:[%s1347 + $0x2b0] sm:$0xff]
        %v1900 = vld [vmem:[%s1347 + $0x2b8] sm:$0xff]
        %v1901 = vld [vmem:[%s1347 + $0x2c0] sm:$0xff]
        %v1902 = vld [vmem:[%s1347 + $0x2c8] sm:$0xff]
        %v1903 = vld [vmem:[%s1347 + $0x2d0] sm:$0xff]
        %v1904 = vld [vmem:[%s1347 + $0x2d8] sm:$0xff]
        %v1905 = vld [vmem:[%s1347 + $0x2e0] sm:$0xff]
        %v1906 = vld [vmem:[%s1347 + $0x2e8] sm:$0xff]
        %v1907 = vld [vmem:[%s1347 + $0x2f0] sm:$0xff]
        %v1908 = vld [vmem:[%s1347 + $0x2f8] sm:$0xff]
        %v1909 = vld [vmem:[%s1347 + $0x300] sm:$0xff]
        %v1910 = vld [vmem:[%s1347 + $0x308] sm:$0xff]
        %v1911 = vld [vmem:[%s1347 + $0x310] sm:$0xff]
        %v1912 = vld [vmem:[%s1347 + $0x318] sm:$0xff]
        %v1913 = vld [vmem:[%s1347 + $0x320] sm:$0xff]
        %v1914 = vld [vmem:[%s1347 + $0x328] sm:$0xff]
        %v1915 = vld [vmem:[%s1347 + $0x330] sm:$0xff]
        %v1916 = vld [vmem:[%s1347 + $0x338] sm:$0xff]
        %v1917 = vld [vmem:[%s1347 + $0x340] sm:$0xff]
        %v1918 = vld [vmem:[%s1347 + $0x348] sm:$0xff]
        %v1919 = vld [vmem:[%s1347 + $0x350] sm:$0xff]
        %v1920 = vld [vmem:[%s1347 + $0x358] sm:$0xff]
        %v1921 = vld [vmem:[%s1347 + $0x360] sm:$0xff]
        %v1922 = vld [vmem:[%s1347 + $0x368] sm:$0xff]
        %v1923 = vld [vmem:[%s1347 + $0x370] sm:$0xff]
        %v1924 = vld [vmem:[%s1347 + $0x378] sm:$0xff]
        %v1925 = vld [vmem:[%s1347 + $0x380] sm:$0xff]
        %v1926 = vld [vmem:[%s1347 + $0x388] sm:$0xff]
        %v1927 = vld [vmem:[%s1347 + $0x390] sm:$0xff]
        %v1928 = vld [vmem:[%s1347 + $0x398] sm:$0xff]
        %v1929 = vld [vmem:[%s1347 + $0x3a0] sm:$0xff]
        %v1930 = vld [vmem:[%s1347 + $0x3a8] sm:$0xff]
        %v1931 = vld [vmem:[%s1347 + $0x3b0] sm:$0xff]
        %v1932 = vld [vmem:[%s1347 + $0x3b8] sm:$0xff]
        %v1953 = vunpack.c.l.b16 %v1793
        %v1954 = vunpack.c.h.b16 %v1793
        %v1955 = vunpack.c.l.b16 %v1794
        %v1956 = vunpack.c.h.b16 %v1794
        %v1957 = vunpack.c.l.b16 %v1795
        %v1958 = vunpack.c.h.b16 %v1795
        %v1959 = vunpack.c.l.b16 %v1796
        %v1960 = vunpack.c.h.b16 %v1796
        %v1961 = vunpack.c.l.b16 %v1797
        %v1962 = vunpack.c.h.b16 %v1797
        %v1963 = vunpack.c.l.b16 %v1798
        %v1964 = vunpack.c.h.b16 %v1798
        %v1965 = vunpack.c.l.b16 %v1799
        %v1966 = vunpack.c.h.b16 %v1799
        %v1967 = vunpack.c.l.b16 %v1800
        %v1968 = vunpack.c.h.b16 %v1800
        %v1969 = vunpack.c.l.b16 %v1801
        %v1970 = vunpack.c.h.b16 %v1801
        %v1971 = vunpack.c.l.b16 %v1802
        %v1972 = vunpack.c.h.b16 %v1802
        %v1973 = vunpack.c.l.b16 %v1803
        %v1974 = vunpack.c.h.b16 %v1803
        %v1975 = vunpack.c.l.b16 %v1804
        %v1976 = vunpack.c.h.b16 %v1804
        %v1977 = vunpack.c.l.b16 %v1805
        %v1978 = vunpack.c.h.b16 %v1805
        %v1979 = vunpack.c.l.b16 %v1806
        %v1980 = vunpack.c.h.b16 %v1806
        %v1981 = vunpack.c.l.b16 %v1807
        %v1982 = vunpack.c.h.b16 %v1807
        %v1983 = vunpack.c.l.b16 %v1808
        %v1984 = vunpack.c.h.b16 %v1808
        %v1985 = vunpack.c.l.b16 %v1809
        %v1986 = vunpack.c.h.b16 %v1809
        %v1987 = vunpack.c.l.b16 %v1810
        %v1988 = vunpack.c.h.b16 %v1810
        %v1989 = vunpack.c.l.b16 %v1811
        %v1990 = vunpack.c.h.b16 %v1811
        %v1991 = vunpack.c.l.b16 %v1812
        %v1992 = vunpack.c.h.b16 %v1812
        %v1993 = vpack.c.b16 %v1957, %v1953
        %v1994 = vpack.c.b16 %v1958, %v1954
        %v1995 = vpack.c.b16 %v1959, %v1955
        %v1996 = vpack.c.b16 %v1960, %v1956
        %v1997 = vpack.c.b16 %v1965, %v1961
        %v1998 = vpack.c.b16 %v1966, %v1962
        %v1999 = vpack.c.b16 %v1967, %v1963
        %v2000 = vpack.c.b16 %v1968, %v1964
        %v2001 = vpack.c.b16 %v1973, %v1969
        %v2002 = vpack.c.b16 %v1974, %v1970
        %v2003 = vpack.c.b16 %v1975, %v1971
        %v2004 = vpack.c.b16 %v1976, %v1972
        %v2005 = vpack.c.b16 %v1981, %v1977
        %v2006 = vpack.c.b16 %v1982, %v1978
        %v2007 = vpack.c.b16 %v1983, %v1979
        %v2008 = vpack.c.b16 %v1984, %v1980
        %v2009 = vpack.c.b16 %v1989, %v1985
        %v2010 = vpack.c.b16 %v1990, %v1986
        %v2011 = vpack.c.b16 %v1991, %v1987
        %v2012 = vpack.c.b16 %v1992, %v1988
        %v2148 = vunpack.c.l.b16 %v1813
        %v2149 = vunpack.c.h.b16 %v1813
        %v2150 = vunpack.c.l.b16 %v1814
        %v2151 = vunpack.c.h.b16 %v1814
        %v2152 = vunpack.c.l.b16 %v1815
        %v2153 = vunpack.c.h.b16 %v1815
        %v2154 = vunpack.c.l.b16 %v1816
        %v2155 = vunpack.c.h.b16 %v1816
        %v2156 = vunpack.c.l.b16 %v1817
        %v2157 = vunpack.c.h.b16 %v1817
        %v2158 = vunpack.c.l.b16 %v1818
        %v2159 = vunpack.c.h.b16 %v1818
        %v2160 = vunpack.c.l.b16 %v1819
        %v2161 = vunpack.c.h.b16 %v1819
        %v2162 = vunpack.c.l.b16 %v1820
        %v2163 = vunpack.c.h.b16 %v1820
        %v2164 = vunpack.c.l.b16 %v1821
        %v2165 = vunpack.c.h.b16 %v1821
        %v2166 = vunpack.c.l.b16 %v1822
        %v2167 = vunpack.c.h.b16 %v1822
        %v2168 = vunpack.c.l.b16 %v1823
        %v2169 = vunpack.c.h.b16 %v1823
        %v2170 = vunpack.c.l.b16 %v1824
        %v2171 = vunpack.c.h.b16 %v1824
        %v2172 = vunpack.c.l.b16 %v1825
        %v2173 = vunpack.c.h.b16 %v1825
        %v2174 = vunpack.c.l.b16 %v1826
        %v2175 = vunpack.c.h.b16 %v1826
        %v2176 = vunpack.c.l.b16 %v1827
        %v2177 = vunpack.c.h.b16 %v1827
        %v2178 = vunpack.c.l.b16 %v1828
        %v2179 = vunpack.c.h.b16 %v1828
        %v2180 = vunpack.c.l.b16 %v1829
        %v2181 = vunpack.c.h.b16 %v1829
        %v2182 = vunpack.c.l.b16 %v1830
        %v2183 = vunpack.c.h.b16 %v1830
        %v2184 = vunpack.c.l.b16 %v1831
        %v2185 = vunpack.c.h.b16 %v1831
        %v2186 = vunpack.c.l.b16 %v1832
        %v2187 = vunpack.c.h.b16 %v1832
        %v2188 = vunpack.c.l.b16 %v1833
        %v2189 = vunpack.c.h.b16 %v1833
        %v2190 = vunpack.c.l.b16 %v1834
        %v2191 = vunpack.c.h.b16 %v1834
        %v2192 = vunpack.c.l.b16 %v1835
        %v2193 = vunpack.c.h.b16 %v1835
        %v2194 = vunpack.c.l.b16 %v1836
        %v2195 = vunpack.c.h.b16 %v1836
        %v2196 = vunpack.c.l.b16 %v1837
        %v2197 = vunpack.c.h.b16 %v1837
        %v2198 = vunpack.c.l.b16 %v1838
        %v2199 = vunpack.c.h.b16 %v1838
        %v2200 = vunpack.c.l.b16 %v1839
        %v2201 = vunpack.c.h.b16 %v1839
        %v2202 = vunpack.c.l.b16 %v1840
        %v2203 = vunpack.c.h.b16 %v1840
        %v2204 = vunpack.c.l.b16 %v1841
        %v2205 = vunpack.c.h.b16 %v1841
        %v2206 = vunpack.c.l.b16 %v1842
        %v2207 = vunpack.c.h.b16 %v1842
        %v2208 = vunpack.c.l.b16 %v1843
        %v2209 = vunpack.c.h.b16 %v1843
        %v2210 = vunpack.c.l.b16 %v1844
        %v2211 = vunpack.c.h.b16 %v1844
        %v2212 = vunpack.c.l.b16 %v1845
        %v2213 = vunpack.c.h.b16 %v1845
        %v2214 = vunpack.c.l.b16 %v1846
        %v2215 = vunpack.c.h.b16 %v1846
        %v2216 = vunpack.c.l.b16 %v1847
        %v2217 = vunpack.c.h.b16 %v1847
        %v2218 = vunpack.c.l.b16 %v1848
        %v2219 = vunpack.c.h.b16 %v1848
        %v2220 = vunpack.c.l.b16 %v1849
        %v2221 = vunpack.c.h.b16 %v1849
        %v2222 = vunpack.c.l.b16 %v1850
        %v2223 = vunpack.c.h.b16 %v1850
        %v2224 = vunpack.c.l.b16 %v1851
        %v2225 = vunpack.c.h.b16 %v1851
        %v2226 = vunpack.c.l.b16 %v1852
        %v2227 = vunpack.c.h.b16 %v1852
        %v2228 = vunpack.c.l.b16 %v1853
        %v2229 = vunpack.c.h.b16 %v1853
        %v2230 = vunpack.c.l.b16 %v1854
        %v2231 = vunpack.c.h.b16 %v1854
        %v2232 = vunpack.c.l.b16 %v1855
        %v2233 = vunpack.c.h.b16 %v1855
        %v2234 = vunpack.c.l.b16 %v1856
        %v2235 = vunpack.c.h.b16 %v1856
        %v2236 = vunpack.c.l.b16 %v1857
        %v2237 = vunpack.c.h.b16 %v1857
        %v2238 = vunpack.c.l.b16 %v1858
        %v2239 = vunpack.c.h.b16 %v1858
        %v2240 = vunpack.c.l.b16 %v1859
        %v2241 = vunpack.c.h.b16 %v1859
        %v2242 = vunpack.c.l.b16 %v1860
        %v2243 = vunpack.c.h.b16 %v1860
        %v2244 = vunpack.c.l.b16 %v1861
        %v2245 = vunpack.c.h.b16 %v1861
        %v2246 = vunpack.c.l.b16 %v1862
        %v2247 = vunpack.c.h.b16 %v1862
        %v2248 = vunpack.c.l.b16 %v1863
        %v2249 = vunpack.c.h.b16 %v1863
        %v2250 = vunpack.c.l.b16 %v1864
        %v2251 = vunpack.c.h.b16 %v1864
        %v2252 = vunpack.c.l.b16 %v1865
        %v2253 = vunpack.c.h.b16 %v1865
        %v2254 = vunpack.c.l.b16 %v1866
        %v2255 = vunpack.c.h.b16 %v1866
        %v2256 = vunpack.c.l.b16 %v1867
        %v2257 = vunpack.c.h.b16 %v1867
        %v2258 = vunpack.c.l.b16 %v1868
        %v2259 = vunpack.c.h.b16 %v1868
        %v2260 = vunpack.c.l.b16 %v1869
        %v2261 = vunpack.c.h.b16 %v1869
        %v2262 = vunpack.c.l.b16 %v1870
        %v2263 = vunpack.c.h.b16 %v1870
        %v2264 = vunpack.c.l.b16 %v1871
        %v2265 = vunpack.c.h.b16 %v1871
        %v2266 = vunpack.c.l.b16 %v1872
        %v2267 = vunpack.c.h.b16 %v1872
        %v2268 = vunpack.c.l.b16 %v1873
        %v2269 = vunpack.c.h.b16 %v1873
        %v2270 = vunpack.c.l.b16 %v1874
        %v2271 = vunpack.c.h.b16 %v1874
        %v2272 = vunpack.c.l.b16 %v1875
        %v2273 = vunpack.c.h.b16 %v1875
        %v2274 = vunpack.c.l.b16 %v1876
        %v2275 = vunpack.c.h.b16 %v1876
        %v2276 = vunpack.c.l.b16 %v1877
        %v2277 = vunpack.c.h.b16 %v1877
        %v2278 = vunpack.c.l.b16 %v1878
        %v2279 = vunpack.c.h.b16 %v1878
        %v2280 = vunpack.c.l.b16 %v1879
        %v2281 = vunpack.c.h.b16 %v1879
        %v2282 = vunpack.c.l.b16 %v1880
        %v2283 = vunpack.c.h.b16 %v1880
        %v2284 = vunpack.c.l.b16 %v1881
        %v2285 = vunpack.c.h.b16 %v1881
        %v2286 = vunpack.c.l.b16 %v1882
        %v2287 = vunpack.c.h.b16 %v1882
        %v2288 = vunpack.c.l.b16 %v1883
        %v2289 = vunpack.c.h.b16 %v1883
        %v2290 = vunpack.c.l.b16 %v1884
        %v2291 = vunpack.c.h.b16 %v1884
        %v2292 = vunpack.c.l.b16 %v1885
        %v2293 = vunpack.c.h.b16 %v1885
        %v2294 = vunpack.c.l.b16 %v1886
        %v2295 = vunpack.c.h.b16 %v1886
        %v2296 = vunpack.c.l.b16 %v1887
        %v2297 = vunpack.c.h.b16 %v1887
        %v2298 = vunpack.c.l.b16 %v1888
        %v2299 = vunpack.c.h.b16 %v1888
        %v2300 = vunpack.c.l.b16 %v1889
        %v2301 = vunpack.c.h.b16 %v1889
        %v2302 = vunpack.c.l.b16 %v1890
        %v2303 = vunpack.c.h.b16 %v1890
        %v2304 = vunpack.c.l.b16 %v1891
        %v2305 = vunpack.c.h.b16 %v1891
        %v2306 = vunpack.c.l.b16 %v1892
        %v2307 = vunpack.c.h.b16 %v1892
        %v2308 = vunpack.c.l.b16 %v1893
        %v2309 = vunpack.c.h.b16 %v1893
        %v2310 = vunpack.c.l.b16 %v1894
        %v2311 = vunpack.c.h.b16 %v1894
        %v2312 = vunpack.c.l.b16 %v1895
        %v2313 = vunpack.c.h.b16 %v1895
        %v2314 = vunpack.c.l.b16 %v1896
        %v2315 = vunpack.c.h.b16 %v1896
        %v2316 = vunpack.c.l.b16 %v1897
        %v2317 = vunpack.c.h.b16 %v1897
        %v2318 = vunpack.c.l.b16 %v1898
        %v2319 = vunpack.c.h.b16 %v1898
        %v2320 = vunpack.c.l.b16 %v1899
        %v2321 = vunpack.c.h.b16 %v1899
        %v2322 = vunpack.c.l.b16 %v1900
        %v2323 = vunpack.c.h.b16 %v1900
        %v2324 = vunpack.c.l.b16 %v1901
        %v2325 = vunpack.c.h.b16 %v1901
        %v2326 = vunpack.c.l.b16 %v1902
        %v2327 = vunpack.c.h.b16 %v1902
        %v2328 = vunpack.c.l.b16 %v1903
        %v2329 = vunpack.c.h.b16 %v1903
        %v2330 = vunpack.c.l.b16 %v1904
        %v2331 = vunpack.c.h.b16 %v1904
        %v2332 = vunpack.c.l.b16 %v1905
        %v2333 = vunpack.c.h.b16 %v1905
        %v2334 = vunpack.c.l.b16 %v1906
        %v2335 = vunpack.c.h.b16 %v1906
        %v2336 = vunpack.c.l.b16 %v1907
        %v2337 = vunpack.c.h.b16 %v1907
        %v2338 = vunpack.c.l.b16 %v1908
        %v2339 = vunpack.c.h.b16 %v1908
        %v2340 = vunpack.c.l.b16 %v1909
        %v2341 = vunpack.c.h.b16 %v1909
        %v2342 = vunpack.c.l.b16 %v1910
        %v2343 = vunpack.c.h.b16 %v1910
        %v2344 = vunpack.c.l.b16 %v1911
        %v2345 = vunpack.c.h.b16 %v1911
        %v2346 = vunpack.c.l.b16 %v1912
        %v2347 = vunpack.c.h.b16 %v1912
        %v2348 = vunpack.c.l.b16 %v1913
        %v2349 = vunpack.c.h.b16 %v1913
        %v2350 = vunpack.c.l.b16 %v1914
        %v2351 = vunpack.c.h.b16 %v1914
        %v2352 = vunpack.c.l.b16 %v1915
        %v2353 = vunpack.c.h.b16 %v1915
        %v2354 = vunpack.c.l.b16 %v1916
        %v2355 = vunpack.c.h.b16 %v1916
        %v2356 = vunpack.c.l.b16 %v1917
        %v2357 = vunpack.c.h.b16 %v1917
        %v2358 = vunpack.c.l.b16 %v1918
        %v2359 = vunpack.c.h.b16 %v1918
        %v2360 = vunpack.c.l.b16 %v1919
        %v2361 = vunpack.c.h.b16 %v1919
        %v2362 = vunpack.c.l.b16 %v1920
        %v2363 = vunpack.c.h.b16 %v1920
        %v2364 = vunpack.c.l.b16 %v1921
        %v2365 = vunpack.c.h.b16 %v1921
        %v2366 = vunpack.c.l.b16 %v1922
        %v2367 = vunpack.c.h.b16 %v1922
        %v2368 = vunpack.c.l.b16 %v1923
        %v2369 = vunpack.c.h.b16 %v1923
        %v2370 = vunpack.c.l.b16 %v1924
        %v2371 = vunpack.c.h.b16 %v1924
        %v2372 = vunpack.c.l.b16 %v1925
        %v2373 = vunpack.c.h.b16 %v1925
        %v2374 = vunpack.c.l.b16 %v1926
        %v2375 = vunpack.c.h.b16 %v1926
        %v2376 = vunpack.c.l.b16 %v1927
        %v2377 = vunpack.c.h.b16 %v1927
        %v2378 = vunpack.c.l.b16 %v1928
        %v2379 = vunpack.c.h.b16 %v1928
        %v2380 = vunpack.c.l.b16 %v1929
        %v2381 = vunpack.c.h.b16 %v1929
        %v2382 = vunpack.c.l.b16 %v1930
        %v2383 = vunpack.c.h.b16 %v1930
        %v2384 = vunpack.c.l.b16 %v1931
        %v2385 = vunpack.c.h.b16 %v1931
        %v2386 = vunpack.c.l.b16 %v1932
        %v2387 = vunpack.c.h.b16 %v1932
        %v2388 = vpack.c.b16 %v2152, %v2148
        %v2389 = vpack.c.b16 %v2153, %v2149
        %v2390 = vpack.c.b16 %v2154, %v2150
        %v2391 = vpack.c.b16 %v2155, %v2151
        %v2392 = vpack.c.b16 %v2160, %v2156
        %v2393 = vpack.c.b16 %v2161, %v2157
        %v2394 = vpack.c.b16 %v2162, %v2158
        %v2395 = vpack.c.b16 %v2163, %v2159
        %v2396 = vpack.c.b16 %v2168, %v2164
        %v2397 = vpack.c.b16 %v2169, %v2165
        %v2398 = vpack.c.b16 %v2170, %v2166
        %v2399 = vpack.c.b16 %v2171, %v2167
        %v2400 = vpack.c.b16 %v2176, %v2172
        %v2401 = vpack.c.b16 %v2177, %v2173
        %v2402 = vpack.c.b16 %v2178, %v2174
        %v2403 = vpack.c.b16 %v2179, %v2175
        %v2404 = vpack.c.b16 %v2184, %v2180
        %v2405 = vpack.c.b16 %v2185, %v2181
        %v2406 = vpack.c.b16 %v2186, %v2182
        %v2407 = vpack.c.b16 %v2187, %v2183
        %v2408 = vpack.c.b16 %v2192, %v2188
        %v2409 = vpack.c.b16 %v2193, %v2189
        %v2410 = vpack.c.b16 %v2194, %v2190
        %v2411 = vpack.c.b16 %v2195, %v2191
        %v2412 = vpack.c.b16 %v2200, %v2196
        %v2413 = vpack.c.b16 %v2201, %v2197
        %v2414 = vpack.c.b16 %v2202, %v2198
        %v2415 = vpack.c.b16 %v2203, %v2199
        %v2416 = vpack.c.b16 %v2208, %v2204
        %v2417 = vpack.c.b16 %v2209, %v2205
        %v2418 = vpack.c.b16 %v2210, %v2206
        %v2419 = vpack.c.b16 %v2211, %v2207
        %v2420 = vpack.c.b16 %v2216, %v2212
        %v2421 = vpack.c.b16 %v2217, %v2213
        %v2422 = vpack.c.b16 %v2218, %v2214
        %v2423 = vpack.c.b16 %v2219, %v2215
        %v2424 = vpack.c.b16 %v2224, %v2220
        %v2425 = vpack.c.b16 %v2225, %v2221
        %v2426 = vpack.c.b16 %v2226, %v2222
        %v2427 = vpack.c.b16 %v2227, %v2223
        %v2428 = vpack.c.b16 %v2232, %v2228
        %v2429 = vpack.c.b16 %v2233, %v2229
        %v2430 = vpack.c.b16 %v2234, %v2230
        %v2431 = vpack.c.b16 %v2235, %v2231
        %v2432 = vpack.c.b16 %v2240, %v2236
        %v2433 = vpack.c.b16 %v2241, %v2237
        %v2434 = vpack.c.b16 %v2242, %v2238
        %v2435 = vpack.c.b16 %v2243, %v2239
        %v2436 = vpack.c.b16 %v2248, %v2244
        %v2437 = vpack.c.b16 %v2249, %v2245
        %v2438 = vpack.c.b16 %v2250, %v2246
        %v2439 = vpack.c.b16 %v2251, %v2247
        %v2440 = vpack.c.b16 %v2256, %v2252
        %v2441 = vpack.c.b16 %v2257, %v2253
        %v2442 = vpack.c.b16 %v2258, %v2254
        %v2443 = vpack.c.b16 %v2259, %v2255
        %v2444 = vpack.c.b16 %v2264, %v2260
        %v2445 = vpack.c.b16 %v2265, %v2261
        %v2446 = vpack.c.b16 %v2266, %v2262
        %v2447 = vpack.c.b16 %v2267, %v2263
        %v2448 = vpack.c.b16 %v2272, %v2268
        %v2449 = vpack.c.b16 %v2273, %v2269
        %v2450 = vpack.c.b16 %v2274, %v2270
        %v2451 = vpack.c.b16 %v2275, %v2271
        %v2452 = vpack.c.b16 %v2280, %v2276
        %v2453 = vpack.c.b16 %v2281, %v2277
        %v2454 = vpack.c.b16 %v2282, %v2278
        %v2455 = vpack.c.b16 %v2283, %v2279
        %v2456 = vpack.c.b16 %v2288, %v2284
        %v2457 = vpack.c.b16 %v2289, %v2285
        %v2458 = vpack.c.b16 %v2290, %v2286
        %v2459 = vpack.c.b16 %v2291, %v2287
        %v2460 = vpack.c.b16 %v2296, %v2292
        %v2461 = vpack.c.b16 %v2297, %v2293
        %v2462 = vpack.c.b16 %v2298, %v2294
        %v2463 = vpack.c.b16 %v2299, %v2295
        %v2464 = vpack.c.b16 %v2304, %v2300
        %v2465 = vpack.c.b16 %v2305, %v2301
        %v2466 = vpack.c.b16 %v2306, %v2302
        %v2467 = vpack.c.b16 %v2307, %v2303
        %v2468 = vpack.c.b16 %v2312, %v2308
        %v2469 = vpack.c.b16 %v2313, %v2309
        %v2470 = vpack.c.b16 %v2314, %v2310
        %v2471 = vpack.c.b16 %v2315, %v2311
        %v2472 = vpack.c.b16 %v2320, %v2316
        %v2473 = vpack.c.b16 %v2321, %v2317
        %v2474 = vpack.c.b16 %v2322, %v2318
        %v2475 = vpack.c.b16 %v2323, %v2319
        %v2476 = vpack.c.b16 %v2328, %v2324
        %v2477 = vpack.c.b16 %v2329, %v2325
        %v2478 = vpack.c.b16 %v2330, %v2326
        %v2479 = vpack.c.b16 %v2331, %v2327
        %v2480 = vpack.c.b16 %v2336, %v2332
        %v2481 = vpack.c.b16 %v2337, %v2333
        %v2482 = vpack.c.b16 %v2338, %v2334
        %v2483 = vpack.c.b16 %v2339, %v2335
        %v2484 = vpack.c.b16 %v2344, %v2340
        %v2485 = vpack.c.b16 %v2345, %v2341
        %v2486 = vpack.c.b16 %v2346, %v2342
        %v2487 = vpack.c.b16 %v2347, %v2343
        %v2488 = vpack.c.b16 %v2352, %v2348
        %v2489 = vpack.c.b16 %v2353, %v2349
        %v2490 = vpack.c.b16 %v2354, %v2350
        %v2491 = vpack.c.b16 %v2355, %v2351
        %v2492 = vpack.c.b16 %v2360, %v2356
        %v2493 = vpack.c.b16 %v2361, %v2357
        %v2494 = vpack.c.b16 %v2362, %v2358
        %v2495 = vpack.c.b16 %v2363, %v2359
        %v2496 = vpack.c.b16 %v2368, %v2364
        %v2497 = vpack.c.b16 %v2369, %v2365
        %v2498 = vpack.c.b16 %v2370, %v2366
        %v2499 = vpack.c.b16 %v2371, %v2367
        %v2500 = vpack.c.b16 %v2376, %v2372
        %v2501 = vpack.c.b16 %v2377, %v2373
        %v2502 = vpack.c.b16 %v2378, %v2374
        %v2503 = vpack.c.b16 %v2379, %v2375
        %v2504 = vpack.c.b16 %v2384, %v2380
        %v2505 = vpack.c.b16 %v2385, %v2381
        %v2506 = vpack.c.b16 %v2386, %v2382
        %v2507 = vpack.c.b16 %v2387, %v2383
        %vm2628 = vcmask 785408
        %v2630 = vsel %vm2628, %v1996, 0
        %v2633 = vsel %vm2628, %v2000, 0
        %v2636 = vsel %vm2628, %v2004, 0
        %v2639 = vsel %vm2628, %v2008, 0
        %v2642 = vsel %vm2628, %v2012, 0
        %2644 = vmatprep.subr.bf16.mxu0 %v2417
        %2645 = vmatpush1.bf16.msra.mxu0 %v2416
        %2646 = vmatprep.subr.bf16.mxu0 %v2413
        %2647 = vmatpush1.bf16.msra.mxu0 %v2412
        %2648 = vmatprep.subr.bf16.mxu0 %v2409
        %2649 = vmatpush1.bf16.msra.mxu0 %v2408
        %2650 = vmatprep.subr.bf16.mxu0 %v2405
        %2651 = vmatpush1.bf16.msra.mxu0 %v2404
        %2652 = vmatprep.subr.bf16.mxu0 %v2401
        %2653 = vmatpush1.bf16.msra.mxu0 %v2400
        %2654 = vmatprep.subr.bf16.mxu0 %v2397
        %2655 = vmatpush1.bf16.msra.mxu0 %v2396
        %2656 = vmatprep.subr.bf16.mxu0 %v2393
        %2657 = vmatpush1.bf16.msra.mxu0 %v2392
        %2658 = vmatprep.subr.bf16.mxu0 %v2389
        %2659 = vmatpush1.bf16.msra.mxu0 %v2388
        %2660 = vmatprep.subr.bf16.mxu0 %v2449
        %2661 = vmatpush2.bf16.msra.mxu0 %v2448
        %2662 = vmatprep.subr.bf16.mxu0 %v2445
        %2663 = vmatpush2.bf16.msra.mxu0 %v2444
        %2664 = vmatprep.subr.bf16.mxu0 %v2441
        %2665 = vmatpush2.bf16.msra.mxu0 %v2440
        %2666 = vmatprep.subr.bf16.mxu0 %v2437
        %2667 = vmatpush2.bf16.msra.mxu0 %v2436
        %2668 = vmatprep.subr.bf16.mxu0 %v2433
        %2669 = vmatpush2.bf16.msra.mxu0 %v2432
        %2670 = vmatprep.subr.bf16.mxu0 %v2429
        %2671 = vmatpush2.bf16.msra.mxu0 %v2428
        %2672 = vmatprep.subr.bf16.mxu0 %v2425
        %2673 = vmatpush2.bf16.msra.mxu0 %v2424
        %2674 = vmatprep.subr.bf16.mxu0 %v2421
        %2675 = vmatpush2.bf16.msra.mxu0 %v2420
        %2676 = vmatprep.mubr.bf16.mxu0 %v1994
        %2677 = vmatmul.mubr.bf16.gmra.mxu0 %v1993
        %v2678 = vpop.f32.mrf.mxu0
        %v2679 = vadd.f32 0.0, %v2678
        %v2680 = vpop.f32.mrf.mxu0
        %v2681 = vadd.f32 0.0, %v2680
        %v2682 = vpop.f32.mrf.mxu0
        %v2683 = vadd.f32 0.0, %v2682
        %v2684 = vpop.f32.mrf.mxu0
        %v2685 = vadd.f32 0.0, %v2684
        %2686 = vmatprep.mubr.bf16.mxu0 %v1998
        %2687 = vmatmul.mubr.bf16.gmra.mxu0 %v1997
        %v2688 = vpop.f32.mrf.mxu0
        %v2689 = vadd.f32 0.0, %v2688
        %v2690 = vpop.f32.mrf.mxu0
        %v2691 = vadd.f32 0.0, %v2690
        %v2692 = vpop.f32.mrf.mxu0
        %v2693 = vadd.f32 0.0, %v2692
        %v2694 = vpop.f32.mrf.mxu0
        %v2695 = vadd.f32 0.0, %v2694
        %2696 = vmatprep.mubr.bf16.mxu0 %v2002
        %2697 = vmatmul.mubr.bf16.gmra.mxu0 %v2001
        %v2698 = vpop.f32.mrf.mxu0
        %v2699 = vadd.f32 0.0, %v2698
        %v2700 = vpop.f32.mrf.mxu0
        %v2701 = vadd.f32 0.0, %v2700
        %v2702 = vpop.f32.mrf.mxu0
        %v2703 = vadd.f32 0.0, %v2702
        %v2704 = vpop.f32.mrf.mxu0
        %v2705 = vadd.f32 0.0, %v2704
        %2706 = vmatprep.mubr.bf16.mxu0 %v2006
        %2707 = vmatmul.mubr.bf16.gmra.mxu0 %v2005
        %v2708 = vpop.f32.mrf.mxu0
        %v2709 = vadd.f32 0.0, %v2708
        %v2710 = vpop.f32.mrf.mxu0
        %v2711 = vadd.f32 0.0, %v2710
        %v2712 = vpop.f32.mrf.mxu0
        %v2713 = vadd.f32 0.0, %v2712
        %v2714 = vpop.f32.mrf.mxu0
        %v2715 = vadd.f32 0.0, %v2714
        %2716 = vmatprep.mubr.bf16.mxu0 %v2010
        %2717 = vmatmul.mubr.bf16.gmra.mxu0 %v2009
        %v2718 = vpop.f32.mrf.mxu0
        %v2719 = vadd.f32 0.0, %v2718
        %v2720 = vpop.f32.mrf.mxu0
        %v2721 = vadd.f32 0.0, %v2720
        %v2722 = vpop.f32.mrf.mxu0
        %v2723 = vadd.f32 0.0, %v2722
        %v2724 = vpop.f32.mrf.mxu0
        %v2725 = vadd.f32 0.0, %v2724
        %2726 = vdwg.mxu0
        %2727 = vmatprep.subr.bf16.mxu0 %v2481
        %2728 = vmatpush1.bf16.msra.mxu0 %v2480
        %2729 = vmatprep.subr.bf16.mxu0 %v2477
        %2730 = vmatpush1.bf16.msra.mxu0 %v2476
        %2731 = vmatprep.subr.bf16.mxu0 %v2473
        %2732 = vmatpush1.bf16.msra.mxu0 %v2472
        %2733 = vmatprep.subr.bf16.mxu0 %v2469
        %2734 = vmatpush1.bf16.msra.mxu0 %v2468
        %2735 = vmatprep.subr.bf16.mxu0 %v2465
        %2736 = vmatpush1.bf16.msra.mxu0 %v2464
        %2737 = vmatprep.subr.bf16.mxu0 %v2461
        %2738 = vmatpush1.bf16.msra.mxu0 %v2460
        %2739 = vmatprep.subr.bf16.mxu0 %v2457
        %2740 = vmatpush1.bf16.msra.mxu0 %v2456
        %2741 = vmatprep.subr.bf16.mxu0 %v2453
        %2742 = vmatpush1.bf16.msra.mxu0 %v2452
        %2743 = vmatprep.subr.bf16.mxu0 0
        %2744 = vmatpush2.bf16.msra.mxu0 0
        %2745 = vmatprep.subr.bf16.mxu0 0
        %2746 = vmatpush2.bf16.msra.mxu0 0
        %2747 = vmatprep.subr.bf16.mxu0 %v2505
        %2748 = vmatpush2.bf16.msra.mxu0 %v2504
        %2749 = vmatprep.subr.bf16.mxu0 %v2501
        %2750 = vmatpush2.bf16.msra.mxu0 %v2500
        %2751 = vmatprep.subr.bf16.mxu0 %v2497
        %2752 = vmatpush2.bf16.msra.mxu0 %v2496
        %2753 = vmatprep.subr.bf16.mxu0 %v2493
        %2754 = vmatpush2.bf16.msra.mxu0 %v2492
        %2755 = vmatprep.subr.bf16.mxu0 %v2489
        %2756 = vmatpush2.bf16.msra.mxu0 %v2488
        %2757 = vmatprep.subr.bf16.mxu0 %v2485
        %2758 = vmatpush2.bf16.msra.mxu0 %v2484
        %2759 = vmatprep.mubr.bf16.mxu0 %v2630
        %2760 = vmatmul.mubr.bf16.gmra.mxu0 %v1995
        %v2761 = vpop.f32.mrf.mxu0
        %v2762 = vadd.f32 %v2679, %v2761
        %v2763 = vpop.f32.mrf.mxu0
        %v2764 = vadd.f32 %v2681, %v2763
        %v2765 = vpop.f32.mrf.mxu0
        %v2766 = vadd.f32 %v2683, %v2765
        %v2767 = vpop.f32.mrf.mxu0
        %v2768 = vadd.f32 %v2685, %v2767
        %2769 = vmatprep.mubr.bf16.mxu0 %v2633
        %2770 = vmatmul.mubr.bf16.gmra.mxu0 %v1999
        %v2771 = vpop.f32.mrf.mxu0
        %v2772 = vadd.f32 %v2689, %v2771
        %v2773 = vpop.f32.mrf.mxu0
        %v2774 = vadd.f32 %v2691, %v2773
        %v2775 = vpop.f32.mrf.mxu0
        %v2776 = vadd.f32 %v2693, %v2775
        %v2777 = vpop.f32.mrf.mxu0
        %v2778 = vadd.f32 %v2695, %v2777
        %2779 = vmatprep.mubr.bf16.mxu0 %v2636
        %2780 = vmatmul.mubr.bf16.gmra.mxu0 %v2003
        %v2781 = vpop.f32.mrf.mxu0
        %v2782 = vadd.f32 %v2699, %v2781
        %v2783 = vpop.f32.mrf.mxu0
        %v2784 = vadd.f32 %v2701, %v2783
        %v2785 = vpop.f32.mrf.mxu0
        %v2786 = vadd.f32 %v2703, %v2785
        %v2787 = vpop.f32.mrf.mxu0
        %v2788 = vadd.f32 %v2705, %v2787
        %2789 = vmatprep.mubr.bf16.mxu0 %v2639
        %2790 = vmatmul.mubr.bf16.gmra.mxu0 %v2007
        %v2791 = vpop.f32.mrf.mxu0
        %v2792 = vadd.f32 %v2709, %v2791
        %v2793 = vpop.f32.mrf.mxu0
        %v2794 = vadd.f32 %v2711, %v2793
        %v2795 = vpop.f32.mrf.mxu0
        %v2796 = vadd.f32 %v2713, %v2795
        %v2797 = vpop.f32.mrf.mxu0
        %v2798 = vadd.f32 %v2715, %v2797
        %2799 = vmatprep.mubr.bf16.mxu0 %v2642
        %2800 = vmatmul.mubr.bf16.gmra.mxu0 %v2011
        %v2801 = vpop.f32.mrf.mxu0
        %v2802 = vadd.f32 %v2719, %v2801
        %v2803 = vpop.f32.mrf.mxu0
        %v2804 = vadd.f32 %v2721, %v2803
        %v2805 = vpop.f32.mrf.mxu0
        %v2806 = vadd.f32 %v2723, %v2805
        %v2807 = vpop.f32.mrf.mxu0
        %v2808 = vadd.f32 %v2725, %v2807
        %2809 = vdwg.mxu0
        %2810 = vmatprep.subr.bf16.mxu0 %v2419
        %2811 = vmatpush1.bf16.msra.mxu0 %v2418
        %2812 = vmatprep.subr.bf16.mxu0 %v2415
        %2813 = vmatpush1.bf16.msra.mxu0 %v2414
        %2814 = vmatprep.subr.bf16.mxu0 %v2411
        %2815 = vmatpush1.bf16.msra.mxu0 %v2410
        %2816 = vmatprep.subr.bf16.mxu0 %v2407
        %2817 = vmatpush1.bf16.msra.mxu0 %v2406
        %2818 = vmatprep.subr.bf16.mxu0 %v2403
        %2819 = vmatpush1.bf16.msra.mxu0 %v2402
        %2820 = vmatprep.subr.bf16.mxu0 %v2399
        %2821 = vmatpush1.bf16.msra.mxu0 %v2398
        %2822 = vmatprep.subr.bf16.mxu0 %v2395
        %2823 = vmatpush1.bf16.msra.mxu0 %v2394
        %2824 = vmatprep.subr.bf16.mxu0 %v2391
        %2825 = vmatpush1.bf16.msra.mxu0 %v2390
        %2826 = vmatprep.subr.bf16.mxu0 %v2451
        %2827 = vmatpush2.bf16.msra.mxu0 %v2450
        %2828 = vmatprep.subr.bf16.mxu0 %v2447
        %2829 = vmatpush2.bf16.msra.mxu0 %v2446
        %2830 = vmatprep.subr.bf16.mxu0 %v2443
        %2831 = vmatpush2.bf16.msra.mxu0 %v2442
        %2832 = vmatprep.subr.bf16.mxu0 %v2439
        %2833 = vmatpush2.bf16.msra.mxu0 %v2438
        %2834 = vmatprep.subr.bf16.mxu0 %v2435
        %2835 = vmatpush2.bf16.msra.mxu0 %v2434
        %2836 = vmatprep.subr.bf16.mxu0 %v2431
        %2837 = vmatpush2.bf16.msra.mxu0 %v2430
        %2838 = vmatprep.subr.bf16.mxu0 %v2427
        %2839 = vmatpush2.bf16.msra.mxu0 %v2426
        %2840 = vmatprep.subr.bf16.mxu0 %v2423
        %2841 = vmatpush2.bf16.msra.mxu0 %v2422
        %2842 = vmatprep.mubr.bf16.mxu0 %v1994
        %2843 = vmatmul.mubr.bf16.gmra.mxu0 %v1993
        %v2844 = vpop.f32.mrf.mxu0
        %v2845 = vadd.f32 0.0, %v2844
        %v2846 = vpop.f32.mrf.mxu0
        %v2847 = vadd.f32 0.0, %v2846
        %v2848 = vpop.f32.mrf.mxu0
        %v2849 = vadd.f32 0.0, %v2848
        %v2850 = vpop.f32.mrf.mxu0
        %v2851 = vadd.f32 0.0, %v2850
        %2852 = vmatprep.mubr.bf16.mxu0 %v1998
        %2853 = vmatmul.mubr.bf16.gmra.mxu0 %v1997
        %v2854 = vpop.f32.mrf.mxu0
        %v2855 = vadd.f32 0.0, %v2854
        %v2856 = vpop.f32.mrf.mxu0
        %v2857 = vadd.f32 0.0, %v2856
        %v2858 = vpop.f32.mrf.mxu0
        %v2859 = vadd.f32 0.0, %v2858
        %v2860 = vpop.f32.mrf.mxu0
        %v2861 = vadd.f32 0.0, %v2860
        %2862 = vmatprep.mubr.bf16.mxu0 %v2002
        %2863 = vmatmul.mubr.bf16.gmra.mxu0 %v2001
        %v2864 = vpop.f32.mrf.mxu0
        %v2865 = vadd.f32 0.0, %v2864
        %v2866 = vpop.f32.mrf.mxu0
        %v2867 = vadd.f32 0.0, %v2866
        %v2868 = vpop.f32.mrf.mxu0
        %v2869 = vadd.f32 0.0, %v2868
        %v2870 = vpop.f32.mrf.mxu0
        %v2871 = vadd.f32 0.0, %v2870
        %2872 = vmatprep.mubr.bf16.mxu0 %v2006
        %2873 = vmatmul.mubr.bf16.gmra.mxu0 %v2005
        %v2874 = vpop.f32.mrf.mxu0
        %v2875 = vadd.f32 0.0, %v2874
        %v2876 = vpop.f32.mrf.mxu0
        %v2877 = vadd.f32 0.0, %v2876
        %v2878 = vpop.f32.mrf.mxu0
        %v2879 = vadd.f32 0.0, %v2878
        %v2880 = vpop.f32.mrf.mxu0
        %v2881 = vadd.f32 0.0, %v2880
        %2882 = vmatprep.mubr.bf16.mxu0 %v2010
        %2883 = vmatmul.mubr.bf16.gmra.mxu0 %v2009
        %v2884 = vpop.f32.mrf.mxu0
        %v2885 = vadd.f32 0.0, %v2884
        %v2886 = vpop.f32.mrf.mxu0
        %v2887 = vadd.f32 0.0, %v2886
        %v2888 = vpop.f32.mrf.mxu0
        %v2889 = vadd.f32 0.0, %v2888
        %v2890 = vpop.f32.mrf.mxu0
        %v2891 = vadd.f32 0.0, %v2890
        %2892 = vdwg.mxu0
        %2893 = vmatprep.subr.bf16.mxu0 %v2483
        %2894 = vmatpush1.bf16.msra.mxu0 %v2482
        %2895 = vmatprep.subr.bf16.mxu0 %v2479
        %2896 = vmatpush1.bf16.msra.mxu0 %v2478
        %2897 = vmatprep.subr.bf16.mxu0 %v2475
        %2898 = vmatpush1.bf16.msra.mxu0 %v2474
        %2899 = vmatprep.subr.bf16.mxu0 %v2471
        %2900 = vmatpush1.bf16.msra.mxu0 %v2470
        %2901 = vmatprep.subr.bf16.mxu0 %v2467
        %2902 = vmatpush1.bf16.msra.mxu0 %v2466
        %2903 = vmatprep.subr.bf16.mxu0 %v2463
        %2904 = vmatpush1.bf16.msra.mxu0 %v2462
        %2905 = vmatprep.subr.bf16.mxu0 %v2459
        %2906 = vmatpush1.bf16.msra.mxu0 %v2458
        %2907 = vmatprep.subr.bf16.mxu0 %v2455
        %2908 = vmatpush1.bf16.msra.mxu0 %v2454
        %2909 = vmatprep.subr.bf16.mxu0 0
        %2910 = vmatpush2.bf16.msra.mxu0 0
        %2911 = vmatprep.subr.bf16.mxu0 0
        %2912 = vmatpush2.bf16.msra.mxu0 0
        %2913 = vmatprep.subr.bf16.mxu0 %v2507
        %2914 = vmatpush2.bf16.msra.mxu0 %v2506
        %2915 = vmatprep.subr.bf16.mxu0 %v2503
        %2916 = vmatpush2.bf16.msra.mxu0 %v2502
        %2917 = vmatprep.subr.bf16.mxu0 %v2499
        %2918 = vmatpush2.bf16.msra.mxu0 %v2498
        %2919 = vmatprep.subr.bf16.mxu0 %v2495
        %2920 = vmatpush2.bf16.msra.mxu0 %v2494
        %2921 = vmatprep.subr.bf16.mxu0 %v2491
        %2922 = vmatpush2.bf16.msra.mxu0 %v2490
        %2923 = vmatprep.subr.bf16.mxu0 %v2487
        %2924 = vmatpush2.bf16.msra.mxu0 %v2486
        %2925 = vmatprep.mubr.bf16.mxu0 %v2630
        %2926 = vmatmul.mubr.bf16.gmra.mxu0 %v1995
        %v2927 = vpop.f32.mrf.mxu0
        %v2928 = vadd.f32 %v2845, %v2927
        %v2929 = vpop.f32.mrf.mxu0
        %v2930 = vadd.f32 %v2847, %v2929
        %v2931 = vpop.f32.mrf.mxu0
        %v2932 = vadd.f32 %v2849, %v2931
        %v2933 = vpop.f32.mrf.mxu0
        %v2934 = vadd.f32 %v2851, %v2933
        %2935 = vmatprep.mubr.bf16.mxu0 %v2633
        %2936 = vmatmul.mubr.bf16.gmra.mxu0 %v1999
        %v2937 = vpop.f32.mrf.mxu0
        %v2938 = vadd.f32 %v2855, %v2937
        %v2939 = vpop.f32.mrf.mxu0
        %v2940 = vadd.f32 %v2857, %v2939
        %v2941 = vpop.f32.mrf.mxu0
        %v2942 = vadd.f32 %v2859, %v2941
        %v2943 = vpop.f32.mrf.mxu0
        %v2944 = vadd.f32 %v2861, %v2943
        %2945 = vmatprep.mubr.bf16.mxu0 %v2636
        %2946 = vmatmul.mubr.bf16.gmra.mxu0 %v2003
        %v2947 = vpop.f32.mrf.mxu0
        %v2948 = vadd.f32 %v2865, %v2947
        %v2949 = vpop.f32.mrf.mxu0
        %v2950 = vadd.f32 %v2867, %v2949
        %v2951 = vpop.f32.mrf.mxu0
        %v2952 = vadd.f32 %v2869, %v2951
        %v2953 = vpop.f32.mrf.mxu0
        %v2954 = vadd.f32 %v2871, %v2953
        %2955 = vmatprep.mubr.bf16.mxu0 %v2639
        %2956 = vmatmul.mubr.bf16.gmra.mxu0 %v2007
        %v2957 = vpop.f32.mrf.mxu0
        %v2958 = vadd.f32 %v2875, %v2957
        %v2959 = vpop.f32.mrf.mxu0
        %v2960 = vadd.f32 %v2877, %v2959
        %v2961 = vpop.f32.mrf.mxu0
        %v2962 = vadd.f32 %v2879, %v2961
        %v2963 = vpop.f32.mrf.mxu0
        %v2964 = vadd.f32 %v2881, %v2963
        %2965 = vmatprep.mubr.bf16.mxu0 %v2642
        %2966 = vmatmul.mubr.bf16.gmra.mxu0 %v2011
        %v2967 = vpop.f32.mrf.mxu0
        %v2968 = vadd.f32 %v2885, %v2967
        %v2969 = vpop.f32.mrf.mxu0
        %v2970 = vadd.f32 %v2887, %v2969
        %v2971 = vpop.f32.mrf.mxu0
        %v2972 = vadd.f32 %v2889, %v2971
        %v2973 = vpop.f32.mrf.mxu0
        %v2974 = vadd.f32 %v2891, %v2973
        %2975 = vdwg.mxu0
        %s2976 = smul.u32 %s18, 512
        %v2977 = vlaneseq
        %v2978 = vand.u32 %v2977, 127
        %v2979 = vadd.s32 %v2978, 128
        %v2980 = vadd.s32 %v2978, 256
        %v2981 = vadd.s32 %v2978, 384
        %v2982 = vstv %s2976
        %v2983 = vadd.s32 %v2982, %v2978
        %v2984 = vadd.s32 %v2982, %v2979
        %v2985 = vadd.s32 %v2982, %v2980
        %v2986 = vadd.s32 %v2982, %v2981
        %vm2987 = vcmp.lt.s32.totalorder %v2983, 784
        %vm2988 = vcmp.lt.s32.totalorder %v2984, 784
        %vm2989 = vcmp.lt.s32.totalorder %v2985, 784
        %vm2990 = vcmp.lt.s32.totalorder %v2986, 784
        %v2991 = vsel %vm2987, 1, 0
        %v2992 = vsel %vm2988, 1, 0
        %v2993 = vsel %vm2989, 1, 0
        %v2994 = vsel %vm2990, 1, 0
        %vm2995 = vcmp.eq.s32.totalorder %v2991, 1
        %vm2996 = vcmp.eq.s32.totalorder %v2992, 1
        %vm2997 = vcmp.eq.s32.totalorder %v2993, 1
        %vm2998 = vcmp.eq.s32.totalorder %v2994, 1
        %v2999 = vsel %vm2995, %v2762, 0.0
        %v3000 = vsel %vm2996, %v2764, 0.0
        %v3001 = vsel %vm2997, %v2928, 0.0
        %v3002 = vsel %vm2998, %v2930, 0.0
        %v3003 = vsel %vm2995, %v2766, 0.0
        %v3004 = vsel %vm2996, %v2768, 0.0
        %v3005 = vsel %vm2997, %v2932, 0.0
        %v3006 = vsel %vm2998, %v2934, 0.0
        %v3007 = vsel %vm2995, %v2772, 0.0
        %v3008 = vsel %vm2996, %v2774, 0.0
        %v3009 = vsel %vm2997, %v2938, 0.0
        %v3010 = vsel %vm2998, %v2940, 0.0
        %v3011 = vsel %vm2995, %v2776, 0.0
        %v3012 = vsel %vm2996, %v2778, 0.0
        %v3013 = vsel %vm2997, %v2942, 0.0
        %v3014 = vsel %vm2998, %v2944, 0.0
        %v3015 = vsel %vm2995, %v2782, 0.0
        %v3016 = vsel %vm2996, %v2784, 0.0
        %v3017 = vsel %vm2997, %v2948, 0.0
        %v3018 = vsel %vm2998, %v2950, 0.0
        %v3019 = vsel %vm2995, %v2786, 0.0
        %v3020 = vsel %vm2996, %v2788, 0.0
        %v3021 = vsel %vm2997, %v2952, 0.0
        %v3022 = vsel %vm2998, %v2954, 0.0
        %v3023 = vsel %vm2995, %v2792, 0.0
        %v3024 = vsel %vm2996, %v2794, 0.0
        %v3025 = vsel %vm2997, %v2958, 0.0
        %v3026 = vsel %vm2998, %v2960, 0.0
        %v3027 = vsel %vm2995, %v2796, 0.0
        %v3028 = vsel %vm2996, %v2798, 0.0
        %v3029 = vsel %vm2997, %v2962, 0.0
        %v3030 = vsel %vm2998, %v2964, 0.0
        %v3031 = vsel %vm2995, %v2802, 0.0
        %v3032 = vsel %vm2996, %v2804, 0.0
        %v3033 = vsel %vm2997, %v2968, 0.0
        %v3034 = vsel %vm2998, %v2970, 0.0
        %v3035 = vsel %vm2995, %v2806, 0.0
        %v3036 = vsel %vm2996, %v2808, 0.0
        %v3037 = vsel %vm2997, %v2972, 0.0
        %v3038 = vsel %vm2998, %v2974, 0.0
        %v3039 = vld [vmem:[#allocation4] sm:$0xff]
        %v3040 = vld [vmem:[#allocation4 + $0x8] sm:$0xff]
        %v3041 = vld [vmem:[#allocation4 + $0x10] sm:$0xff]
        %v3042 = vld [vmem:[#allocation4 + $0x18] sm:$0xff]
        %v3043 = vld [vmem:[#allocation4 + $0x20] sm:$0xff]
        %v3044 = vld [vmem:[#allocation4 + $0x28] sm:$0xff]
        %v3045 = vld [vmem:[#allocation4 + $0x30] sm:$0xff]
        %v3046 = vld [vmem:[#allocation4 + $0x38] sm:$0xff]
        %v3047 = vld [vmem:[#allocation4 + $0x40] sm:$0xff]
        %v3048 = vld [vmem:[#allocation4 + $0x48] sm:$0xff]
        %v3049 = vadd.f32 %v2999, %v3000
        %v3050 = vadd.f32 %v3049, %v3001
        %v3051 = vadd.f32 %v3050, %v3002
        %3052 = vadd.xlane.f32.xlu0 %v3051
        %v3053 = vpop.xlane.xlu0 %3052
        %v3054 = vadd.f32 %v3003, %v3004
        %v3055 = vadd.f32 %v3054, %v3005
        %v3056 = vadd.f32 %v3055, %v3006
        %3057 = vadd.xlane.f32.xlu0 %v3056
        %v3058 = vpop.xlane.xlu0 %3057
        %v3059 = vadd.f32 %v3007, %v3008
        %v3060 = vadd.f32 %v3059, %v3009
        %v3061 = vadd.f32 %v3060, %v3010
        %3062 = vadd.xlane.f32.xlu0 %v3061
        %v3063 = vpop.xlane.xlu0 %3062
        %v3064 = vadd.f32 %v3011, %v3012
        %v3065 = vadd.f32 %v3064, %v3013
        %v3066 = vadd.f32 %v3065, %v3014
        %3067 = vadd.xlane.f32.xlu0 %v3066
        %v3068 = vpop.xlane.xlu0 %3067
        %v3069 = vadd.f32 %v3015, %v3016
        %v3070 = vadd.f32 %v3069, %v3017
        %v3071 = vadd.f32 %v3070, %v3018
        %3072 = vadd.xlane.f32.xlu0 %v3071
        %v3073 = vpop.xlane.xlu0 %3072
        %v3074 = vadd.f32 %v3019, %v3020
        %v3075 = vadd.f32 %v3074, %v3021
        %v3076 = vadd.f32 %v3075, %v3022
        %3077 = vadd.xlane.f32.xlu0 %v3076
        %v3078 = vpop.xlane.xlu0 %3077
        %v3079 = vadd.f32 %v3023, %v3024
        %v3080 = vadd.f32 %v3079, %v3025
        %v3081 = vadd.f32 %v3080, %v3026
        %3082 = vadd.xlane.f32.xlu0 %v3081
        %v3083 = vpop.xlane.xlu0 %3082
        %v3084 = vadd.f32 %v3027, %v3028
        %v3085 = vadd.f32 %v3084, %v3029
        %v3086 = vadd.f32 %v3085, %v3030
        %3087 = vadd.xlane.f32.xlu0 %v3086
        %v3088 = vpop.xlane.xlu0 %3087
        %v3089 = vadd.f32 %v3031, %v3032
        %v3090 = vadd.f32 %v3089, %v3033
        %v3091 = vadd.f32 %v3090, %v3034
        %3092 = vadd.xlane.f32.xlu0 %v3091
        %v3093 = vpop.xlane.xlu0 %3092
        %v3094 = vadd.f32 %v3035, %v3036
        %v3095 = vadd.f32 %v3094, %v3037
        %v3096 = vadd.f32 %v3095, %v3038
        %3097 = vadd.xlane.f32.xlu0 %v3096
        %v3098 = vpop.xlane.xlu0 %3097
        %v3099 = vadd.f32 %v3039, %v3053
        %v3100 = vadd.f32 %v3040, %v3058
        %v3101 = vadd.f32 %v3041, %v3063
        %v3102 = vadd.f32 %v3042, %v3068
        %v3103 = vadd.f32 %v3043, %v3073
        %v3104 = vadd.f32 %v3044, %v3078
        %v3105 = vadd.f32 %v3045, %v3083
        %v3106 = vadd.f32 %v3046, %v3088
        %v3107 = vadd.f32 %v3047, %v3093
        %v3108 = vadd.f32 %v3048, %v3098
        %vm3109 = vcmask 7168
        %3110 = vst.msk [vmem:[#allocation4] sm:$0xff] %vm3109, %v3099
        %3111 = vst.msk [vmem:[#allocation4 + $0x8] sm:$0xff] %vm3109, %v3100
        %3112 = vst.msk [vmem:[#allocation4 + $0x10] sm:$0xff] %vm3109, %v3101
        %3113 = vst.msk [vmem:[#allocation4 + $0x18] sm:$0xff] %vm3109, %v3102
        %3114 = vst.msk [vmem:[#allocation4 + $0x20] sm:$0xff] %vm3109, %v3103
        %3115 = vst.msk [vmem:[#allocation4 + $0x28] sm:$0xff] %vm3109, %v3104
        %3116 = vst.msk [vmem:[#allocation4 + $0x30] sm:$0xff] %vm3109, %v3105
        %3117 = vst.msk [vmem:[#allocation4 + $0x38] sm:$0xff] %vm3109, %v3106
        %3118 = vst.msk [vmem:[#allocation4 + $0x40] sm:$0xff] %vm3109, %v3107
        %3119 = vst.msk [vmem:[#allocation4 + $0x48] sm:$0xff] %vm3109, %v3108
        %v3120 = vld [vmem:[#allocation5] sm:$0xff]
        %v3121 = vld [vmem:[#allocation5 + $0x8] sm:$0xff]
        %v3122 = vld [vmem:[#allocation5 + $0x10] sm:$0xff]
        %v3123 = vld [vmem:[#allocation5 + $0x18] sm:$0xff]
        %v3124 = vld [vmem:[#allocation5 + $0x20] sm:$0xff]
        %v3125 = vld [vmem:[#allocation5 + $0x28] sm:$0xff]
        %v3126 = vld [vmem:[#allocation5 + $0x30] sm:$0xff]
        %v3127 = vld [vmem:[#allocation5 + $0x38] sm:$0xff]
        %v3128 = vld [vmem:[#allocation5 + $0x40] sm:$0xff]
        %v3129 = vld [vmem:[#allocation5 + $0x48] sm:$0xff]
        %v3130 = vmul.f32 %v2999, %v2999
        %v3131 = vmul.f32 %v3000, %v3000
        %v3132 = vmul.f32 %v3001, %v3001
        %v3133 = vmul.f32 %v3002, %v3002
        %v3134 = vmul.f32 %v3003, %v3003
        %v3135 = vmul.f32 %v3004, %v3004
        %v3136 = vmul.f32 %v3005, %v3005
        %v3137 = vmul.f32 %v3006, %v3006
        %v3138 = vmul.f32 %v3007, %v3007
        %v3139 = vmul.f32 %v3008, %v3008
        %v3140 = vmul.f32 %v3009, %v3009
        %v3141 = vmul.f32 %v3010, %v3010
        %v3142 = vmul.f32 %v3011, %v3011
        %v3143 = vmul.f32 %v3012, %v3012
        %v3144 = vmul.f32 %v3013, %v3013
        %v3145 = vmul.f32 %v3014, %v3014
        %v3146 = vmul.f32 %v3015, %v3015
        %v3147 = vmul.f32 %v3016, %v3016
        %v3148 = vmul.f32 %v3017, %v3017
        %v3149 = vmul.f32 %v3018, %v3018
        %v3150 = vmul.f32 %v3019, %v3019
        %v3151 = vmul.f32 %v3020, %v3020
        %v3152 = vmul.f32 %v3021, %v3021
        %v3153 = vmul.f32 %v3022, %v3022
        %v3154 = vmul.f32 %v3023, %v3023
        %v3155 = vmul.f32 %v3024, %v3024
        %v3156 = vmul.f32 %v3025, %v3025
        %v3157 = vmul.f32 %v3026, %v3026
        %v3158 = vmul.f32 %v3027, %v3027
        %v3159 = vmul.f32 %v3028, %v3028
        %v3160 = vmul.f32 %v3029, %v3029
        %v3161 = vmul.f32 %v3030, %v3030
        %v3162 = vmul.f32 %v3031, %v3031
        %v3163 = vmul.f32 %v3032, %v3032
        %v3164 = vmul.f32 %v3033, %v3033
        %v3165 = vmul.f32 %v3034, %v3034
        %v3166 = vmul.f32 %v3035, %v3035
        %v3167 = vmul.f32 %v3036, %v3036
        %v3168 = vmul.f32 %v3037, %v3037
        %v3169 = vmul.f32 %v3038, %v3038
        %v3170 = vadd.f32 %v3130, %v3131
        %v3171 = vadd.f32 %v3170, %v3132
        %v3172 = vadd.f32 %v3171, %v3133
        %3173 = vadd.xlane.f32.xlu0 %v3172
        %v3174 = vpop.xlane.xlu0 %3173
        %v3175 = vadd.f32 %v3134, %v3135
        %v3176 = vadd.f32 %v3175, %v3136
        %v3177 = vadd.f32 %v3176, %v3137
        %3178 = vadd.xlane.f32.xlu0 %v3177
        %v3179 = vpop.xlane.xlu0 %3178
        %v3180 = vadd.f32 %v3138, %v3139
        %v3181 = vadd.f32 %v3180, %v3140
        %v3182 = vadd.f32 %v3181, %v3141
        %3183 = vadd.xlane.f32.xlu0 %v3182
        %v3184 = vpop.xlane.xlu0 %3183
        %v3185 = vadd.f32 %v3142, %v3143
        %v3186 = vadd.f32 %v3185, %v3144
        %v3187 = vadd.f32 %v3186, %v3145
        %3188 = vadd.xlane.f32.xlu0 %v3187
        %v3189 = vpop.xlane.xlu0 %3188
        %v3190 = vadd.f32 %v3146, %v3147
        %v3191 = vadd.f32 %v3190, %v3148
        %v3192 = vadd.f32 %v3191, %v3149
        %3193 = vadd.xlane.f32.xlu0 %v3192
        %v3194 = vpop.xlane.xlu0 %3193
        %v3195 = vadd.f32 %v3150, %v3151
        %v3196 = vadd.f32 %v3195, %v3152
        %v3197 = vadd.f32 %v3196, %v3153
        %3198 = vadd.xlane.f32.xlu0 %v3197
        %v3199 = vpop.xlane.xlu0 %3198
        %v3200 = vadd.f32 %v3154, %v3155
        %v3201 = vadd.f32 %v3200, %v3156
        %v3202 = vadd.f32 %v3201, %v3157
        %3203 = vadd.xlane.f32.xlu0 %v3202
        %v3204 = vpop.xlane.xlu0 %3203
        %v3205 = vadd.f32 %v3158, %v3159
        %v3206 = vadd.f32 %v3205, %v3160
        %v3207 = vadd.f32 %v3206, %v3161
        %3208 = vadd.xlane.f32.xlu0 %v3207
        %v3209 = vpop.xlane.xlu0 %3208
        %v3210 = vadd.f32 %v3162, %v3163
        %v3211 = vadd.f32 %v3210, %v3164
        %v3212 = vadd.f32 %v3211, %v3165
        %3213 = vadd.xlane.f32.xlu0 %v3212
        %v3214 = vpop.xlane.xlu0 %3213
        %v3215 = vadd.f32 %v3166, %v3167
        %v3216 = vadd.f32 %v3215, %v3168
        %v3217 = vadd.f32 %v3216, %v3169
        %3218 = vadd.xlane.f32.xlu0 %v3217
        %v3219 = vpop.xlane.xlu0 %3218
        %v3220 = vadd.f32 %v3120, %v3174
        %v3221 = vadd.f32 %v3121, %v3179
        %v3222 = vadd.f32 %v3122, %v3184
        %v3223 = vadd.f32 %v3123, %v3189
        %v3224 = vadd.f32 %v3124, %v3194
        %v3225 = vadd.f32 %v3125, %v3199
        %v3226 = vadd.f32 %v3126, %v3204
        %v3227 = vadd.f32 %v3127, %v3209
        %v3228 = vadd.f32 %v3128, %v3214
        %v3229 = vadd.f32 %v3129, %v3219
        %3230 = vst.msk [vmem:[#allocation5] sm:$0xff] %vm3109, %v3220
        %3231 = vst.msk [vmem:[#allocation5 + $0x8] sm:$0xff] %vm3109, %v3221
        %3232 = vst.msk [vmem:[#allocation5 + $0x10] sm:$0xff] %vm3109, %v3222
        %3233 = vst.msk [vmem:[#allocation5 + $0x18] sm:$0xff] %vm3109, %v3223
        %3234 = vst.msk [vmem:[#allocation5 + $0x20] sm:$0xff] %vm3109, %v3224
        %3235 = vst.msk [vmem:[#allocation5 + $0x28] sm:$0xff] %vm3109, %v3225
        %3236 = vst.msk [vmem:[#allocation5 + $0x30] sm:$0xff] %vm3109, %v3226
        %3237 = vst.msk [vmem:[#allocation5 + $0x38] sm:$0xff] %vm3109, %v3227
        %3238 = vst.msk [vmem:[#allocation5 + $0x40] sm:$0xff] %vm3109, %v3228
        %3239 = vst.msk [vmem:[#allocation5 + $0x48] sm:$0xff] %vm3109, %v3229
        %s3240 = smul.u32 %s18, 40
        %s3241 = smul.addr %s3240, 8
        %s3242 = scalar_lea.vmem [#allocation3], %s3241
        %3243 = vst [vmem:[%s3242] sm:$0xff] %v2999
        %3244 = vst [vmem:[%s3242 + $0x8] sm:$0xff] %v3000
        %3245 = vst [vmem:[%s3242 + $0x10] sm:$0xff] %v3001
        %3246 = vst [vmem:[%s3242 + $0x18] sm:$0xff] %v3002
        %3247 = vst [vmem:[%s3242 + $0x20] sm:$0xff] %v3003
        %3248 = vst [vmem:[%s3242 + $0x28] sm:$0xff] %v3004
        %3249 = vst [vmem:[%s3242 + $0x30] sm:$0xff] %v3005
        %3250 = vst [vmem:[%s3242 + $0x38] sm:$0xff] %v3006
        %3251 = vst [vmem:[%s3242 + $0x40] sm:$0xff] %v3007
        %3252 = vst [vmem:[%s3242 + $0x48] sm:$0xff] %v3008
        %3253 = vst [vmem:[%s3242 + $0x50] sm:$0xff] %v3009
        %3254 = vst [vmem:[%s3242 + $0x58] sm:$0xff] %v3010
        %3255 = vst [vmem:[%s3242 + $0x60] sm:$0xff] %v3011
        %3256 = vst [vmem:[%s3242 + $0x68] sm:$0xff] %v3012
        %3257 = vst [vmem:[%s3242 + $0x70] sm:$0xff] %v3013
        %3258 = vst [vmem:[%s3242 + $0x78] sm:$0xff] %v3014
        %3259 = vst [vmem:[%s3242 + $0x80] sm:$0xff] %v3015
        %3260 = vst [vmem:[%s3242 + $0x88] sm:$0xff] %v3016
        %3261 = vst [vmem:[%s3242 + $0x90] sm:$0xff] %v3017
        %3262 = vst [vmem:[%s3242 + $0x98] sm:$0xff] %v3018
        %3263 = vst [vmem:[%s3242 + $0xa0] sm:$0xff] %v3019
        %3264 = vst [vmem:[%s3242 + $0xa8] sm:$0xff] %v3020
        %3265 = vst [vmem:[%s3242 + $0xb0] sm:$0xff] %v3021
        %3266 = vst [vmem:[%s3242 + $0xb8] sm:$0xff] %v3022
        %3267 = vst [vmem:[%s3242 + $0xc0] sm:$0xff] %v3023
        %3268 = vst [vmem:[%s3242 + $0xc8] sm:$0xff] %v3024
        %3269 = vst [vmem:[%s3242 + $0xd0] sm:$0xff] %v3025
        %3270 = vst [vmem:[%s3242 + $0xd8] sm:$0xff] %v3026
        %3271 = vst [vmem:[%s3242 + $0xe0] sm:$0xff] %v3027
        %3272 = vst [vmem:[%s3242 + $0xe8] sm:$0xff] %v3028
        %3273 = vst [vmem:[%s3242 + $0xf0] sm:$0xff] %v3029
        %3274 = vst [vmem:[%s3242 + $0xf8] sm:$0xff] %v3030
        %3275 = vst [vmem:[%s3242 + $0x100] sm:$0xff] %v3031
        %3276 = vst [vmem:[%s3242 + $0x108] sm:$0xff] %v3032
        %3277 = vst [vmem:[%s3242 + $0x110] sm:$0xff] %v3033
        %3278 = vst [vmem:[%s3242 + $0x118] sm:$0xff] %v3034
        %3279 = vst [vmem:[%s3242 + $0x120] sm:$0xff] %v3035
        %3280 = vst [vmem:[%s3242 + $0x128] sm:$0xff] %v3036
        %3281 = vst [vmem:[%s3242 + $0x130] sm:$0xff] %v3037
        %3282 = vst [vmem:[%s3242 + $0x138] sm:$0xff] %v3038
        %p3283 = scmp.eq.s32.totalorder %s18, 1
        // Predicated region
        $region119: #{fused_se_conv_bn.1} parent=109 // pred_check
          %p3284 = pneg %p3283
        $region120: #{fused_se_conv_bn.1} parent=109 // pred_check_branch
          %3286 = sbr.rel (%p3284) target = $region122
        $region121: #{fused_se_conv_bn.1} parent=109 // pred_region
          %v3287 = vld [vmem:[#allocation4] sm:$0xff]
          %v3288 = vld [vmem:[#allocation4 + $0x8] sm:$0xff]
          %v3289 = vld [vmem:[#allocation4 + $0x10] sm:$0xff]
          %v3290 = vld [vmem:[#allocation4 + $0x18] sm:$0xff]
          %v3291 = vld [vmem:[#allocation4 + $0x20] sm:$0xff]
          %v3292 = vld [vmem:[#allocation4 + $0x28] sm:$0xff]
          %v3293 = vld [vmem:[#allocation4 + $0x30] sm:$0xff]
          %v3294 = vld [vmem:[#allocation4 + $0x38] sm:$0xff]
          %v3295 = vld [vmem:[#allocation4 + $0x40] sm:$0xff]
          %v3296 = vld [vmem:[#allocation4 + $0x48] sm:$0xff]
          %v3297 = vmul.f32 %v3287, 0.0012755102
          %v3298 = vmul.f32 %v3288, 0.0012755102
          %v3299 = vmul.f32 %v3289, 0.0012755102
          %v3300 = vmul.f32 %v3290, 0.0012755102
          %v3301 = vmul.f32 %v3291, 0.0012755102
          %v3302 = vmul.f32 %v3292, 0.0012755102
          %v3303 = vmul.f32 %v3293, 0.0012755102
          %v3304 = vmul.f32 %v3294, 0.0012755102
          %v3305 = vmul.f32 %v3295, 0.0012755102
          %v3306 = vmul.f32 %v3296, 0.0012755102
          %v3307 = vld [vmem:[#allocation5] sm:$0xff]
          %v3308 = vld [vmem:[#allocation5 + $0x8] sm:$0xff]
          %v3309 = vld [vmem:[#allocation5 + $0x10] sm:$0xff]
          %v3310 = vld [vmem:[#allocation5 + $0x18] sm:$0xff]
          %v3311 = vld [vmem:[#allocation5 + $0x20] sm:$0xff]
          %v3312 = vld [vmem:[#allocation5 + $0x28] sm:$0xff]
          %v3313 = vld [vmem:[#allocation5 + $0x30] sm:$0xff]
          %v3314 = vld [vmem:[#allocation5 + $0x38] sm:$0xff]
          %v3315 = vld [vmem:[#allocation5 + $0x40] sm:$0xff]
          %v3316 = vld [vmem:[#allocation5 + $0x48] sm:$0xff]
          %v3317 = vmul.f32 %v3307, 0.0012755102
          %v3318 = vmul.f32 %v3308, 0.0012755102
          %v3319 = vmul.f32 %v3309, 0.0012755102
          %v3320 = vmul.f32 %v3310, 0.0012755102
          %v3321 = vmul.f32 %v3311, 0.0012755102
          %v3322 = vmul.f32 %v3312, 0.0012755102
          %v3323 = vmul.f32 %v3313, 0.0012755102
          %v3324 = vmul.f32 %v3314, 0.0012755102
          %v3325 = vmul.f32 %v3315, 0.0012755102
          %v3326 = vmul.f32 %v3316, 0.0012755102
          %v3327 = vmul.f32 %v3297, %v3297
          %v3328 = vmul.f32 %v3298, %v3298
          %v3329 = vmul.f32 %v3299, %v3299
          %v3330 = vmul.f32 %v3300, %v3300
          %v3331 = vmul.f32 %v3301, %v3301
          %v3332 = vmul.f32 %v3302, %v3302
          %v3333 = vmul.f32 %v3303, %v3303
          %v3334 = vmul.f32 %v3304, %v3304
          %v3335 = vmul.f32 %v3305, %v3305
          %v3336 = vmul.f32 %v3306, %v3306
          %v3337 = vsub.f32 %v3317, %v3327
          %v3338 = vsub.f32 %v3318, %v3328
          %v3339 = vsub.f32 %v3319, %v3329
          %v3340 = vsub.f32 %v3320, %v3330
          %v3341 = vsub.f32 %v3321, %v3331
          %v3342 = vsub.f32 %v3322, %v3332
          %v3343 = vsub.f32 %v3323, %v3333
          %v3344 = vsub.f32 %v3324, %v3334
          %v3345 = vsub.f32 %v3325, %v3335
          %v3346 = vsub.f32 %v3326, %v3336
          %v3347 = vmax.f32 %v3337, 0.0
          %v3348 = vmax.f32 %v3338, 0.0
          %v3349 = vmax.f32 %v3339, 0.0
          %v3350 = vmax.f32 %v3340, 0.0
          %v3351 = vmax.f32 %v3341, 0.0
          %v3352 = vmax.f32 %v3342, 0.0
          %v3353 = vmax.f32 %v3343, 0.0
          %v3354 = vmax.f32 %v3344, 0.0
          %v3355 = vmax.f32 %v3345, 0.0
          %v3356 = vmax.f32 %v3346, 0.0
          %v3357 = vld [vmem:[%s5] sm:$0xff]
          %v3358 = vld [vmem:[%s5 + $0x8] sm:$0xff]
          %v3359 = vld [vmem:[%s5 + $0x10] sm:$0xff]
          %v3360 = vld [vmem:[%s5 + $0x18] sm:$0xff]
          %v3361 = vld [vmem:[%s5 + $0x20] sm:$0xff]
          %v3362 = vld [vmem:[%s5 + $0x28] sm:$0xff]
          %v3363 = vld [vmem:[%s5 + $0x30] sm:$0xff]
          %v3364 = vld [vmem:[%s5 + $0x38] sm:$0xff]
          %v3365 = vld [vmem:[%s5 + $0x40] sm:$0xff]
          %v3366 = vld [vmem:[%s5 + $0x48] sm:$0xff]
          %v3367 = vadd.f32 %v3347, 0.001
          %v3368 = vadd.f32 %v3348, 0.001
          %v3369 = vadd.f32 %v3349, 0.001
          %v3370 = vadd.f32 %v3350, 0.001
          %v3371 = vadd.f32 %v3351, 0.001
          %v3372 = vadd.f32 %v3352, 0.001
          %v3373 = vadd.f32 %v3353, 0.001
          %v3374 = vadd.f32 %v3354, 0.001
          %v3375 = vadd.f32 %v3355, 0.001
          %v3376 = vadd.f32 %v3356, 0.001
          %v3377 = vrsqrt.pop %v3367
          %v3378 = vrsqrt.pop %v3368
          %v3379 = vrsqrt.pop %v3369
          %v3380 = vrsqrt.pop %v3370
          %v3381 = vrsqrt.pop %v3371
          %v3382 = vrsqrt.pop %v3372
          %v3383 = vrsqrt.pop %v3373
          %v3384 = vrsqrt.pop %v3374
          %v3385 = vrsqrt.pop %v3375
          %v3386 = vrsqrt.pop %v3376
          %v3387 = vmul.f32 %v3357, %v3377
          %v3388 = vmul.f32 %v3358, %v3378
          %v3389 = vmul.f32 %v3359, %v3379
          %v3390 = vmul.f32 %v3360, %v3380
          %v3391 = vmul.f32 %v3361, %v3381
          %v3392 = vmul.f32 %v3362, %v3382
          %v3393 = vmul.f32 %v3363, %v3383
          %v3394 = vmul.f32 %v3364, %v3384
          %v3395 = vmul.f32 %v3365, %v3385
          %v3396 = vmul.f32 %v3366, %v3386
          %v3397 = vld [vmem:[%s6] sm:$0xff]
          %v3398 = vld [vmem:[%s6 + $0x8] sm:$0xff]
          %v3399 = vld [vmem:[%s6 + $0x10] sm:$0xff]
          %v3400 = vld [vmem:[%s6 + $0x18] sm:$0xff]
          %v3401 = vld [vmem:[%s6 + $0x20] sm:$0xff]
          %v3402 = vld [vmem:[%s6 + $0x28] sm:$0xff]
          %v3403 = vld [vmem:[%s6 + $0x30] sm:$0xff]
          %v3404 = vld [vmem:[%s6 + $0x38] sm:$0xff]
          %v3405 = vld [vmem:[%s6 + $0x40] sm:$0xff]
          %v3406 = vld [vmem:[%s6 + $0x48] sm:$0xff]
          %v3407 = vmul.f32 %v3297, %v3387
          %v3408 = vmul.f32 %v3298, %v3388
          %v3409 = vmul.f32 %v3299, %v3389
          %v3410 = vmul.f32 %v3300, %v3390
          %v3411 = vmul.f32 %v3301, %v3391
          %v3412 = vmul.f32 %v3302, %v3392
          %v3413 = vmul.f32 %v3303, %v3393
          %v3414 = vmul.f32 %v3304, %v3394
          %v3415 = vmul.f32 %v3305, %v3395
          %v3416 = vmul.f32 %v3306, %v3396
          %v3417 = vsub.f32 %v3397, %v3407
          %v3418 = vsub.f32 %v3398, %v3408
          %v3419 = vsub.f32 %v3399, %v3409
          %v3420 = vsub.f32 %v3400, %v3410
          %v3421 = vsub.f32 %v3401, %v3411
          %v3422 = vsub.f32 %v3402, %v3412
          %v3423 = vsub.f32 %v3403, %v3413
          %v3424 = vsub.f32 %v3404, %v3414
          %v3425 = vsub.f32 %v3405, %v3415
          %v3426 = vsub.f32 %v3406, %v3416
          %v3427 = vld [vmem:[#allocation3] sm:$0xff]
          %v3428 = vld [vmem:[#allocation3 + $0x8] sm:$0xff]
          %v3429 = vld [vmem:[#allocation3 + $0x10] sm:$0xff]
          %v3430 = vld [vmem:[#allocation3 + $0x18] sm:$0xff]
          %v3431 = vld [vmem:[#allocation3 + $0x20] sm:$0xff]
          %v3432 = vld [vmem:[#allocation3 + $0x28] sm:$0xff]
          %v3433 = vld [vmem:[#allocation3 + $0x30] sm:$0xff]
          %v3434 = vld [vmem:[#allocation3 + $0x38] sm:$0xff]
          %v3435 = vld [vmem:[#allocation3 + $0x40] sm:$0xff]
          %v3436 = vld [vmem:[#allocation3 + $0x48] sm:$0xff]
          %v3437 = vld [vmem:[#allocation3 + $0x50] sm:$0xff]
          %v3438 = vld [vmem:[#allocation3 + $0x58] sm:$0xff]
          %v3439 = vld [vmem:[#allocation3 + $0x60] sm:$0xff]
          %v3440 = vld [vmem:[#allocation3 + $0x68] sm:$0xff]
          %v3441 = vld [vmem:[#allocation3 + $0x70] sm:$0xff]
          %v3442 = vld [vmem:[#allocation3 + $0x78] sm:$0xff]
          %v3443 = vld [vmem:[#allocation3 + $0x80] sm:$0xff]
          %v3444 = vld [vmem:[#allocation3 + $0x88] sm:$0xff]
          %v3445 = vld [vmem:[#allocation3 + $0x90] sm:$0xff]
          %v3446 = vld [vmem:[#allocation3 + $0x98] sm:$0xff]
          %v3447 = vld [vmem:[#allocation3 + $0xa0] sm:$0xff]
          %v3448 = vld [vmem:[#allocation3 + $0xa8] sm:$0xff]
          %v3449 = vld [vmem:[#allocation3 + $0xb0] sm:$0xff]
          %v3450 = vld [vmem:[#allocation3 + $0xb8] sm:$0xff]
          %v3451 = vld [vmem:[#allocation3 + $0xc0] sm:$0xff]
          %v3452 = vld [vmem:[#allocation3 + $0xc8] sm:$0xff]
          %v3453 = vld [vmem:[#allocation3 + $0xd0] sm:$0xff]
          %v3454 = vld [vmem:[#allocation3 + $0xd8] sm:$0xff]
          %v3455 = vld [vmem:[#allocation3 + $0xe0] sm:$0xff]
          %v3456 = vld [vmem:[#allocation3 + $0xe8] sm:$0xff]
          %v3457 = vld [vmem:[#allocation3 + $0xf0] sm:$0xff]
          %v3458 = vld [vmem:[#allocation3 + $0xf8] sm:$0xff]
          %v3459 = vld [vmem:[#allocation3 + $0x100] sm:$0xff]
          %v3460 = vld [vmem:[#allocation3 + $0x108] sm:$0xff]
          %v3461 = vld [vmem:[#allocation3 + $0x110] sm:$0xff]
          %v3462 = vld [vmem:[#allocation3 + $0x118] sm:$0xff]
          %v3463 = vld [vmem:[#allocation3 + $0x120] sm:$0xff]
          %v3464 = vld [vmem:[#allocation3 + $0x128] sm:$0xff]
          %v3465 = vld [vmem:[#allocation3 + $0x130] sm:$0xff]
          %v3466 = vld [vmem:[#allocation3 + $0x138] sm:$0xff]
          %3468 = vset.pattern.permute.xlu0 0
          %3469 = vperm.xlu0 %3468, %v3387
          %v3470 = vpop.permute.xlu0 %3469
          %3473 = vset.pattern.permute.xlu0 0
          %3474 = vperm.xlu0 %3473, %v3388
          %v3475 = vpop.permute.xlu0 %3474
          %3478 = vset.pattern.permute.xlu0 0
          %3479 = vperm.xlu0 %3478, %v3389
          %v3480 = vpop.permute.xlu0 %3479
          %3483 = vset.pattern.permute.xlu0 0
          %3484 = vperm.xlu0 %3483, %v3390
          %v3485 = vpop.permute.xlu0 %3484
          %3488 = vset.pattern.permute.xlu0 0
          %3489 = vperm.xlu0 %3488, %v3391
          %v3490 = vpop.permute.xlu0 %3489
          %3493 = vset.pattern.permute.xlu0 0
          %3494 = vperm.xlu0 %3493, %v3392
          %v3495 = vpop.permute.xlu0 %3494
          %3498 = vset.pattern.permute.xlu0 0
          %3499 = vperm.xlu0 %3498, %v3393
          %v3500 = vpop.permute.xlu0 %3499
          %3503 = vset.pattern.permute.xlu0 0
          %3504 = vperm.xlu0 %3503, %v3394
          %v3505 = vpop.permute.xlu0 %3504
          %3508 = vset.pattern.permute.xlu0 0
          %3509 = vperm.xlu0 %3508, %v3395
          %v3510 = vpop.permute.xlu0 %3509
          %3513 = vset.pattern.permute.xlu0 0
          %3514 = vperm.xlu0 %3513, %v3396
          %v3515 = vpop.permute.xlu0 %3514
          %v3517 = vmul.f32 %v3427, %v3470
          %v3518 = vmul.f32 %v3428, %v3470
          %v3519 = vmul.f32 %v3429, %v3470
          %v3520 = vmul.f32 %v3430, %v3470
          %v3521 = vmul.f32 %v3431, %v3475
          %v3522 = vmul.f32 %v3432, %v3475
          %v3523 = vmul.f32 %v3433, %v3475
          %v3524 = vmul.f32 %v3434, %v3475
          %v3525 = vmul.f32 %v3435, %v3480
          %v3526 = vmul.f32 %v3436, %v3480
          %v3527 = vmul.f32 %v3437, %v3480
          %v3528 = vmul.f32 %v3438, %v3480
          %v3529 = vmul.f32 %v3439, %v3485
          %v3530 = vmul.f32 %v3440, %v3485
          %v3531 = vmul.f32 %v3441, %v3485
          %v3532 = vmul.f32 %v3442, %v3485
          %v3533 = vmul.f32 %v3443, %v3490
          %v3534 = vmul.f32 %v3444, %v3490
          %v3535 = vmul.f32 %v3445, %v3490
          %v3536 = vmul.f32 %v3446, %v3490
          %v3537 = vmul.f32 %v3447, %v3495
          %v3538 = vmul.f32 %v3448, %v3495
          %v3539 = vmul.f32 %v3449, %v3495
          %v3540 = vmul.f32 %v3450, %v3495
          %v3541 = vmul.f32 %v3451, %v3500
          %v3542 = vmul.f32 %v3452, %v3500
          %v3543 = vmul.f32 %v3453, %v3500
          %v3544 = vmul.f32 %v3454, %v3500
          %v3545 = vmul.f32 %v3455, %v3505
          %v3546 = vmul.f32 %v3456, %v3505
          %v3547 = vmul.f32 %v3457, %v3505
          %v3548 = vmul.f32 %v3458, %v3505
          %v3549 = vmul.f32 %v3459, %v3510
          %v3550 = vmul.f32 %v3460, %v3510
          %v3551 = vmul.f32 %v3461, %v3510
          %v3552 = vmul.f32 %v3462, %v3510
          %v3553 = vmul.f32 %v3463, %v3515
          %v3554 = vmul.f32 %v3464, %v3515
          %v3555 = vmul.f32 %v3465, %v3515
          %v3556 = vmul.f32 %v3466, %v3515
          %3558 = vset.pattern.permute.xlu0 0
          %3559 = vperm.xlu0 %3558, %v3417
          %v3560 = vpop.permute.xlu0 %3559
          %3563 = vset.pattern.permute.xlu0 0
          %3564 = vperm.xlu0 %3563, %v3418
          %v3565 = vpop.permute.xlu0 %3564
          %3568 = vset.pattern.permute.xlu0 0
          %3569 = vperm.xlu0 %3568, %v3419
          %v3570 = vpop.permute.xlu0 %3569
          %3573 = vset.pattern.permute.xlu0 0
          %3574 = vperm.xlu0 %3573, %v3420
          %v3575 = vpop.permute.xlu0 %3574
          %3578 = vset.pattern.permute.xlu0 0
          %3579 = vperm.xlu0 %3578, %v3421
          %v3580 = vpop.permute.xlu0 %3579
          %3583 = vset.pattern.permute.xlu0 0
          %3584 = vperm.xlu0 %3583, %v3422
          %v3585 = vpop.permute.xlu0 %3584
          %3588 = vset.pattern.permute.xlu0 0
          %3589 = vperm.xlu0 %3588, %v3423
          %v3590 = vpop.permute.xlu0 %3589
          %3593 = vset.pattern.permute.xlu0 0
          %3594 = vperm.xlu0 %3593, %v3424
          %v3595 = vpop.permute.xlu0 %3594
          %3598 = vset.pattern.permute.xlu0 0
          %3599 = vperm.xlu0 %3598, %v3425
          %v3600 = vpop.permute.xlu0 %3599
          %3603 = vset.pattern.permute.xlu0 0
          %3604 = vperm.xlu0 %3603, %v3426
          %v3605 = vpop.permute.xlu0 %3604
          %v3607 = vadd.f32 %v3517, %v3560
          %v3608 = vadd.f32 %v3518, %v3560
          %v3609 = vadd.f32 %v3519, %v3560
          %v3610 = vadd.f32 %v3520, %v3560
          %v3611 = vadd.f32 %v3521, %v3565
          %v3612 = vadd.f32 %v3522, %v3565
          %v3613 = vadd.f32 %v3523, %v3565
          %v3614 = vadd.f32 %v3524, %v3565
          %v3615 = vadd.f32 %v3525, %v3570
          %v3616 = vadd.f32 %v3526, %v3570
          %v3617 = vadd.f32 %v3527, %v3570
          %v3618 = vadd.f32 %v3528, %v3570
          %v3619 = vadd.f32 %v3529, %v3575
          %v3620 = vadd.f32 %v3530, %v3575
          %v3621 = vadd.f32 %v3531, %v3575
          %v3622 = vadd.f32 %v3532, %v3575
          %v3623 = vadd.f32 %v3533, %v3580
          %v3624 = vadd.f32 %v3534, %v3580
          %v3625 = vadd.f32 %v3535, %v3580
          %v3626 = vadd.f32 %v3536, %v3580
          %v3627 = vadd.f32 %v3537, %v3585
          %v3628 = vadd.f32 %v3538, %v3585
          %v3629 = vadd.f32 %v3539, %v3585
          %v3630 = vadd.f32 %v3540, %v3585
          %v3631 = vadd.f32 %v3541, %v3590
          %v3632 = vadd.f32 %v3542, %v3590
          %v3633 = vadd.f32 %v3543, %v3590
          %v3634 = vadd.f32 %v3544, %v3590
          %v3635 = vadd.f32 %v3545, %v3595
          %v3636 = vadd.f32 %v3546, %v3595
          %v3637 = vadd.f32 %v3547, %v3595
          %v3638 = vadd.f32 %v3548, %v3595
          %v3639 = vadd.f32 %v3549, %v3600
          %v3640 = vadd.f32 %v3550, %v3600
          %v3641 = vadd.f32 %v3551, %v3600
          %v3642 = vadd.f32 %v3552, %v3600
          %v3643 = vadd.f32 %v3553, %v3605
          %v3644 = vadd.f32 %v3554, %v3605
          %v3645 = vadd.f32 %v3555, %v3605
          %v3646 = vadd.f32 %v3556, %v3605
          %3647 = vst [vmem:[%s7] sm:$0xff] %v3607
          %3648 = vst [vmem:[%s7 + $0x8] sm:$0xff] %v3608
          %3649 = vst [vmem:[%s7 + $0x10] sm:$0xff] %v3609
          %3650 = vst [vmem:[%s7 + $0x18] sm:$0xff] %v3610
          %3651 = vst [vmem:[%s7 + $0x38] sm:$0xff] %v3611
          %3652 = vst [vmem:[%s7 + $0x40] sm:$0xff] %v3612
          %3653 = vst [vmem:[%s7 + $0x48] sm:$0xff] %v3613
          %3654 = vst [vmem:[%s7 + $0x50] sm:$0xff] %v3614
          %3655 = vst [vmem:[%s7 + $0x70] sm:$0xff] %v3615
          %3656 = vst [vmem:[%s7 + $0x78] sm:$0xff] %v3616
          %3657 = vst [vmem:[%s7 + $0x80] sm:$0xff] %v3617
          %3658 = vst [vmem:[%s7 + $0x88] sm:$0xff] %v3618
          %3659 = vst [vmem:[%s7 + $0xa8] sm:$0xff] %v3619
          %3660 = vst [vmem:[%s7 + $0xb0] sm:$0xff] %v3620
          %3661 = vst [vmem:[%s7 + $0xb8] sm:$0xff] %v3621
          %3662 = vst [vmem:[%s7 + $0xc0] sm:$0xff] %v3622
          %3663 = vst [vmem:[%s7 + $0xe0] sm:$0xff] %v3623
          %3664 = vst [vmem:[%s7 + $0xe8] sm:$0xff] %v3624
          %3665 = vst [vmem:[%s7 + $0xf0] sm:$0xff] %v3625
          %3666 = vst [vmem:[%s7 + $0xf8] sm:$0xff] %v3626
          %3667 = vst [vmem:[%s7 + $0x118] sm:$0xff] %v3627
          %3668 = vst [vmem:[%s7 + $0x120] sm:$0xff] %v3628
          %3669 = vst [vmem:[%s7 + $0x128] sm:$0xff] %v3629
          %3670 = vst [vmem:[%s7 + $0x130] sm:$0xff] %v3630
          %3671 = vst [vmem:[%s7 + $0x150] sm:$0xff] %v3631
          %3672 = vst [vmem:[%s7 + $0x158] sm:$0xff] %v3632
          %3673 = vst [vmem:[%s7 + $0x160] sm:$0xff] %v3633
          %3674 = vst [vmem:[%s7 + $0x168] sm:$0xff] %v3634
          %3675 = vst [vmem:[%s7 + $0x188] sm:$0xff] %v3635
          %3676 = vst [vmem:[%s7 + $0x190] sm:$0xff] %v3636
          %3677 = vst [vmem:[%s7 + $0x198] sm:$0xff] %v3637
          %3678 = vst [vmem:[%s7 + $0x1a0] sm:$0xff] %v3638
          %3679 = vst [vmem:[%s7 + $0x1c0] sm:$0xff] %v3639
          %3680 = vst [vmem:[%s7 + $0x1c8] sm:$0xff] %v3640
          %3681 = vst [vmem:[%s7 + $0x1d0] sm:$0xff] %v3641
          %3682 = vst [vmem:[%s7 + $0x1d8] sm:$0xff] %v3642
          %3683 = vst [vmem:[%s7 + $0x1f8] sm:$0xff] %v3643
          %3684 = vst [vmem:[%s7 + $0x200] sm:$0xff] %v3644
          %3685 = vst [vmem:[%s7 + $0x208] sm:$0xff] %v3645
          %3686 = vst [vmem:[%s7 + $0x210] sm:$0xff] %v3646
          %s3687 = scalar_lea.vmem [#allocation3], 320
          %v3688 = vld [vmem:[%s3687] sm:$0xff]
          %v3689 = vld [vmem:[%s3687 + $0x8] sm:$0xff]
          %v3690 = vld [vmem:[%s3687 + $0x10] sm:$0xff]
          %v3691 = vld [vmem:[%s3687 + $0x20] sm:$0xff]
          %v3692 = vld [vmem:[%s3687 + $0x28] sm:$0xff]
          %v3693 = vld [vmem:[%s3687 + $0x30] sm:$0xff]
          %v3694 = vld [vmem:[%s3687 + $0x40] sm:$0xff]
          %v3695 = vld [vmem:[%s3687 + $0x48] sm:$0xff]
          %v3696 = vld [vmem:[%s3687 + $0x50] sm:$0xff]
          %v3697 = vld [vmem:[%s3687 + $0x60] sm:$0xff]
          %v3698 = vld [vmem:[%s3687 + $0x68] sm:$0xff]
          %v3699 = vld [vmem:[%s3687 + $0x70] sm:$0xff]
          %v3700 = vld [vmem:[%s3687 + $0x80] sm:$0xff]
          %v3701 = vld [vmem:[%s3687 + $0x88] sm:$0xff]
          %v3702 = vld [vmem:[%s3687 + $0x90] sm:$0xff]
          %v3703 = vld [vmem:[%s3687 + $0xa0] sm:$0xff]
          %v3704 = vld [vmem:[%s3687 + $0xa8] sm:$0xff]
          %v3705 = vld [vmem:[%s3687 + $0xb0] sm:$0xff]
          %v3706 = vld [vmem:[%s3687 + $0xc0] sm:$0xff]
          %v3707 = vld [vmem:[%s3687 + $0xc8] sm:$0xff]
          %v3708 = vld [vmem:[%s3687 + $0xd0] sm:$0xff]
          %v3709 = vld [vmem:[%s3687 + $0xe0] sm:$0xff]
          %v3710 = vld [vmem:[%s3687 + $0xe8] sm:$0xff]
          %v3711 = vld [vmem:[%s3687 + $0xf0] sm:$0xff]
          %v3712 = vld [vmem:[%s3687 + $0x100] sm:$0xff]
          %v3713 = vld [vmem:[%s3687 + $0x108] sm:$0xff]
          %v3714 = vld [vmem:[%s3687 + $0x110] sm:$0xff]
          %v3715 = vld [vmem:[%s3687 + $0x120] sm:$0xff]
          %v3716 = vld [vmem:[%s3687 + $0x128] sm:$0xff]
          %v3717 = vld [vmem:[%s3687 + $0x130] sm:$0xff]
          %v3718 = vmul.f32 %v3688, %v3470
          %v3719 = vmul.f32 %v3689, %v3470
          %v3720 = vmul.f32 %v3690, %v3470
          %v3721 = vmul.f32 %v3691, %v3475
          %v3722 = vmul.f32 %v3692, %v3475
          %v3723 = vmul.f32 %v3693, %v3475
          %v3724 = vmul.f32 %v3694, %v3480
          %v3725 = vmul.f32 %v3695, %v3480
          %v3726 = vmul.f32 %v3696, %v3480
          %v3727 = vmul.f32 %v3697, %v3485
          %v3728 = vmul.f32 %v3698, %v3485
          %v3729 = vmul.f32 %v3699, %v3485
          %v3730 = vmul.f32 %v3700, %v3490
          %v3731 = vmul.f32 %v3701, %v3490
          %v3732 = vmul.f32 %v3702, %v3490
          %v3733 = vmul.f32 %v3703, %v3495
          %v3734 = vmul.f32 %v3704, %v3495
          %v3735 = vmul.f32 %v3705, %v3495
          %v3736 = vmul.f32 %v3706, %v3500
          %v3737 = vmul.f32 %v3707, %v3500
          %v3738 = vmul.f32 %v3708, %v3500
          %v3739 = vmul.f32 %v3709, %v3505
          %v3740 = vmul.f32 %v3710, %v3505
          %v3741 = vmul.f32 %v3711, %v3505
          %v3742 = vmul.f32 %v3712, %v3510
          %v3743 = vmul.f32 %v3713, %v3510
          %v3744 = vmul.f32 %v3714, %v3510
          %v3745 = vmul.f32 %v3715, %v3515
          %v3746 = vmul.f32 %v3716, %v3515
          %v3747 = vmul.f32 %v3717, %v3515
          %v3748 = vadd.f32 %v3718, %v3560
          %v3749 = vadd.f32 %v3719, %v3560
          %v3750 = vadd.f32 %v3720, %v3560
          %v3751 = vadd.f32 %v3721, %v3565
          %v3752 = vadd.f32 %v3722, %v3565
          %v3753 = vadd.f32 %v3723, %v3565
          %v3754 = vadd.f32 %v3724, %v3570
          %v3755 = vadd.f32 %v3725, %v3570
          %v3756 = vadd.f32 %v3726, %v3570
          %v3757 = vadd.f32 %v3727, %v3575
          %v3758 = vadd.f32 %v3728, %v3575
          %v3759 = vadd.f32 %v3729, %v3575
          %v3760 = vadd.f32 %v3730, %v3580
          %v3761 = vadd.f32 %v3731, %v3580
          %v3762 = vadd.f32 %v3732, %v3580
          %v3763 = vadd.f32 %v3733, %v3585
          %v3764 = vadd.f32 %v3734, %v3585
          %v3765 = vadd.f32 %v3735, %v3585
          %v3766 = vadd.f32 %v3736, %v3590
          %v3767 = vadd.f32 %v3737, %v3590
          %v3768 = vadd.f32 %v3738, %v3590
          %v3769 = vadd.f32 %v3739, %v3595
          %v3770 = vadd.f32 %v3740, %v3595
          %v3771 = vadd.f32 %v3741, %v3595
          %v3772 = vadd.f32 %v3742, %v3600
          %v3773 = vadd.f32 %v3743, %v3600
          %v3774 = vadd.f32 %v3744, %v3600
          %v3775 = vadd.f32 %v3745, %v3605
          %v3776 = vadd.f32 %v3746, %v3605
          %v3777 = vadd.f32 %v3747, %v3605
          %3778 = vst [vmem:[%s7 + $0x20] sm:$0xff] %v3748
          %3779 = vst [vmem:[%s7 + $0x28] sm:$0xff] %v3749
          %vm3780 = vcmask 130048
          %3781 = vst.msk [vmem:[%s7 + $0x30] sm:$0xff] %vm3780, %v3750
          %3782 = vst [vmem:[%s7 + $0x58] sm:$0xff] %v3751
          %3783 = vst [vmem:[%s7 + $0x60] sm:$0xff] %v3752
          %3784 = vst.msk [vmem:[%s7 + $0x68] sm:$0xff] %vm3780, %v3753
          %3785 = vst [vmem:[%s7 + $0x90] sm:$0xff] %v3754
          %3786 = vst [vmem:[%s7 + $0x98] sm:$0xff] %v3755
          %3787 = vst.msk [vmem:[%s7 + $0xa0] sm:$0xff] %vm3780, %v3756
          %3788 = vst [vmem:[%s7 + $0xc8] sm:$0xff] %v3757
          %3789 = vst [vmem:[%s7 + $0xd0] sm:$0xff] %v3758
          %3790 = vst.msk [vmem:[%s7 + $0xd8] sm:$0xff] %vm3780, %v3759
          %3791 = vst [vmem:[%s7 + $0x100] sm:$0xff] %v3760
          %3792 = vst [vmem:[%s7 + $0x108] sm:$0xff] %v3761
          %3793 = vst.msk [vmem:[%s7 + $0x110] sm:$0xff] %vm3780, %v3762
          %3794 = vst [vmem:[%s7 + $0x138] sm:$0xff] %v3763
          %3795 = vst [vmem:[%s7 + $0x140] sm:$0xff] %v3764
          %3796 = vst.msk [vmem:[%s7 + $0x148] sm:$0xff] %vm3780, %v3765
          %3797 = vst [vmem:[%s7 + $0x170] sm:$0xff] %v3766
          %3798 = vst [vmem:[%s7 + $0x178] sm:$0xff] %v3767
          %3799 = vst.msk [vmem:[%s7 + $0x180] sm:$0xff] %vm3780, %v3768
          %3800 = vst [vmem:[%s7 + $0x1a8] sm:$0xff] %v3769
          %3801 = vst [vmem:[%s7 + $0x1b0] sm:$0xff] %v3770
          %3802 = vst.msk [vmem:[%s7 + $0x1b8] sm:$0xff] %vm3780, %v3771
          %3803 = vst [vmem:[%s7 + $0x1e0] sm:$0xff] %v3772
          %3804 = vst [vmem:[%s7 + $0x1e8] sm:$0xff] %v3773
          %3805 = vst.msk [vmem:[%s7 + $0x1f0] sm:$0xff] %vm3780, %v3774
          %3806 = vst [vmem:[%s7 + $0x218] sm:$0xff] %v3775
          %3807 = vst [vmem:[%s7 + $0x220] sm:$0xff] %v3776
          %3808 = vst.msk [vmem:[%s7 + $0x228] sm:$0xff] %vm3780, %v3777
        $region122: #{fused_se_conv_bn.1} parent=109 // pred_fallthru
          _
        // Predicated region
        $region123: #{fused_se_conv_bn.1} parent=109 // pred_check
          %p3809 = pneg %p183
        $region124: #{fused_se_conv_bn.1} parent=109 // pred_check_branch
          %3811 = sbr.rel (%p3809) target = $region126
        $region125: #{fused_se_conv_bn.1} parent=109 // pred_region
          _
        $region126: #{fused_se_conv_bn.1} parent=109 // pred_fallthru
          _
        // Predicated region
        $region127: #{fused_se_conv_bn.1} parent=109 // pred_check
          %p3812 = pneg %p183
        $region128: #{fused_se_conv_bn.1} parent=109 // pred_check_branch
          %3814 = sbr.rel (%p3812) target = $region130
        $region129: #{fused_se_conv_bn.1} parent=109 // pred_region
          _
        $region130: #{fused_se_conv_bn.1} parent=109 // pred_fallthru
          _
      $region110: #{fused_se_conv_bn.1} parent=5 // pred_fallthru
        _
      %p3815 = scmp.le.s32.totalorder 2, %s13
      // Predicated region
      $region131: #{fused_se_conv_bn.1} parent=5 // pred_check
        %p3816 = pneg %p3815
      $region132: #{fused_se_conv_bn.1} parent=5 // pred_check_branch
        %3818 = sbr.rel (%p3816) target = $region134
      $region133: #{fused_se_conv_bn.1} parent=5 // pred_region
        %s3819 = ssub.s32 %s13, 2
      $region134: #{fused_se_conv_bn.1} parent=5 // pred_fallthru
        _
    $region6: #{fused_se_conv_bn.1} parent=1 // loop_footer
      %s17 = sadd.s32 1, %s13
    $region7: #{fused_se_conv_bn.1} parent=1 // loop_footer_branch
      %12 = sbr.rel target = $region3
    $region8: #{fused_se_conv_bn.1} parent=1 // loop_exit
      _

</llo_original>
